<compile_context>
chip_gen: v7x
topology: tpu7x:2x2x1
jax: 0.10.0
libtpu: 0.0.40
codegen_flags: <defaults>
</compile_context>

<pallas_src>
import functools

import jax
import jax.numpy as jnp
from jax.experimental import pallas as pl
from jax.experimental.pallas import tpu as pltpu


# ----------------------------------------------------------------------------
# Glue: constant 0/1 / block-diagonal matrices turning conv, pad, pool and the
# per-image flatten into plain 2-D matmuls (tiny; built once per call by XLA).
# ----------------------------------------------------------------------------
def _one_hot(idx, depth):
    # rows with out-of-range idx (e.g. -1) are all-zero -> implements zero padding
    return (idx[:, None] == jnp.arange(depth)[None, :]).astype(jnp.float32)


def _conv_as_matmuls(w, h, wpix):
    """conv3x3-'same'(x) == sum_dy R[dy] @ (x @ M[dy]) for x in (h, wpix*Cin) layout."""
    cin, cout = w.shape[2], w.shape[3]
    eye = jnp.eye(wpix, dtype=jnp.float32)
    # per-tap block-diagonal channel weights: BD[dy,dx][j*cin+c, j*cout+d] = w[dy,dx,c,d]
    bd = jnp.einsum("jk,yxcd->yxjckd", eye, w.astype(jnp.float32))
    bd = bd.reshape(3, 3, wpix * cin, wpix * cout)
    m_rows = []
    for dy in range(3):
        acc = jnp.zeros((wpix * cin, wpix * cout), jnp.float32)
        for dx in range(3):
            # (x @ cshift)[i, l] = x[i, l + (dx-1)*cin]  (zero outside the image)
            cshift = _one_hot(jnp.arange(wpix * cin) + (dx - 1) * cin, wpix * cin).T
            acc = acc + cshift @ bd[dy, dx]
        m_rows.append(acc)
    M = jnp.stack(m_rows)                                            # (3, wpix*cin, wpix*cout)
    R = jnp.stack([_one_hot(jnp.arange(h) + dy - 1, h) for dy in range(3)])  # (3, h, h)
    return R, M


def _pool_mats(h, wpix, c):
    """2x2/stride-2 maxpool on (h, wpix*c): max(P[0]@x, P[1]@x) then max(.@S[0], .@S[1])."""
    pe = _one_hot(2 * jnp.arange(h // 2), h)
    po = _one_hot(2 * jnp.arange(h // 2) + 1, h)
    lout = jnp.arange((wpix // 2) * c)
    se = _one_hot(2 * (lout // c) * c + (lout % c), wpix * c).T
    so = _one_hot((2 * (lout // c) + 1) * c + (lout % c), wpix * c).T
    return jnp.stack([pe, po]), jnp.stack([se, so])


def _block_diag(mats, b):
    """(..., r, c) -> (..., b*r, b*c): b copies of each trailing matrix on the diagonal."""
    eye = jnp.eye(b, dtype=mats.dtype)
    out = jnp.einsum("ij,...rc->...irjc", eye, mats)
    shp = mats.shape
    return out.reshape(*shp[:-2], b * shp[-2], b * shp[-1])


# ----------------------------------------------------------------------------
# The fused backbone kernel: one grid step == B images, everything in VMEM.
# ----------------------------------------------------------------------------
def _siamese_backbone_kernel(x_ref, r1_ref, m1_ref, b1_ref, p1_ref, s1_ref,
                             r2_ref, m2_ref, b2_ref, p2_ref, s2_ref,
                             q_ref, wd_ref, bd_ref, o_ref, *, n_rows):
    def dot(a, b):
        return jnp.dot(a, b, preferred_element_type=jnp.float32)

    x = x_ref[0]                                                 # (B*H, W*Cin)

    # conv1 (3x3 "same") + bias + relu : 6 block-wide matmuls
    acc = dot(r1_ref[0], dot(x, m1_ref[0]))
    acc = acc + dot(r1_ref[1], dot(x, m1_ref[1]))
    acc = acc + dot(r1_ref[2], dot(x, m1_ref[2]))
    h1 = jnp.maximum(acc + b1_ref[...], 0.0)                     # (B*H, W*C1)

    # maxpool 2x2 (even/odd row + lane-block selection matmuls)
    rm = jnp.maximum(dot(p1_ref[0], h1), dot(p1_ref[1], h1))
    h1p = jnp.maximum(dot(rm, s1_ref[0]), dot(rm, s1_ref[1]))    # (B*H/2, (W/2)*C1)

    # conv2 + bias + relu
    acc2 = dot(r2_ref[0], dot(h1p, m2_ref[0]))
    acc2 = acc2 + dot(r2_ref[1], dot(h1p, m2_ref[1]))
    acc2 = acc2 + dot(r2_ref[2], dot(h1p, m2_ref[2]))
    h2 = jnp.maximum(acc2 + b2_ref[...], 0.0)                    # (B*H/2, (W/2)*C2)

    # maxpool 2x2
    rm2 = jnp.maximum(dot(p2_ref[0], h2), dot(p2_ref[1], h2))
    h2p = jnp.maximum(dot(rm2, s2_ref[0]), dot(rm2, s2_ref[1]))  # (B*H/4, (W/4)*C2)

    # dense + relu: per-image flatten via row-selection matmuls (lane-dense output)
    y = bd_ref[...]                                              # (1, EPAD) -> broadcasts
    for r in range(n_rows):
        y = y + dot(dot(q_ref[r], h2p), wd_ref[r])               # (B, EPAD)
    o_ref[...] = jnp.maximum(y, 0.0)


# ----------------------------------------------------------------------------
# Siamese forward: both branches fused into one batched pallas_call.
# ----------------------------------------------------------------------------
def siamese_forward(params, input1_nchw, input2_nchw):
    n = input1_nchw.shape[0]
    x = jnp.concatenate([input1_nchw, input2_nchw], axis=0)      # (2N, C, H, W)
    n2, c, h, w = x.shape
    assert h % 4 == 0 and w % 4 == 0, "backbone assumes H, W divisible by 4"

    c1 = params["w1"].shape[-1]
    c2 = params["w2"].shape[-1]
    e = params["wd"].shape[-1]
    epad = ((e + 127) // 128) * 128
    hq = h // 4

    # images per grid step (stacked along sublanes); pad batch to a multiple
    bimg = n2 if n2 < 8 else 8
    n2_pad = ((n2 + bimg - 1) // bimg) * bimg
    nblk = n2_pad // bimg

    # NCHW -> NHWC -> (2N, H, W*C): channels innermost along lanes (glue layout plumbing)
    x2d = jnp.transpose(x, (0, 2, 3, 1)).reshape(n2, h, w * c)
    if n2_pad != n2:
        x2d = jnp.pad(x2d, ((0, n2_pad - n2), (0, 0), (0, 0)))
    xblk = x2d.reshape(nblk, bimg * h, w * c)

    r1, m1 = _conv_as_matmuls(params["w1"], h, w)
    r2, m2 = _conv_as_matmuls(params["w2"], h // 2, w // 2)
    p1, s1 = _pool_mats(h, w, c1)
    p2, s2 = _pool_mats(h // 2, w // 2, c2)

    # block-diagonalise the row-side matrices over the B images in a block
    r1b = _block_diag(r1, bimg)                                  # (3, B*H,   B*H)
    r2b = _block_diag(r2, bimg)                                  # (3, B*H/2, B*H/2)
    p1b = _block_diag(p1, bimg)                                  # (2, B*H/2, B*H)
    p2b = _block_diag(p2, bimg)                                  # (2, B*H/4, B*H/2)

    # Q[r][b, b*hq + r] = 1 : selects pooled-row r of each image for the dense layer
    q = jnp.stack([_one_hot(jnp.arange(bimg) * hq + r, bimg * hq) for r in range(hq)])

    b1row = jnp.tile(params["b1"], w).reshape(1, w * c1)
    b2row = jnp.tile(params["b2"], w // 2).reshape(1, (w // 2) * c2)
    wd3 = jnp.pad(params["wd"], ((0, 0), (0, epad - e))).reshape(hq, (w // 4) * c2, epad)
    bdrow = jnp.pad(params["bd"], (0, epad - e)).reshape(1, epad)

    const3 = lambda a: pl.BlockSpec(a.shape, lambda i: (0, 0, 0))
    const2 = lambda a: pl.BlockSpec(a.shape, lambda i: (0, 0))

    out = pl.pallas_call(
        functools.partial(_siamese_backbone_kernel, n_rows=hq),
        out_shape=jax.ShapeDtypeStruct((n2_pad, epad), jnp.float32),
        grid=(nblk,),
        in_specs=[
            pl.BlockSpec((1, bimg * h, w * c), lambda i: (i, 0, 0)),  # B images per step
            const3(r1b), const3(m1), const2(b1row), const3(p1b), const3(s1),
            const3(r2b), const3(m2), const2(b2row), const3(p2b), const3(s2),
            const3(q), const3(wd3), const2(bdrow),
        ],
        out_specs=pl.BlockSpec((bimg, epad), lambda i: (i, 0)),
        compiler_params=pltpu.CompilerParams(dimension_semantics=("parallel",)),
    )(xblk, r1b, m1, b1row, p1b, s1, r2b, m2, b2row, p2b, s2, q, wd3, bdrow)

    emb = out[:n2, :e]
    return emb[:n], emb[n:]


def init_params(key, c_in, h, w, c1=16, c2=32, emb=32):
    k1, k2, k3 = jax.random.split(key, 3)
    feat = (h // 4) * (w // 4) * c2
    return {
        "w1": jax.random.normal(k1, (3, 3, c_in, c1), jnp.float32) * 0.1,
        "b1": jnp.zeros((c1,), jnp.float32),
        "w2": jax.random.normal(k2, (3, 3, c1, c2), jnp.float32) * 0.05,
        "b2": jnp.zeros((c2,), jnp.float32),
        "wd": jax.random.normal(k3, (feat, emb), jnp.float32) * 0.05,
        "bd": jnp.zeros((emb,), jnp.float32),
    }


if __name__ == "__main__":
    N, C, H, W = 2, 4, 16, 16
    key = jax.random.PRNGKey(0)
    kp, kx1, kx2 = jax.random.split(key, 3)

    params = init_params(kp, c_in=C, h=H, w=W)
    input1 = jax.random.normal(kx1, (N, C, H, W), jnp.float32)
    input2 = jax.random.normal(kx2, (N, C, H, W), jnp.float32)

    fwd = jax.jit(siamese_forward)
    out1, out2 = fwd(params, input1, input2)
    out1 = jax.block_until_ready(out1)
    out2 = jax.block_until_ready(out2)

    assert out1.shape == (N, 32) and out2.shape == (N, 32)
    assert bool(jnp.all(jnp.isfinite(out1))) and bool(jnp.all(jnp.isfinite(out2)))

    # Pure-JAX (XLA) reference of the same synthetic backbone to sanity-check the
    # matmul reformulation of conv / pad / pool / dense and the batch blocking.
    def reference_backbone(p, x_nchw):
        xh = jnp.transpose(x_nchw, (0, 2, 3, 1))

        def conv(hmap, wgt, bias):
            hp = jnp.pad(hmap, ((0, 0), (1, 1), (1, 1), (0, 0)))
            hh, ww = hmap.shape[1], hmap.shape[2]
            out = sum(jnp.einsum("nhwc,cd->nhwd",
                                 hp[:, dy:dy + hh, dx:dx + ww, :], wgt[dy, dx])
                      for dy in range(3) for dx in range(3))
            return jnp.maximum(out + bias, 0.0)

        def pool(hmap):
            return jnp.maximum(
                jnp.maximum(hmap[:, 0::2, 0::2, :], hmap[:, 0::2, 1::2, :]),
                jnp.maximum(hmap[:, 1::2, 0::2, :], hmap[:, 1::2, 1::2, :]))

        hmap = pool(conv(xh, p["w1"], p["b1"]))
        hmap = pool(conv(hmap, p["w2"], p["b2"]))
        hmap = hmap.reshape(hmap.shape[0], -1)
        return jnp.maximum(hmap @ p["wd"] + p["bd"], 0.0)

    with jax.default_matmul_precision("float32"):
        ref1 = reference_backbone(params, input1)
        ref2 = reference_backbone(params, input2)
    assert bool(jnp.allclose(out1, ref1, atol=3e-2, rtol=3e-2))
    assert bool(jnp.allclose(out2, ref2, atol=3e-2, rtol=3e-2))

    print("KERNEL_OK")
</pallas_src>

<mosaic_0001>
module attributes {stable_mosaic.version = 11 : i64} {
  func.func @_siamese_backbone_kernel(%arg0: i32, %arg1: memref<1x64x64xf32, #tpu.memory_space<vmem>>, %arg2: memref<3x64x64xf32, #tpu.memory_space<vmem>>, %arg3: memref<3x64x256xf32, #tpu.memory_space<vmem>>, %arg4: memref<1x256xf32, #tpu.memory_space<vmem>>, %arg5: memref<2x32x64xf32, #tpu.memory_space<vmem>>, %arg6: memref<2x256x128xf32, #tpu.memory_space<vmem>>, %arg7: memref<3x32x32xf32, #tpu.memory_space<vmem>>, %arg8: memref<3x128x256xf32, #tpu.memory_space<vmem>>, %arg9: memref<1x256xf32, #tpu.memory_space<vmem>>, %arg10: memref<2x16x32xf32, #tpu.memory_space<vmem>>, %arg11: memref<2x256x128xf32, #tpu.memory_space<vmem>>, %arg12: memref<4x4x16xf32, #tpu.memory_space<vmem>>, %arg13: memref<4x128x128xf32, #tpu.memory_space<vmem>>, %arg14: memref<1x128xf32, #tpu.memory_space<vmem>>, %arg15: memref<4x128xf32, #tpu.memory_space<vmem>>) attributes {dimension_semantics = [#tpu.dimension_semantics<parallel>], iteration_bounds = array<i64: 1>, scalar_prefetch = 0 : i64, scratch_operands = 0 : i64, tpu.core_type = #tpu.core_type<tc>, window_params = [{transform_indices = @transform_0, window_bounds = array<i64: 1, 64, 64>}, {pipeline_mode = #tpu.pipeline_mode<synchronous>, transform_indices = @transform_1, window_bounds = array<i64: 3, 64, 64>}, {pipeline_mode = #tpu.pipeline_mode<synchronous>, transform_indices = @transform_2, window_bounds = array<i64: 3, 64, 256>}, {pipeline_mode = #tpu.pipeline_mode<synchronous>, transform_indices = @transform_3, window_bounds = array<i64: 1, 256>}, {pipeline_mode = #tpu.pipeline_mode<synchronous>, transform_indices = @transform_4, window_bounds = array<i64: 2, 32, 64>}, {pipeline_mode = #tpu.pipeline_mode<synchronous>, transform_indices = @transform_5, window_bounds = array<i64: 2, 256, 128>}, {pipeline_mode = #tpu.pipeline_mode<synchronous>, transform_indices = @transform_6, window_bounds = array<i64: 3, 32, 32>}, {pipeline_mode = #tpu.pipeline_mode<synchronous>, transform_indices = @transform_7, window_bounds = array<i64: 3, 128, 256>}, {pipeline_mode = #tpu.pipeline_mode<synchronous>, transform_indices = @transform_8, window_bounds = array<i64: 1, 256>}, {pipeline_mode = #tpu.pipeline_mode<synchronous>, transform_indices = @transform_9, window_bounds = array<i64: 2, 16, 32>}, {pipeline_mode = #tpu.pipeline_mode<synchronous>, transform_indices = @transform_10, window_bounds = array<i64: 2, 256, 128>}, {pipeline_mode = #tpu.pipeline_mode<synchronous>, transform_indices = @transform_11, window_bounds = array<i64: 4, 4, 16>}, {pipeline_mode = #tpu.pipeline_mode<synchronous>, transform_indices = @transform_12, window_bounds = array<i64: 4, 128, 128>}, {pipeline_mode = #tpu.pipeline_mode<synchronous>, transform_indices = @transform_13, window_bounds = array<i64: 1, 128>}, {transform_indices = @transform_14, window_bounds = array<i64: 4, 128>}]} {
    %c0 = arith.constant 0 : index
    %c0_0 = arith.constant 0 : index
    %c0_1 = arith.constant 0 : index
    %0 = vector.load %arg1[%c0, %c0_0, %c0_1] : memref<1x64x64xf32, #tpu.memory_space<vmem>>, vector<1x64x64xf32>
    %1 = vector.shape_cast %0 : vector<1x64x64xf32> to vector<64x64xf32>
    %c0_2 = arith.constant 0 : index
    %c0_3 = arith.constant 0 : index
    %c0_4 = arith.constant 0 : index
    %2 = vector.load %arg2[%c0_2, %c0_3, %c0_4] : memref<3x64x64xf32, #tpu.memory_space<vmem>>, vector<1x64x64xf32>
    %3 = vector.shape_cast %2 : vector<1x64x64xf32> to vector<64x64xf32>
    %c0_5 = arith.constant 0 : index
    %c0_6 = arith.constant 0 : index
    %c0_7 = arith.constant 0 : index
    %4 = vector.load %arg3[%c0_5, %c0_6, %c0_7] : memref<3x64x256xf32, #tpu.memory_space<vmem>>, vector<1x64x256xf32>
    %5 = vector.shape_cast %4 : vector<1x64x256xf32> to vector<64x256xf32>
    %cst = arith.constant dense<0.000000e+00> : vector<64x256xf32>
    %6 = tpu.matmul %1, %5, %cst {dimension_numbers = #tpu.dot_dimension_numbers<[1], [0], [0], [1], [0, 0, 1, 1], [], []>} : vector<64x64xf32>, vector<64x256xf32>, vector<64x256xf32> -> vector<64x256xf32>
    %cst_8 = arith.constant dense<0.000000e+00> : vector<64x256xf32>
    %7 = tpu.matmul %3, %6, %cst_8 {dimension_numbers = #tpu.dot_dimension_numbers<[1], [0], [0], [1], [0, 0, 1, 1], [], []>} : vector<64x64xf32>, vector<64x256xf32>, vector<64x256xf32> -> vector<64x256xf32>
    %c1 = arith.constant 1 : index
    %c0_9 = arith.constant 0 : index
    %c0_10 = arith.constant 0 : index
    %8 = vector.load %arg2[%c1, %c0_9, %c0_10] : memref<3x64x64xf32, #tpu.memory_space<vmem>>, vector<1x64x64xf32>
    %9 = vector.shape_cast %8 : vector<1x64x64xf32> to vector<64x64xf32>
    %c1_11 = arith.constant 1 : index
    %c0_12 = arith.constant 0 : index
    %c0_13 = arith.constant 0 : index
    %10 = vector.load %arg3[%c1_11, %c0_12, %c0_13] : memref<3x64x256xf32, #tpu.memory_space<vmem>>, vector<1x64x256xf32>
    %11 = vector.shape_cast %10 : vector<1x64x256xf32> to vector<64x256xf32>
    %cst_14 = arith.constant dense<0.000000e+00> : vector<64x256xf32>
    %12 = tpu.matmul %1, %11, %cst_14 {dimension_numbers = #tpu.dot_dimension_numbers<[1], [0], [0], [1], [0, 0, 1, 1], [], []>} : vector<64x64xf32>, vector<64x256xf32>, vector<64x256xf32> -> vector<64x256xf32>
    %cst_15 = arith.constant dense<0.000000e+00> : vector<64x256xf32>
    %13 = tpu.matmul %9, %12, %cst_15 {dimension_numbers = #tpu.dot_dimension_numbers<[1], [0], [0], [1], [0, 0, 1, 1], [], []>} : vector<64x64xf32>, vector<64x256xf32>, vector<64x256xf32> -> vector<64x256xf32>
    %14 = arith.addf %7, %13 : vector<64x256xf32>
    %c2 = arith.constant 2 : index
    %c0_16 = arith.constant 0 : index
    %c0_17 = arith.constant 0 : index
    %15 = vector.load %arg2[%c2, %c0_16, %c0_17] : memref<3x64x64xf32, #tpu.memory_space<vmem>>, vector<1x64x64xf32>
    %16 = vector.shape_cast %15 : vector<1x64x64xf32> to vector<64x64xf32>
    %c2_18 = arith.constant 2 : index
    %c0_19 = arith.constant 0 : index
    %c0_20 = arith.constant 0 : index
    %17 = vector.load %arg3[%c2_18, %c0_19, %c0_20] : memref<3x64x256xf32, #tpu.memory_space<vmem>>, vector<1x64x256xf32>
    %18 = vector.shape_cast %17 : vector<1x64x256xf32> to vector<64x256xf32>
    %cst_21 = arith.constant dense<0.000000e+00> : vector<64x256xf32>
    %19 = tpu.matmul %1, %18, %cst_21 {dimension_numbers = #tpu.dot_dimension_numbers<[1], [0], [0], [1], [0, 0, 1, 1], [], []>} : vector<64x64xf32>, vector<64x256xf32>, vector<64x256xf32> -> vector<64x256xf32>
    %cst_22 = arith.constant dense<0.000000e+00> : vector<64x256xf32>
    %20 = tpu.matmul %16, %19, %cst_22 {dimension_numbers = #tpu.dot_dimension_numbers<[1], [0], [0], [1], [0, 0, 1, 1], [], []>} : vector<64x64xf32>, vector<64x256xf32>, vector<64x256xf32> -> vector<64x256xf32>
    %21 = arith.addf %14, %20 : vector<64x256xf32>
    %c0_23 = arith.constant 0 : index
    %c0_24 = arith.constant 0 : index
    %22 = vector.load %arg4[%c0_23, %c0_24] : memref<1x256xf32, #tpu.memory_space<vmem>>, vector<1x256xf32>
    %23 = vector.broadcast %22 : vector<1x256xf32> to vector<64x256xf32>
    %24 = arith.addf %21, %23 : vector<64x256xf32>
    %cst_25 = arith.constant 0.000000e+00 : f32
    %25 = vector.broadcast %cst_25 : f32 to vector<64x256xf32>
    %26 = arith.maximumf %24, %25 : vector<64x256xf32>
    %c0_26 = arith.constant 0 : index
    %c0_27 = arith.constant 0 : index
    %c0_28 = arith.constant 0 : index
    %27 = vector.load %arg5[%c0_26, %c0_27, %c0_28] : memref<2x32x64xf32, #tpu.memory_space<vmem>>, vector<1x32x64xf32>
    %28 = vector.shape_cast %27 : vector<1x32x64xf32> to vector<32x64xf32>
    %cst_29 = arith.constant dense<0.000000e+00> : vector<32x256xf32>
    %29 = tpu.matmul %28, %26, %cst_29 {dimension_numbers = #tpu.dot_dimension_numbers<[1], [0], [0], [1], [0, 0, 1, 1], [], []>} : vector<32x64xf32>, vector<64x256xf32>, vector<32x256xf32> -> vector<32x256xf32>
    %c1_30 = arith.constant 1 : index
    %c0_31 = arith.constant 0 : index
    %c0_32 = arith.constant 0 : index
    %30 = vector.load %arg5[%c1_30, %c0_31, %c0_32] : memref<2x32x64xf32, #tpu.memory_space<vmem>>, vector<1x32x64xf32>
    %31 = vector.shape_cast %30 : vector<1x32x64xf32> to vector<32x64xf32>
    %cst_33 = arith.constant dense<0.000000e+00> : vector<32x256xf32>
    %32 = tpu.matmul %31, %26, %cst_33 {dimension_numbers = #tpu.dot_dimension_numbers<[1], [0], [0], [1], [0, 0, 1, 1], [], []>} : vector<32x64xf32>, vector<64x256xf32>, vector<32x256xf32> -> vector<32x256xf32>
    %33 = arith.maximumf %29, %32 : vector<32x256xf32>
    %c0_34 = arith.constant 0 : index
    %c0_35 = arith.constant 0 : index
    %c0_36 = arith.constant 0 : index
    %34 = vector.load %arg6[%c0_34, %c0_35, %c0_36] : memref<2x256x128xf32, #tpu.memory_space<vmem>>, vector<1x256x128xf32>
    %35 = vector.shape_cast %34 : vector<1x256x128xf32> to vector<256x128xf32>
    %cst_37 = arith.constant dense<0.000000e+00> : vector<32x128xf32>
    %36 = tpu.matmul %33, %35, %cst_37 {dimension_numbers = #tpu.dot_dimension_numbers<[1], [0], [0], [1], [0, 0, 1, 1], [], []>} : vector<32x256xf32>, vector<256x128xf32>, vector<32x128xf32> -> vector<32x128xf32>
    %c1_38 = arith.constant 1 : index
    %c0_39 = arith.constant 0 : index
    %c0_40 = arith.constant 0 : index
    %37 = vector.load %arg6[%c1_38, %c0_39, %c0_40] : memref<2x256x128xf32, #tpu.memory_space<vmem>>, vector<1x256x128xf32>
    %38 = vector.shape_cast %37 : vector<1x256x128xf32> to vector<256x128xf32>
    %cst_41 = arith.constant dense<0.000000e+00> : vector<32x128xf32>
    %39 = tpu.matmul %33, %38, %cst_41 {dimension_numbers = #tpu.dot_dimension_numbers<[1], [0], [0], [1], [0, 0, 1, 1], [], []>} : vector<32x256xf32>, vector<256x128xf32>, vector<32x128xf32> -> vector<32x128xf32>
    %40 = arith.maximumf %36, %39 : vector<32x128xf32>
    %c0_42 = arith.constant 0 : index
    %c0_43 = arith.constant 0 : index
    %c0_44 = arith.constant 0 : index
    %41 = vector.load %arg7[%c0_42, %c0_43, %c0_44] : memref<3x32x32xf32, #tpu.memory_space<vmem>>, vector<1x32x32xf32>
    %42 = vector.shape_cast %41 : vector<1x32x32xf32> to vector<32x32xf32>
    %c0_45 = arith.constant 0 : index
    %c0_46 = arith.constant 0 : index
    %c0_47 = arith.constant 0 : index
    %43 = vector.load %arg8[%c0_45, %c0_46, %c0_47] : memref<3x128x256xf32, #tpu.memory_space<vmem>>, vector<1x128x256xf32>
    %44 = vector.shape_cast %43 : vector<1x128x256xf32> to vector<128x256xf32>
    %cst_48 = arith.constant dense<0.000000e+00> : vector<32x256xf32>
    %45 = tpu.matmul %40, %44, %cst_48 {dimension_numbers = #tpu.dot_dimension_numbers<[1], [0], [0], [1], [0, 0, 1, 1], [], []>} : vector<32x128xf32>, vector<128x256xf32>, vector<32x256xf32> -> vector<32x256xf32>
    %cst_49 = arith.constant dense<0.000000e+00> : vector<32x256xf32>
    %46 = tpu.matmul %42, %45, %cst_49 {dimension_numbers = #tpu.dot_dimension_numbers<[1], [0], [0], [1], [0, 0, 1, 1], [], []>} : vector<32x32xf32>, vector<32x256xf32>, vector<32x256xf32> -> vector<32x256xf32>
    %c1_50 = arith.constant 1 : index
    %c0_51 = arith.constant 0 : index
    %c0_52 = arith.constant 0 : index
    %47 = vector.load %arg7[%c1_50, %c0_51, %c0_52] : memref<3x32x32xf32, #tpu.memory_space<vmem>>, vector<1x32x32xf32>
    %48 = vector.shape_cast %47 : vector<1x32x32xf32> to vector<32x32xf32>
    %c1_53 = arith.constant 1 : index
    %c0_54 = arith.constant 0 : index
    %c0_55 = arith.constant 0 : index
    %49 = vector.load %arg8[%c1_53, %c0_54, %c0_55] : memref<3x128x256xf32, #tpu.memory_space<vmem>>, vector<1x128x256xf32>
    %50 = vector.shape_cast %49 : vector<1x128x256xf32> to vector<128x256xf32>
    %cst_56 = arith.constant dense<0.000000e+00> : vector<32x256xf32>
    %51 = tpu.matmul %40, %50, %cst_56 {dimension_numbers = #tpu.dot_dimension_numbers<[1], [0], [0], [1], [0, 0, 1, 1], [], []>} : vector<32x128xf32>, vector<128x256xf32>, vector<32x256xf32> -> vector<32x256xf32>
    %cst_57 = arith.constant dense<0.000000e+00> : vector<32x256xf32>
    %52 = tpu.matmul %48, %51, %cst_57 {dimension_numbers = #tpu.dot_dimension_numbers<[1], [0], [0], [1], [0, 0, 1, 1], [], []>} : vector<32x32xf32>, vector<32x256xf32>, vector<32x256xf32> -> vector<32x256xf32>
    %53 = arith.addf %46, %52 : vector<32x256xf32>
    %c2_58 = arith.constant 2 : index
    %c0_59 = arith.constant 0 : index
    %c0_60 = arith.constant 0 : index
    %54 = vector.load %arg7[%c2_58, %c0_59, %c0_60] : memref<3x32x32xf32, #tpu.memory_space<vmem>>, vector<1x32x32xf32>
    %55 = vector.shape_cast %54 : vector<1x32x32xf32> to vector<32x32xf32>
    %c2_61 = arith.constant 2 : index
    %c0_62 = arith.constant 0 : index
    %c0_63 = arith.constant 0 : index
    %56 = vector.load %arg8[%c2_61, %c0_62, %c0_63] : memref<3x128x256xf32, #tpu.memory_space<vmem>>, vector<1x128x256xf32>
    %57 = vector.shape_cast %56 : vector<1x128x256xf32> to vector<128x256xf32>
    %cst_64 = arith.constant dense<0.000000e+00> : vector<32x256xf32>
    %58 = tpu.matmul %40, %57, %cst_64 {dimension_numbers = #tpu.dot_dimension_numbers<[1], [0], [0], [1], [0, 0, 1, 1], [], []>} : vector<32x128xf32>, vector<128x256xf32>, vector<32x256xf32> -> vector<32x256xf32>
    %cst_65 = arith.constant dense<0.000000e+00> : vector<32x256xf32>
    %59 = tpu.matmul %55, %58, %cst_65 {dimension_numbers = #tpu.dot_dimension_numbers<[1], [0], [0], [1], [0, 0, 1, 1], [], []>} : vector<32x32xf32>, vector<32x256xf32>, vector<32x256xf32> -> vector<32x256xf32>
    %60 = arith.addf %53, %59 : vector<32x256xf32>
    %c0_66 = arith.constant 0 : index
    %c0_67 = arith.constant 0 : index
    %61 = vector.load %arg9[%c0_66, %c0_67] : memref<1x256xf32, #tpu.memory_space<vmem>>, vector<1x256xf32>
    %62 = vector.broadcast %61 : vector<1x256xf32> to vector<32x256xf32>
    %63 = arith.addf %60, %62 : vector<32x256xf32>
    %cst_68 = arith.constant 0.000000e+00 : f32
    %64 = vector.broadcast %cst_68 : f32 to vector<32x256xf32>
    %65 = arith.maximumf %63, %64 : vector<32x256xf32>
    %c0_69 = arith.constant 0 : index
    %c0_70 = arith.constant 0 : index
    %c0_71 = arith.constant 0 : index
    %66 = vector.load %arg10[%c0_69, %c0_70, %c0_71] : memref<2x16x32xf32, #tpu.memory_space<vmem>>, vector<1x16x32xf32>
    %67 = vector.shape_cast %66 : vector<1x16x32xf32> to vector<16x32xf32>
    %cst_72 = arith.constant dense<0.000000e+00> : vector<16x256xf32>
    %68 = tpu.matmul %67, %65, %cst_72 {dimension_numbers = #tpu.dot_dimension_numbers<[1], [0], [0], [1], [0, 0, 1, 1], [], []>} : vector<16x32xf32>, vector<32x256xf32>, vector<16x256xf32> -> vector<16x256xf32>
    %c1_73 = arith.constant 1 : index
    %c0_74 = arith.constant 0 : index
    %c0_75 = arith.constant 0 : index
    %69 = vector.load %arg10[%c1_73, %c0_74, %c0_75] : memref<2x16x32xf32, #tpu.memory_space<vmem>>, vector<1x16x32xf32>
    %70 = vector.shape_cast %69 : vector<1x16x32xf32> to vector<16x32xf32>
    %cst_76 = arith.constant dense<0.000000e+00> : vector<16x256xf32>
    %71 = tpu.matmul %70, %65, %cst_76 {dimension_numbers = #tpu.dot_dimension_numbers<[1], [0], [0], [1], [0, 0, 1, 1], [], []>} : vector<16x32xf32>, vector<32x256xf32>, vector<16x256xf32> -> vector<16x256xf32>
    %72 = arith.maximumf %68, %71 : vector<16x256xf32>
    %c0_77 = arith.constant 0 : index
    %c0_78 = arith.constant 0 : index
    %c0_79 = arith.constant 0 : index
    %73 = vector.load %arg11[%c0_77, %c0_78, %c0_79] : memref<2x256x128xf32, #tpu.memory_space<vmem>>, vector<1x256x128xf32>
    %74 = vector.shape_cast %73 : vector<1x256x128xf32> to vector<256x128xf32>
    %cst_80 = arith.constant dense<0.000000e+00> : vector<16x128xf32>
    %75 = tpu.matmul %72, %74, %cst_80 {dimension_numbers = #tpu.dot_dimension_numbers<[1], [0], [0], [1], [0, 0, 1, 1], [], []>} : vector<16x256xf32>, vector<256x128xf32>, vector<16x128xf32> -> vector<16x128xf32>
    %c1_81 = arith.constant 1 : index
    %c0_82 = arith.constant 0 : index
    %c0_83 = arith.constant 0 : index
    %76 = vector.load %arg11[%c1_81, %c0_82, %c0_83] : memref<2x256x128xf32, #tpu.memory_space<vmem>>, vector<1x256x128xf32>
    %77 = vector.shape_cast %76 : vector<1x256x128xf32> to vector<256x128xf32>
    %cst_84 = arith.constant dense<0.000000e+00> : vector<16x128xf32>
    %78 = tpu.matmul %72, %77, %cst_84 {dimension_numbers = #tpu.dot_dimension_numbers<[1], [0], [0], [1], [0, 0, 1, 1], [], []>} : vector<16x256xf32>, vector<256x128xf32>, vector<16x128xf32> -> vector<16x128xf32>
    %79 = arith.maximumf %75, %78 : vector<16x128xf32>
    %c0_85 = arith.constant 0 : index
    %c0_86 = arith.constant 0 : index
    %80 = vector.load %arg14[%c0_85, %c0_86] : memref<1x128xf32, #tpu.memory_space<vmem>>, vector<1x128xf32>
    %c0_87 = arith.constant 0 : index
    %c0_88 = arith.constant 0 : index
    %c0_89 = arith.constant 0 : index
    %81 = vector.load %arg12[%c0_87, %c0_88, %c0_89] : memref<4x4x16xf32, #tpu.memory_space<vmem>>, vector<1x4x16xf32>
    %82 = vector.shape_cast %81 : vector<1x4x16xf32> to vector<4x16xf32>
    %cst_90 = arith.constant dense<0.000000e+00> : vector<4x128xf32>
    %83 = tpu.matmul %82, %79, %cst_90 {dimension_numbers = #tpu.dot_dimension_numbers<[1], [0], [0], [1], [0, 0, 1, 1], [], []>} : vector<4x16xf32>, vector<16x128xf32>, vector<4x128xf32> -> vector<4x128xf32>
    %c0_91 = arith.constant 0 : index
    %c0_92 = arith.constant 0 : index
    %c0_93 = arith.constant 0 : index
    %84 = vector.load %arg13[%c0_91, %c0_92, %c0_93] : memref<4x128x128xf32, #tpu.memory_space<vmem>>, vector<1x128x128xf32>
    %85 = vector.shape_cast %84 : vector<1x128x128xf32> to vector<128x128xf32>
    %cst_94 = arith.constant dense<0.000000e+00> : vector<4x128xf32>
    %86 = tpu.matmul %83, %85, %cst_94 {dimension_numbers = #tpu.dot_dimension_numbers<[1], [0], [0], [1], [0, 0, 1, 1], [], []>} : vector<4x128xf32>, vector<128x128xf32>, vector<4x128xf32> -> vector<4x128xf32>
    %87 = vector.broadcast %80 : vector<1x128xf32> to vector<4x128xf32>
    %88 = arith.addf %87, %86 : vector<4x128xf32>
    %c1_95 = arith.constant 1 : index
    %c0_96 = arith.constant 0 : index
    %c0_97 = arith.constant 0 : index
    %89 = vector.load %arg12[%c1_95, %c0_96, %c0_97] : memref<4x4x16xf32, #tpu.memory_space<vmem>>, vector<1x4x16xf32>
    %90 = vector.shape_cast %89 : vector<1x4x16xf32> to vector<4x16xf32>
    %cst_98 = arith.constant dense<0.000000e+00> : vector<4x128xf32>
    %91 = tpu.matmul %90, %79, %cst_98 {dimension_numbers = #tpu.dot_dimension_numbers<[1], [0], [0], [1], [0, 0, 1, 1], [], []>} : vector<4x16xf32>, vector<16x128xf32>, vector<4x128xf32> -> vector<4x128xf32>
    %c1_99 = arith.constant 1 : index
    %c0_100 = arith.constant 0 : index
    %c0_101 = arith.constant 0 : index
    %92 = vector.load %arg13[%c1_99, %c0_100, %c0_101] : memref<4x128x128xf32, #tpu.memory_space<vmem>>, vector<1x128x128xf32>
    %93 = vector.shape_cast %92 : vector<1x128x128xf32> to vector<128x128xf32>
    %cst_102 = arith.constant dense<0.000000e+00> : vector<4x128xf32>
    %94 = tpu.matmul %91, %93, %cst_102 {dimension_numbers = #tpu.dot_dimension_numbers<[1], [0], [0], [1], [0, 0, 1, 1], [], []>} : vector<4x128xf32>, vector<128x128xf32>, vector<4x128xf32> -> vector<4x128xf32>
    %95 = arith.addf %88, %94 : vector<4x128xf32>
    %c2_103 = arith.constant 2 : index
    %c0_104 = arith.constant 0 : index
    %c0_105 = arith.constant 0 : index
    %96 = vector.load %arg12[%c2_103, %c0_104, %c0_105] : memref<4x4x16xf32, #tpu.memory_space<vmem>>, vector<1x4x16xf32>
    %97 = vector.shape_cast %96 : vector<1x4x16xf32> to vector<4x16xf32>
    %cst_106 = arith.constant dense<0.000000e+00> : vector<4x128xf32>
    %98 = tpu.matmul %97, %79, %cst_106 {dimension_numbers = #tpu.dot_dimension_numbers<[1], [0], [0], [1], [0, 0, 1, 1], [], []>} : vector<4x16xf32>, vector<16x128xf32>, vector<4x128xf32> -> vector<4x128xf32>
    %c2_107 = arith.constant 2 : index
    %c0_108 = arith.constant 0 : index
    %c0_109 = arith.constant 0 : index
    %99 = vector.load %arg13[%c2_107, %c0_108, %c0_109] : memref<4x128x128xf32, #tpu.memory_space<vmem>>, vector<1x128x128xf32>
    %100 = vector.shape_cast %99 : vector<1x128x128xf32> to vector<128x128xf32>
    %cst_110 = arith.constant dense<0.000000e+00> : vector<4x128xf32>
    %101 = tpu.matmul %98, %100, %cst_110 {dimension_numbers = #tpu.dot_dimension_numbers<[1], [0], [0], [1], [0, 0, 1, 1], [], []>} : vector<4x128xf32>, vector<128x128xf32>, vector<4x128xf32> -> vector<4x128xf32>
    %102 = arith.addf %95, %101 : vector<4x128xf32>
    %c3 = arith.constant 3 : index
    %c0_111 = arith.constant 0 : index
    %c0_112 = arith.constant 0 : index
    %103 = vector.load %arg12[%c3, %c0_111, %c0_112] : memref<4x4x16xf32, #tpu.memory_space<vmem>>, vector<1x4x16xf32>
    %104 = vector.shape_cast %103 : vector<1x4x16xf32> to vector<4x16xf32>
    %cst_113 = arith.constant dense<0.000000e+00> : vector<4x128xf32>
    %105 = tpu.matmul %104, %79, %cst_113 {dimension_numbers = #tpu.dot_dimension_numbers<[1], [0], [0], [1], [0, 0, 1, 1], [], []>} : vector<4x16xf32>, vector<16x128xf32>, vector<4x128xf32> -> vector<4x128xf32>
    %c3_114 = arith.constant 3 : index
    %c0_115 = arith.constant 0 : index
    %c0_116 = arith.constant 0 : index
    %106 = vector.load %arg13[%c3_114, %c0_115, %c0_116] : memref<4x128x128xf32, #tpu.memory_space<vmem>>, vector<1x128x128xf32>
    %107 = vector.shape_cast %106 : vector<1x128x128xf32> to vector<128x128xf32>
    %cst_117 = arith.constant dense<0.000000e+00> : vector<4x128xf32>
    %108 = tpu.matmul %105, %107, %cst_117 {dimension_numbers = #tpu.dot_dimension_numbers<[1], [0], [0], [1], [0, 0, 1, 1], [], []>} : vector<4x128xf32>, vector<128x128xf32>, vector<4x128xf32> -> vector<4x128xf32>
    %109 = arith.addf %102, %108 : vector<4x128xf32>
    %cst_118 = arith.constant 0.000000e+00 : f32
    %110 = vector.broadcast %cst_118 : f32 to vector<4x128xf32>
    %111 = arith.maximumf %109, %110 : vector<4x128xf32>
    %c0_119 = arith.constant 0 : index
    %c0_120 = arith.constant 0 : index
    %112 = vector.load %arg15[%c0_119, %c0_120] : memref<4x128xf32, #tpu.memory_space<vmem>>, vector<4x128xf32>
    tpu.vector_store %arg15[%c0_119, %c0_120], %111 {strides = array<i32>} : memref<4x128xf32, #tpu.memory_space<vmem>>, vector<4x128xf32>,
    return
  }
  func.func @transform_0(%arg0: i32) -> (i32, i32, i32) {
    %c0_i32 = arith.constant 0 : i32
    %c0_i32_0 = arith.constant 0 : i32
    %c0_i32_1 = arith.constant 0 : i32
    return %arg0, %c0_i32, %c0_i32_0 : i32, i32, i32
  }
  func.func @transform_1(%arg0: i32) -> (i32, i32, i32) {
    %c0_i32 = arith.constant 0 : i32
    %c0_i32_0 = arith.constant 0 : i32
    %c0_i32_1 = arith.constant 0 : i32
    %c0_i32_2 = arith.constant 0 : i32
    return %c0_i32, %c0_i32_0, %c0_i32_1 : i32, i32, i32
  }
  func.func @transform_2(%arg0: i32) -> (i32, i32, i32) {
    %c0_i32 = arith.constant 0 : i32
    %c0_i32_0 = arith.constant 0 : i32
    %c0_i32_1 = arith.constant 0 : i32
    %c0_i32_2 = arith.constant 0 : i32
    return %c0_i32, %c0_i32_0, %c0_i32_1 : i32, i32, i32
  }
  func.func @transform_3(%arg0: i32) -> (i32, i32) {
    %c0_i32 = arith.constant 0 : i32
    %c0_i32_0 = arith.constant 0 : i32
    %c0_i32_1 = arith.constant 0 : i32
    return %c0_i32, %c0_i32_0 : i32, i32
  }
  func.func @transform_4(%arg0: i32) -> (i32, i32, i32) {
    %c0_i32 = arith.constant 0 : i32
    %c0_i32_0 = arith.constant 0 : i32
    %c0_i32_1 = arith.constant 0 : i32
    %c0_i32_2 = arith.constant 0 : i32
    return %c0_i32, %c0_i32_0, %c0_i32_1 : i32, i32, i32
  }
  func.func @transform_5(%arg0: i32) -> (i32, i32, i32) {
    %c0_i32 = arith.constant 0 : i32
    %c0_i32_0 = arith.constant 0 : i32
    %c0_i32_1 = arith.constant 0 : i32
    %c0_i32_2 = arith.constant 0 : i32
    return %c0_i32, %c0_i32_0, %c0_i32_1 : i32, i32, i32
  }
  func.func @transform_6(%arg0: i32) -> (i32, i32, i32) {
    %c0_i32 = arith.constant 0 : i32
    %c0_i32_0 = arith.constant 0 : i32
    %c0_i32_1 = arith.constant 0 : i32
    %c0_i32_2 = arith.constant 0 : i32
    return %c0_i32, %c0_i32_0, %c0_i32_1 : i32, i32, i32
  }
  func.func @transform_7(%arg0: i32) -> (i32, i32, i32) {
    %c0_i32 = arith.constant 0 : i32
    %c0_i32_0 = arith.constant 0 : i32
    %c0_i32_1 = arith.constant 0 : i32
    %c0_i32_2 = arith.constant 0 : i32
    return %c0_i32, %c0_i32_0, %c0_i32_1 : i32, i32, i32
  }
  func.func @transform_8(%arg0: i32) -> (i32, i32) {
    %c0_i32 = arith.constant 0 : i32
    %c0_i32_0 = arith.constant 0 : i32
    %c0_i32_1 = arith.constant 0 : i32
    return %c0_i32, %c0_i32_0 : i32, i32
  }
  func.func @transform_9(%arg0: i32) -> (i32, i32, i32) {
    %c0_i32 = arith.constant 0 : i32
    %c0_i32_0 = arith.constant 0 : i32
    %c0_i32_1 = arith.constant 0 : i32
    %c0_i32_2 = arith.constant 0 : i32
    return %c0_i32, %c0_i32_0, %c0_i32_1 : i32, i32, i32
  }
  func.func @transform_10(%arg0: i32) -> (i32, i32, i32) {
    %c0_i32 = arith.constant 0 : i32
    %c0_i32_0 = arith.constant 0 : i32
    %c0_i32_1 = arith.constant 0 : i32
    %c0_i32_2 = arith.constant 0 : i32
    return %c0_i32, %c0_i32_0, %c0_i32_1 : i32, i32, i32
  }
  func.func @transform_11(%arg0: i32) -> (i32, i32, i32) {
    %c0_i32 = arith.constant 0 : i32
    %c0_i32_0 = arith.constant 0 : i32
    %c0_i32_1 = arith.constant 0 : i32
    %c0_i32_2 = arith.constant 0 : i32
    return %c0_i32, %c0_i32_0, %c0_i32_1 : i32, i32, i32
  }
  func.func @transform_12(%arg0: i32) -> (i32, i32, i32) {
    %c0_i32 = arith.constant 0 : i32
    %c0_i32_0 = arith.constant 0 : i32
    %c0_i32_1 = arith.constant 0 : i32
    %c0_i32_2 = arith.constant 0 : i32
    return %c0_i32, %c0_i32_0, %c0_i32_1 : i32, i32, i32
  }
  func.func @transform_13(%arg0: i32) -> (i32, i32) {
    %c0_i32 = arith.constant 0 : i32
    %c0_i32_0 = arith.constant 0 : i32
    %c0_i32_1 = arith.constant 0 : i32
    return %c0_i32, %c0_i32_0 : i32, i32
  }
  func.func @transform_14(%arg0: i32) -> (i32, i32) {
    %c0_i32 = arith.constant 0 : i32
    %c0_i32_0 = arith.constant 0 : i32
    return %arg0, %c0_i32 : i32, i32
  }
}

</mosaic_0001>

<llo_original>
// kernel: tile.13
$region0: #{tile.13}
  #allocation0 [shape = 's32[1]{0}', space=sflag, size = 0x4, scoped, tag = 'scoped memory for tile.13']
  %s0 = inlined_call_operand.vmem [shape: f32[16], index: 0, kind: input, shape index: {}]
  %s1 = inlined_call_operand.vmem [shape: f32[16,16], index: 1, kind: output, shape index: {}]
  // Predicated region
  $region2: #{tile.13} parent=0 // pred_check
    _
  $region3: #{tile.13} parent=0 // pred_check_branch
    %3 = sbr.rel (0) target = $region5
  $region4: #{tile.13} parent=0 // pred_region
    _
  $region5: #{tile.13} parent=0 // pred_fallthru
    _
  %v4 = vld [vmem:[%s0] ss:$0 sm:$0xff]
  %5 = vst [vmem:[%s1] sm:$0xff] %v4
  %s6 = scalar_lea.vmem %s1, 8
  %7 = vst [vmem:[%s6] sm:$0xff] %v4

// kernel: tile.14
$region0: #{tile.14}
  %s0 = inlined_call_operand.vmem [shape: f32[16,16], index: 0, kind: input, shape index: {}]
  %s1 = inlined_call_operand.vmem [shape: f32[1,256], index: 1, kind: output, shape index: {}]
  $region1: #{tile.14} parent=0
    #allocation0 [shape = 'u8[8192]{0}', space=vmem, size = 0x2000, scoped, tag = 'scoped mem for output reshape']
    %s2 = smov 3
    %v3 = vld [vmem:[%s0] ss:$8 sm:%s2]
    %vm4 = vcmask 130048
    %5 = vst.msk [vmem:[#allocation0] ss:$8 sm:$0x3] %vm4, %v3
    %s6 = scalar_lea.vmem %s0, 7
    %s7 = smov 3
    %v8 = vld [vmem:[%s6] ss:$8 sm:%s7]
    %9 = vrot.lane.b32.xlu0 %v8, 112
    %v10 = vpop.permute.xlu0 %9
    %vm11 = vcmask 1048448
    %12 = vst.msk [vmem:[#allocation0] ss:$8 sm:$0x3] %vm11, %v10
    %s13 = scalar_lea.vmem %s0, 6
    %s14 = smov 3
    %v15 = vld [vmem:[%s13] ss:$8 sm:%s14]
    %16 = vrot.lane.b32.xlu0 %v15, 96
    %v17 = vpop.permute.xlu0 %16
    %vm18 = vcmask 917248
    %19 = vst.msk [vmem:[#allocation0] ss:$8 sm:$0x3] %vm18, %v17
    %s20 = scalar_lea.vmem %s0, 5
    %s21 = smov 3
    %v22 = vld [vmem:[%s20] ss:$8 sm:%s21]
    %23 = vrot.lane.b32.xlu0 %v22, 80
    %v24 = vpop.permute.xlu0 %23
    %vm25 = vcmask 786048
    %26 = vst.msk [vmem:[#allocation0] ss:$8 sm:$0x3] %vm25, %v24
    %s27 = scalar_lea.vmem %s0, 4
    %s28 = smov 3
    %v29 = vld [vmem:[%s27] ss:$8 sm:%s28]
    %30 = vrot.lane.b32.xlu0 %v29, 64
    %v31 = vpop.permute.xlu0 %30
    %vm32 = vcmask 654848
    %33 = vst.msk [vmem:[#allocation0] ss:$8 sm:$0x3] %vm32, %v31
    %s34 = scalar_lea.vmem %s0, 3
    %s35 = smov 3
    %v36 = vld [vmem:[%s34] ss:$8 sm:%s35]
    %37 = vrot.lane.b32.xlu0 %v36, 48
    %v38 = vpop.permute.xlu0 %37
    %vm39 = vcmask 523648
    %40 = vst.msk [vmem:[#allocation0] ss:$8 sm:$0x3] %vm39, %v38
    %s41 = scalar_lea.vmem %s0, 2
    %s42 = smov 3
    %v43 = vld [vmem:[%s41] ss:$8 sm:%s42]
    %44 = vrot.lane.b32.xlu0 %v43, 32
    %v45 = vpop.permute.xlu0 %44
    %vm46 = vcmask 392448
    %47 = vst.msk [vmem:[#allocation0] ss:$8 sm:$0x3] %vm46, %v45
    %s48 = scalar_lea.vmem %s0, 1
    %s49 = smov 3
    %v50 = vld [vmem:[%s48] ss:$8 sm:%s49]
    %51 = vrot.lane.b32.xlu0 %v50, 16
    %v52 = vpop.permute.xlu0 %51
    %vm53 = vcmask 261248
    %54 = vst.msk [vmem:[#allocation0] ss:$8 sm:$0x3] %vm53, %v52
    %s56 = sshllo.u32 0, 1
    %v58 = vld [vmem:[#allocation0] sm:%s56]
    %s59 = sshllo.u32 0, 1
    %60 = vst [vmem:[%s1] sm:%s59] %v58
    %s61 = scalar_lea.vmem [#allocation0], 8
    %v62 = vld [vmem:[%s61] sm:%s56]
    %s63 = sshllo.u32 0, 1
    %s64 = scalar_lea.vmem %s1, 1
    %65 = vst [vmem:[%s64] sm:%s63] %v62

// kernel: tile.18
$region0: #{tile.18}
  #allocation0 [shape = 's32[1]{0}', space=sflag, size = 0x4, scoped, tag = 'scoped memory for tile.18']
  %s0 = inlined_call_operand.vmem [shape: f32[32], index: 0, kind: input, shape index: {}]
  %s1 = inlined_call_operand.vmem [shape: f32[8,32], index: 1, kind: output, shape index: {}]
  // Predicated region
  $region2: #{tile.18} parent=0 // pred_check
    _
  $region3: #{tile.18} parent=0 // pred_check_branch
    %3 = sbr.rel (0) target = $region5
  $region4: #{tile.18} parent=0 // pred_region
    _
  $region5: #{tile.18} parent=0 // pred_fallthru
    _
  %v4 = vld [vmem:[%s0] ss:$0 sm:$0xff]
  %5 = vst [vmem:[%s1] sm:$0xff] %v4

// kernel: tile.19
$region0: #{tile.19}
  %s0 = inlined_call_operand.vmem [shape: f32[8,32], index: 0, kind: input, shape index: {}]
  %s1 = inlined_call_operand.vmem [shape: f32[1,256], index: 1, kind: output, shape index: {}]
  $region1: #{tile.19} parent=0
    #allocation0 [shape = 'u8[8192]{0}', space=vmem, size = 0x2000, scoped, tag = 'scoped mem for output reshape']
    %s2 = smov 3
    %v3 = vld [vmem:[%s0] ss:$4 sm:%s2]
    %vm4 = vcmask 261120
    %5 = vst.msk [vmem:[#allocation0] ss:$8 sm:$0x3] %vm4, %v3
    %s6 = scalar_lea.vmem %s0, 3
    %s7 = smov 3
    %v8 = vld [vmem:[%s6] ss:$4 sm:%s7]
    %9 = vrot.lane.b32.xlu0 %v8, 96
    %v10 = vpop.permute.xlu0 %9
    %vm11 = vcmask 1048320
    %12 = vst.msk [vmem:[#allocation0] ss:$8 sm:$0x3] %vm11, %v10
    %s13 = scalar_lea.vmem %s0, 2
    %s14 = smov 3
    %v15 = vld [vmem:[%s13] ss:$4 sm:%s14]
    %16 = vrot.lane.b32.xlu0 %v15, 64
    %v17 = vpop.permute.xlu0 %16
    %vm18 = vcmask 785920
    %19 = vst.msk [vmem:[#allocation0] ss:$8 sm:$0x3] %vm18, %v17
    %s20 = scalar_lea.vmem %s0, 1
    %s21 = smov 3
    %v22 = vld [vmem:[%s20] ss:$4 sm:%s21]
    %23 = vrot.lane.b32.xlu0 %v22, 32
    %v24 = vpop.permute.xlu0 %23
    %vm25 = vcmask 523520
    %26 = vst.msk [vmem:[#allocation0] ss:$8 sm:$0x3] %vm25, %v24
    %s28 = sshllo.u32 0, 1
    %v30 = vld [vmem:[#allocation0] sm:%s28]
    %s31 = sshllo.u32 0, 1
    %32 = vst [vmem:[%s1] sm:%s31] %v30
    %s33 = scalar_lea.vmem [#allocation0], 8
    %v34 = vld [vmem:[%s33] sm:%s28]
    %s35 = sshllo.u32 0, 1
    %s36 = scalar_lea.vmem %s1, 1
    %37 = vst [vmem:[%s36] sm:%s35] %v34

// kernel: siamese_forward.1
$region0: #{siamese_forward.1}
  #allocation0 [shape = 'u32[]', space=smem, size = 0x4, offset = 0x4, fixed_abs, tag = 'smem constant byte address 0x4 - core index']
  #allocation1 [shape = 'u32[144,128]{1,0:T(1,128)}', space=vmem, size = 0x12000, scoped, tag = 'internal scratch']
  %s0 = inlined_call_operand.vmem [shape: f32[1,64,64], index: 0, kind: input, shape index: {}]
  %s1 = inlined_call_operand.vmem [shape: f32[3,64,64], index: 1, kind: input, shape index: {}]
  %s2 = inlined_call_operand.vmem [shape: f32[3,64,256], index: 2, kind: input, shape index: {}]
  %s3 = inlined_call_operand.vmem [shape: f32[1,256], index: 3, kind: input, shape index: {}]
  %s4 = inlined_call_operand.vmem [shape: f32[2,32,64], index: 4, kind: input, shape index: {}]
  %s5 = inlined_call_operand.vmem [shape: f32[2,256,128], index: 5, kind: input, shape index: {}]
  %s6 = inlined_call_operand.vmem [shape: f32[3,32,32], index: 6, kind: input, shape index: {}]
  %s7 = inlined_call_operand.vmem [shape: f32[3,128,256], index: 7, kind: input, shape index: {}]
  %s8 = inlined_call_operand.vmem [shape: f32[1,256], index: 8, kind: input, shape index: {}]
  %s9 = inlined_call_operand.vmem [shape: f32[2,16,32], index: 9, kind: input, shape index: {}]
  %s10 = inlined_call_operand.vmem [shape: f32[2,256,128], index: 10, kind: input, shape index: {}]
  %s11 = inlined_call_operand.vmem [shape: f32[4,4,16], index: 11, kind: input, shape index: {}]
  %s12 = inlined_call_operand.vmem [shape: f32[4,128,128], index: 12, kind: input, shape index: {}]
  %s13 = inlined_call_operand.vmem [shape: f32[1,128], index: 13, kind: input, shape index: {}]
  %s14 = inlined_call_operand.vmem [shape: f32[4,128], index: 14, kind: output, shape index: {}]
  %s15 = sld [smem:[#allocation0]]
  $region66: #{siamese_forward.1} parent=0
    _
  %s17 = ssub.s32 1, %s15
  %s18 = scalar_select 0, %s17, %s15
  // Predicated region
  $region2: #{siamese_forward.1} parent=0 // pred_check
    _
  $region3: #{siamese_forward.1} parent=0 // pred_check_branch
    %20 = sbr.rel (0) target = $region5
  $region4: #{siamese_forward.1} parent=0 // pred_region
    _
  $region5: #{siamese_forward.1} parent=0 // pred_fallthru
    _
  // Predicated region
  $region6: #{siamese_forward.1} parent=0 // pred_check
    _
  $region7: #{siamese_forward.1} parent=0 // pred_check_branch
    %22 = sbr.rel (0) target = $region9
  $region8: #{siamese_forward.1} parent=0 // pred_region
    _
  $region9: #{siamese_forward.1} parent=0 // pred_fallthru
    _
  // Predicated region
  $region10: #{siamese_forward.1} parent=0 // pred_check
    _
  $region11: #{siamese_forward.1} parent=0 // pred_check_branch
    %24 = sbr.rel (0) target = $region13
  $region12: #{siamese_forward.1} parent=0 // pred_region
    _
  $region13: #{siamese_forward.1} parent=0 // pred_fallthru
    _
  // Predicated region
  $region14: #{siamese_forward.1} parent=0 // pred_check
    _
  $region15: #{siamese_forward.1} parent=0 // pred_check_branch
    %26 = sbr.rel (0) target = $region17
  $region16: #{siamese_forward.1} parent=0 // pred_region
    _
  $region17: #{siamese_forward.1} parent=0 // pred_fallthru
    _
  // Predicated region
  $region18: #{siamese_forward.1} parent=0 // pred_check
    _
  $region19: #{siamese_forward.1} parent=0 // pred_check_branch
    %28 = sbr.rel (0) target = $region21
  $region20: #{siamese_forward.1} parent=0 // pred_region
    _
  $region21: #{siamese_forward.1} parent=0 // pred_fallthru
    _
  // Predicated region
  $region22: #{siamese_forward.1} parent=0 // pred_check
    _
  $region23: #{siamese_forward.1} parent=0 // pred_check_branch
    %30 = sbr.rel (0) target = $region25
  $region24: #{siamese_forward.1} parent=0 // pred_region
    _
  $region25: #{siamese_forward.1} parent=0 // pred_fallthru
    _
  // Predicated region
  $region26: #{siamese_forward.1} parent=0 // pred_check
    _
  $region27: #{siamese_forward.1} parent=0 // pred_check_branch
    %32 = sbr.rel (0) target = $region29
  $region28: #{siamese_forward.1} parent=0 // pred_region
    _
  $region29: #{siamese_forward.1} parent=0 // pred_fallthru
    _
  // Predicated region
  $region30: #{siamese_forward.1} parent=0 // pred_check
    _
  $region31: #{siamese_forward.1} parent=0 // pred_check_branch
    %34 = sbr.rel (0) target = $region33
  $region32: #{siamese_forward.1} parent=0 // pred_region
    _
  $region33: #{siamese_forward.1} parent=0 // pred_fallthru
    _
  // Predicated region
  $region34: #{siamese_forward.1} parent=0 // pred_check
    _
  $region35: #{siamese_forward.1} parent=0 // pred_check_branch
    %36 = sbr.rel (0) target = $region37
  $region36: #{siamese_forward.1} parent=0 // pred_region
    _
  $region37: #{siamese_forward.1} parent=0 // pred_fallthru
    _
  // Predicated region
  $region38: #{siamese_forward.1} parent=0 // pred_check
    _
  $region39: #{siamese_forward.1} parent=0 // pred_check_branch
    %38 = sbr.rel (0) target = $region41
  $region40: #{siamese_forward.1} parent=0 // pred_region
    _
  $region41: #{siamese_forward.1} parent=0 // pred_fallthru
    _
  // Predicated region
  $region42: #{siamese_forward.1} parent=0 // pred_check
    _
  $region43: #{siamese_forward.1} parent=0 // pred_check_branch
    %40 = sbr.rel (0) target = $region45
  $region44: #{siamese_forward.1} parent=0 // pred_region
    _
  $region45: #{siamese_forward.1} parent=0 // pred_fallthru
    _
  // Predicated region
  $region46: #{siamese_forward.1} parent=0 // pred_check
    _
  $region47: #{siamese_forward.1} parent=0 // pred_check_branch
    %42 = sbr.rel (0) target = $region49
  $region48: #{siamese_forward.1} parent=0 // pred_region
    _
  $region49: #{siamese_forward.1} parent=0 // pred_fallthru
    _
  // Predicated region
  $region50: #{siamese_forward.1} parent=0 // pred_check
    _
  $region51: #{siamese_forward.1} parent=0 // pred_check_branch
    %44 = sbr.rel (0) target = $region53
  $region52: #{siamese_forward.1} parent=0 // pred_region
    _
  $region53: #{siamese_forward.1} parent=0 // pred_fallthru
    _
  // Predicated region
  $region54: #{siamese_forward.1} parent=0 // pred_check
    _
  $region55: #{siamese_forward.1} parent=0 // pred_check_branch
    %46 = sbr.rel (0) target = $region57
  $region56: #{siamese_forward.1} parent=0 // pred_region
    _
  $region57: #{siamese_forward.1} parent=0 // pred_fallthru
    _
  %v47 = vld [vmem:[%s0] sm:$0xff]
  %v48 = vld [vmem:[%s0 + $0x8] sm:$0xff]
  %v49 = vld [vmem:[%s0 + $0x10] sm:$0xff]
  %v50 = vld [vmem:[%s0 + $0x18] sm:$0xff]
  %v51 = vld [vmem:[%s0 + $0x20] sm:$0xff]
  %v52 = vld [vmem:[%s0 + $0x28] sm:$0xff]
  %v53 = vld [vmem:[%s0 + $0x30] sm:$0xff]
  %v54 = vld [vmem:[%s0 + $0x38] sm:$0xff]
  %v55 = vld [vmem:[%s1] sm:$0xff]
  %v56 = vld [vmem:[%s1 + $0x8] sm:$0xff]
  %v57 = vld [vmem:[%s1 + $0x10] sm:$0xff]
  %v58 = vld [vmem:[%s1 + $0x18] sm:$0xff]
  %v59 = vld [vmem:[%s1 + $0x20] sm:$0xff]
  %v60 = vld [vmem:[%s1 + $0x28] sm:$0xff]
  %v61 = vld [vmem:[%s1 + $0x30] sm:$0xff]
  %v62 = vld [vmem:[%s1 + $0x38] sm:$0xff]
  %v63 = vld [vmem:[%s2] sm:$0xff]
  %v64 = vld [vmem:[%s2 + $0x8] sm:$0xff]
  %v65 = vld [vmem:[%s2 + $0x10] sm:$0xff]
  %v66 = vld [vmem:[%s2 + $0x18] sm:$0xff]
  %v67 = vld [vmem:[%s2 + $0x20] sm:$0xff]
  %v68 = vld [vmem:[%s2 + $0x28] sm:$0xff]
  %v69 = vld [vmem:[%s2 + $0x30] sm:$0xff]
  %v70 = vld [vmem:[%s2 + $0x38] sm:$0xff]
  %v71 = vld [vmem:[%s2 + $0x40] sm:$0xff]
  %v72 = vld [vmem:[%s2 + $0x48] sm:$0xff]
  %v73 = vld [vmem:[%s2 + $0x50] sm:$0xff]
  %v74 = vld [vmem:[%s2 + $0x58] sm:$0xff]
  %v75 = vld [vmem:[%s2 + $0x60] sm:$0xff]
  %v76 = vld [vmem:[%s2 + $0x68] sm:$0xff]
  %v77 = vld [vmem:[%s2 + $0x70] sm:$0xff]
  %v78 = vld [vmem:[%s2 + $0x78] sm:$0xff]
  %vm79 = vcmask 523264
  %v81 = vsel %vm79, %v47, 0
  %v84 = vsel %vm79, %v48, 0
  %v87 = vsel %vm79, %v49, 0
  %v90 = vsel %vm79, %v50, 0
  %v93 = vsel %vm79, %v51, 0
  %v96 = vsel %vm79, %v52, 0
  %v99 = vsel %vm79, %v53, 0
  %v102 = vsel %vm79, %v54, 0
  %104 = vmatprep.subr.mxu0 %v64
  %105 = vmatpush1.msra.mxu0 %v63
  %106 = vmatprep.subr.mxu0 %v66
  %107 = vmatpush1.msra.mxu0 %v65
  %108 = vmatprep.subr.mxu0 %v68
  %109 = vmatpush1.msra.mxu0 %v67
  %110 = vmatprep.subr.mxu0 %v70
  %111 = vmatpush1.msra.mxu0 %v69
  %112 = vmatprep.subr.mxu0 %v72
  %113 = vmatpush1.msra.mxu0 %v71
  %114 = vmatprep.subr.mxu0 %v74
  %115 = vmatpush1.msra.mxu0 %v73
  %116 = vmatprep.subr.mxu0 %v76
  %117 = vmatpush1.msra.mxu0 %v75
  %118 = vmatprep.subr.mxu0 %v78
  %119 = vmatpush1.msra.mxu0 %v77
  %120 = vmatprep.subr.mxu0 0.0
  %121 = vmatpush1.msra.mxu0 0.0
  %122 = vmatprep.subr.mxu0 0.0
  %123 = vmatpush1.msra.mxu0 0.0
  %124 = vmatprep.subr.mxu0 0.0
  %125 = vmatpush1.msra.mxu0 0.0
  %126 = vmatprep.subr.mxu0 0.0
  %127 = vmatpush1.msra.mxu0 0.0
  %128 = vmatprep.subr.mxu0 0.0
  %129 = vmatpush1.msra.mxu0 0.0
  %130 = vmatprep.subr.mxu0 0.0
  %131 = vmatpush1.msra.mxu0 0.0
  %132 = vmatprep.subr.mxu0 0.0
  %133 = vmatpush1.msra.mxu0 0.0
  %134 = vmatprep.subr.mxu0 0.0
  %135 = vmatpush1.msra.mxu0 0.0
  %136 = vmatprep.subr.mxu0 0.0
  %137 = vmatpush1.msra.mxu0 0.0
  %138 = vmatprep.subr.mxu0 0.0
  %139 = vmatpush1.msra.mxu0 0.0
  %140 = vmatprep.subr.mxu0 0.0
  %141 = vmatpush1.msra.mxu0 0.0
  %142 = vmatprep.subr.mxu0 0.0
  %143 = vmatpush1.msra.mxu0 0.0
  %144 = vmatprep.subr.mxu0 0.0
  %145 = vmatpush1.msra.mxu0 0.0
  %146 = vmatprep.subr.mxu0 0.0
  %147 = vmatpush1.msra.mxu0 0.0
  %148 = vmatprep.subr.mxu0 0.0
  %149 = vmatpush1.msra.mxu0 0.0
  %150 = vmatprep.subr.mxu0 0.0
  %151 = vmatpush1.msra.mxu0 0.0
  %152 = vmatprep.subr.mxu0 0.0
  %153 = vmatpush1.msra.mxu0 0.0
  %154 = vmatprep.subr.mxu0 0.0
  %155 = vmatpush1.msra.mxu0 0.0
  %156 = vmatprep.subr.mxu0 0.0
  %157 = vmatpush1.msra.mxu0 0.0
  %158 = vmatprep.subr.mxu0 0.0
  %159 = vmatpush1.msra.mxu0 0.0
  %160 = vmatprep.subr.mxu0 0.0
  %161 = vmatpush1.msra.mxu0 0.0
  %162 = vmatprep.subr.mxu0 0.0
  %163 = vmatpush1.msra.mxu0 0.0
  %164 = vmatprep.subr.mxu0 0.0
  %165 = vmatpush1.msra.mxu0 0.0
  %166 = vmatprep.subr.mxu0 0.0
  %167 = vmatpush1.msra.mxu0 0.0
  %168 = vmatprep.mubr.f32.mxu0 0.0
  %169 = vmatmul.mubr.f32.gmra.mrb[0].mxu0 %v81
  %v170 = vpop.f32.mrb[0].mxu0
  %v171 = vadd.f32 0.0, %v170
  %v172 = vpop.f32.mrb[0].mxu0
  %v173 = vadd.f32 0.0, %v172
  %174 = vmatprep.mubr.f32.mxu0 0.0
  %175 = vmatmul.mubr.f32.gmra.mrb[0].mxu0 %v84
  %v176 = vpop.f32.mrb[0].mxu0
  %v177 = vadd.f32 0.0, %v176
  %v178 = vpop.f32.mrb[0].mxu0
  %v179 = vadd.f32 0.0, %v178
  %180 = vmatprep.mubr.f32.mxu0 0.0
  %181 = vmatmul.mubr.f32.gmra.mrb[0].mxu0 %v87
  %v182 = vpop.f32.mrb[0].mxu0
  %v183 = vadd.f32 0.0, %v182
  %v184 = vpop.f32.mrb[0].mxu0
  %v185 = vadd.f32 0.0, %v184
  %186 = vmatprep.mubr.f32.mxu0 0.0
  %187 = vmatmul.mubr.f32.gmra.mrb[0].mxu0 %v90
  %v188 = vpop.f32.mrb[0].mxu0
  %v189 = vadd.f32 0.0, %v188
  %v190 = vpop.f32.mrb[0].mxu0
  %v191 = vadd.f32 0.0, %v190
  %192 = vmatprep.mubr.f32.mxu0 0.0
  %193 = vmatmul.mubr.f32.gmra.mrb[0].mxu0 %v93
  %v194 = vpop.f32.mrb[0].mxu0
  %v195 = vadd.f32 0.0, %v194
  %v196 = vpop.f32.mrb[0].mxu0
  %v197 = vadd.f32 0.0, %v196
  %198 = vmatprep.mubr.f32.mxu0 0.0
  %199 = vmatmul.mubr.f32.gmra.mrb[0].mxu0 %v96
  %v200 = vpop.f32.mrb[0].mxu0
  %v201 = vadd.f32 0.0, %v200
  %v202 = vpop.f32.mrb[0].mxu0
  %v203 = vadd.f32 0.0, %v202
  %204 = vmatprep.mubr.f32.mxu0 0.0
  %205 = vmatmul.mubr.f32.gmra.mrb[0].mxu0 %v99
  %v206 = vpop.f32.mrb[0].mxu0
  %v207 = vadd.f32 0.0, %v206
  %v208 = vpop.f32.mrb[0].mxu0
  %v209 = vadd.f32 0.0, %v208
  %210 = vmatprep.mubr.f32.mxu0 0.0
  %211 = vmatmul.mubr.f32.gmra.mrb[0].mxu0 %v102
  %v212 = vpop.f32.mrb[0].mxu0
  %v213 = vadd.f32 0.0, %v212
  %v214 = vpop.f32.mrb[0].mxu0
  %v215 = vadd.f32 0.0, %v214
  %216 = vdwg.mxu0
  %s217 = scalar_lea.vmem %s1, 64
  %v218 = vld [vmem:[%s217] sm:$0xff]
  %v219 = vld [vmem:[%s217 + $0x8] sm:$0xff]
  %v220 = vld [vmem:[%s217 + $0x10] sm:$0xff]
  %v221 = vld [vmem:[%s217 + $0x18] sm:$0xff]
  %v222 = vld [vmem:[%s217 + $0x20] sm:$0xff]
  %v223 = vld [vmem:[%s217 + $0x28] sm:$0xff]
  %v224 = vld [vmem:[%s217 + $0x30] sm:$0xff]
  %v225 = vld [vmem:[%s217 + $0x38] sm:$0xff]
  %s226 = scalar_lea.vmem %s2, 128
  %v227 = vld [vmem:[%s226] sm:$0xff]
  %v228 = vld [vmem:[%s226 + $0x8] sm:$0xff]
  %v229 = vld [vmem:[%s226 + $0x10] sm:$0xff]
  %v230 = vld [vmem:[%s226 + $0x18] sm:$0xff]
  %v231 = vld [vmem:[%s226 + $0x20] sm:$0xff]
  %v232 = vld [vmem:[%s226 + $0x28] sm:$0xff]
  %v233 = vld [vmem:[%s226 + $0x30] sm:$0xff]
  %v234 = vld [vmem:[%s226 + $0x38] sm:$0xff]
  %v235 = vld [vmem:[%s226 + $0x40] sm:$0xff]
  %v236 = vld [vmem:[%s226 + $0x48] sm:$0xff]
  %v237 = vld [vmem:[%s226 + $0x50] sm:$0xff]
  %v238 = vld [vmem:[%s226 + $0x58] sm:$0xff]
  %v239 = vld [vmem:[%s226 + $0x60] sm:$0xff]
  %v240 = vld [vmem:[%s226 + $0x68] sm:$0xff]
  %v241 = vld [vmem:[%s226 + $0x70] sm:$0xff]
  %v242 = vld [vmem:[%s226 + $0x78] sm:$0xff]
  %243 = vmatprep.subr.mxu0 %v228
  %244 = vmatpush1.msra.mxu0 %v227
  %245 = vmatprep.subr.mxu0 %v230
  %246 = vmatpush1.msra.mxu0 %v229
  %247 = vmatprep.subr.mxu0 %v232
  %248 = vmatpush1.msra.mxu0 %v231
  %249 = vmatprep.subr.mxu0 %v234
  %250 = vmatpush1.msra.mxu0 %v233
  %251 = vmatprep.subr.mxu0 %v236
  %252 = vmatpush1.msra.mxu0 %v235
  %253 = vmatprep.subr.mxu0 %v238
  %254 = vmatpush1.msra.mxu0 %v237
  %255 = vmatprep.subr.mxu0 %v240
  %256 = vmatpush1.msra.mxu0 %v239
  %257 = vmatprep.subr.mxu0 %v242
  %258 = vmatpush1.msra.mxu0 %v241
  %259 = vmatprep.subr.mxu0 0.0
  %260 = vmatpush1.msra.mxu0 0.0
  %261 = vmatprep.subr.mxu0 0.0
  %262 = vmatpush1.msra.mxu0 0.0
  %263 = vmatprep.subr.mxu0 0.0
  %264 = vmatpush1.msra.mxu0 0.0
  %265 = vmatprep.subr.mxu0 0.0
  %266 = vmatpush1.msra.mxu0 0.0
  %267 = vmatprep.subr.mxu0 0.0
  %268 = vmatpush1.msra.mxu0 0.0
  %269 = vmatprep.subr.mxu0 0.0
  %270 = vmatpush1.msra.mxu0 0.0
  %271 = vmatprep.subr.mxu0 0.0
  %272 = vmatpush1.msra.mxu0 0.0
  %273 = vmatprep.subr.mxu0 0.0
  %274 = vmatpush1.msra.mxu0 0.0
  %275 = vmatprep.subr.mxu0 0.0
  %276 = vmatpush1.msra.mxu0 0.0
  %277 = vmatprep.subr.mxu0 0.0
  %278 = vmatpush1.msra.mxu0 0.0
  %279 = vmatprep.subr.mxu0 0.0
  %280 = vmatpush1.msra.mxu0 0.0
  %281 = vmatprep.subr.mxu0 0.0
  %282 = vmatpush1.msra.mxu0 0.0
  %283 = vmatprep.subr.mxu0 0.0
  %284 = vmatpush1.msra.mxu0 0.0
  %285 = vmatprep.subr.mxu0 0.0
  %286 = vmatpush1.msra.mxu0 0.0
  %287 = vmatprep.subr.mxu0 0.0
  %288 = vmatpush1.msra.mxu0 0.0
  %289 = vmatprep.subr.mxu0 0.0
  %290 = vmatpush1.msra.mxu0 0.0
  %291 = vmatprep.subr.mxu0 0.0
  %292 = vmatpush1.msra.mxu0 0.0
  %293 = vmatprep.subr.mxu0 0.0
  %294 = vmatpush1.msra.mxu0 0.0
  %295 = vmatprep.subr.mxu0 0.0
  %296 = vmatpush1.msra.mxu0 0.0
  %297 = vmatprep.subr.mxu0 0.0
  %298 = vmatpush1.msra.mxu0 0.0
  %299 = vmatprep.subr.mxu0 0.0
  %300 = vmatpush1.msra.mxu0 0.0
  %301 = vmatprep.subr.mxu0 0.0
  %302 = vmatpush1.msra.mxu0 0.0
  %303 = vmatprep.subr.mxu0 0.0
  %304 = vmatpush1.msra.mxu0 0.0
  %305 = vmatprep.subr.mxu0 0.0
  %306 = vmatpush1.msra.mxu0 0.0
  %307 = vmatprep.mubr.f32.mxu0 0.0
  %308 = vmatmul.mubr.f32.gmra.mrb[0].mxu0 %v81
  %v309 = vpop.f32.mrb[0].mxu0
  %v310 = vadd.f32 0.0, %v309
  %v311 = vpop.f32.mrb[0].mxu0
  %v312 = vadd.f32 0.0, %v311
  %313 = vmatprep.mubr.f32.mxu0 0.0
  %314 = vmatmul.mubr.f32.gmra.mrb[0].mxu0 %v84
  %v315 = vpop.f32.mrb[0].mxu0
  %v316 = vadd.f32 0.0, %v315
  %v317 = vpop.f32.mrb[0].mxu0
  %v318 = vadd.f32 0.0, %v317
  %319 = vmatprep.mubr.f32.mxu0 0.0
  %320 = vmatmul.mubr.f32.gmra.mrb[0].mxu0 %v87
  %v321 = vpop.f32.mrb[0].mxu0
  %v322 = vadd.f32 0.0, %v321
  %v323 = vpop.f32.mrb[0].mxu0
  %v324 = vadd.f32 0.0, %v323
  %325 = vmatprep.mubr.f32.mxu0 0.0
  %326 = vmatmul.mubr.f32.gmra.mrb[0].mxu0 %v90
  %v327 = vpop.f32.mrb[0].mxu0
  %v328 = vadd.f32 0.0, %v327
  %v329 = vpop.f32.mrb[0].mxu0
  %v330 = vadd.f32 0.0, %v329
  %331 = vmatprep.mubr.f32.mxu0 0.0
  %332 = vmatmul.mubr.f32.gmra.mrb[0].mxu0 %v93
  %v333 = vpop.f32.mrb[0].mxu0
  %v334 = vadd.f32 0.0, %v333
  %v335 = vpop.f32.mrb[0].mxu0
  %v336 = vadd.f32 0.0, %v335
  %337 = vmatprep.mubr.f32.mxu0 0.0
  %338 = vmatmul.mubr.f32.gmra.mrb[0].mxu0 %v96
  %v339 = vpop.f32.mrb[0].mxu0
  %v340 = vadd.f32 0.0, %v339
  %v341 = vpop.f32.mrb[0].mxu0
  %v342 = vadd.f32 0.0, %v341
  %343 = vmatprep.mubr.f32.mxu0 0.0
  %344 = vmatmul.mubr.f32.gmra.mrb[0].mxu0 %v99
  %v345 = vpop.f32.mrb[0].mxu0
  %v346 = vadd.f32 0.0, %v345
  %v347 = vpop.f32.mrb[0].mxu0
  %v348 = vadd.f32 0.0, %v347
  %349 = vmatprep.mubr.f32.mxu0 0.0
  %350 = vmatmul.mubr.f32.gmra.mrb[0].mxu0 %v102
  %v351 = vpop.f32.mrb[0].mxu0
  %v352 = vadd.f32 0.0, %v351
  %v353 = vpop.f32.mrb[0].mxu0
  %v354 = vadd.f32 0.0, %v353
  %355 = vdwg.mxu0
  %v357 = vsel %vm79, %v218, 0
  %v360 = vsel %vm79, %v219, 0
  %v363 = vsel %vm79, %v220, 0
  %v366 = vsel %vm79, %v221, 0
  %v369 = vsel %vm79, %v222, 0
  %v372 = vsel %vm79, %v223, 0
  %v375 = vsel %vm79, %v224, 0
  %v378 = vsel %vm79, %v225, 0
  %380 = vmatprep.subr.mxu0 %v312
  %381 = vmatpush1.msra.mxu0 %v310
  %382 = vmatprep.subr.mxu0 %v318
  %383 = vmatpush1.msra.mxu0 %v316
  %384 = vmatprep.subr.mxu0 %v324
  %385 = vmatpush1.msra.mxu0 %v322
  %386 = vmatprep.subr.mxu0 %v330
  %387 = vmatpush1.msra.mxu0 %v328
  %388 = vmatprep.subr.mxu0 %v336
  %389 = vmatpush1.msra.mxu0 %v334
  %390 = vmatprep.subr.mxu0 %v342
  %391 = vmatpush1.msra.mxu0 %v340
  %392 = vmatprep.subr.mxu0 %v348
  %393 = vmatpush1.msra.mxu0 %v346
  %394 = vmatprep.subr.mxu0 %v354
  %395 = vmatpush1.msra.mxu0 %v352
  %396 = vmatprep.subr.mxu0 0.0
  %397 = vmatpush1.msra.mxu0 0.0
  %398 = vmatprep.subr.mxu0 0.0
  %399 = vmatpush1.msra.mxu0 0.0
  %400 = vmatprep.subr.mxu0 0.0
  %401 = vmatpush1.msra.mxu0 0.0
  %402 = vmatprep.subr.mxu0 0.0
  %403 = vmatpush1.msra.mxu0 0.0
  %404 = vmatprep.subr.mxu0 0.0
  %405 = vmatpush1.msra.mxu0 0.0
  %406 = vmatprep.subr.mxu0 0.0
  %407 = vmatpush1.msra.mxu0 0.0
  %408 = vmatprep.subr.mxu0 0.0
  %409 = vmatpush1.msra.mxu0 0.0
  %410 = vmatprep.subr.mxu0 0.0
  %411 = vmatpush1.msra.mxu0 0.0
  %412 = vmatprep.subr.mxu0 0.0
  %413 = vmatpush1.msra.mxu0 0.0
  %414 = vmatprep.subr.mxu0 0.0
  %415 = vmatpush1.msra.mxu0 0.0
  %416 = vmatprep.subr.mxu0 0.0
  %417 = vmatpush1.msra.mxu0 0.0
  %418 = vmatprep.subr.mxu0 0.0
  %419 = vmatpush1.msra.mxu0 0.0
  %420 = vmatprep.subr.mxu0 0.0
  %421 = vmatpush1.msra.mxu0 0.0
  %422 = vmatprep.subr.mxu0 0.0
  %423 = vmatpush1.msra.mxu0 0.0
  %424 = vmatprep.subr.mxu0 0.0
  %425 = vmatpush1.msra.mxu0 0.0
  %426 = vmatprep.subr.mxu0 0.0
  %427 = vmatpush1.msra.mxu0 0.0
  %428 = vmatprep.subr.mxu0 0.0
  %429 = vmatpush1.msra.mxu0 0.0
  %430 = vmatprep.subr.mxu0 0.0
  %431 = vmatpush1.msra.mxu0 0.0
  %432 = vmatprep.subr.mxu0 0.0
  %433 = vmatpush1.msra.mxu0 0.0
  %434 = vmatprep.subr.mxu0 0.0
  %435 = vmatpush1.msra.mxu0 0.0
  %436 = vmatprep.subr.mxu0 0.0
  %437 = vmatpush1.msra.mxu0 0.0
  %438 = vmatprep.subr.mxu0 0.0
  %439 = vmatpush1.msra.mxu0 0.0
  %440 = vmatprep.subr.mxu0 0.0
  %441 = vmatpush1.msra.mxu0 0.0
  %442 = vmatprep.subr.mxu0 0.0
  %443 = vmatpush1.msra.mxu0 0.0
  %444 = vmatprep.mubr.f32.mxu0 0.0
  %445 = vmatmul.mubr.f32.gmra.mrb[0].mxu0 %v357
  %v446 = vpop.f32.mrb[0].mxu0
  %v447 = vadd.f32 0.0, %v446
  %v448 = vpop.f32.mrb[0].mxu0
  %v449 = vadd.f32 0.0, %v448
  %450 = vmatprep.mubr.f32.mxu0 0.0
  %451 = vmatmul.mubr.f32.gmra.mrb[0].mxu0 %v360
  %v452 = vpop.f32.mrb[0].mxu0
  %v453 = vadd.f32 0.0, %v452
  %v454 = vpop.f32.mrb[0].mxu0
  %v455 = vadd.f32 0.0, %v454
  %456 = vmatprep.mubr.f32.mxu0 0.0
  %457 = vmatmul.mubr.f32.gmra.mrb[0].mxu0 %v363
  %v458 = vpop.f32.mrb[0].mxu0
  %v459 = vadd.f32 0.0, %v458
  %v460 = vpop.f32.mrb[0].mxu0
  %v461 = vadd.f32 0.0, %v460
  %462 = vmatprep.mubr.f32.mxu0 0.0
  %463 = vmatmul.mubr.f32.gmra.mrb[0].mxu0 %v366
  %v464 = vpop.f32.mrb[0].mxu0
  %v465 = vadd.f32 0.0, %v464
  %v466 = vpop.f32.mrb[0].mxu0
  %v467 = vadd.f32 0.0, %v466
  %468 = vmatprep.mubr.f32.mxu0 0.0
  %469 = vmatmul.mubr.f32.gmra.mrb[0].mxu0 %v369
  %v470 = vpop.f32.mrb[0].mxu0
  %v471 = vadd.f32 0.0, %v470
  %v472 = vpop.f32.mrb[0].mxu0
  %v473 = vadd.f32 0.0, %v472
  %474 = vmatprep.mubr.f32.mxu0 0.0
  %475 = vmatmul.mubr.f32.gmra.mrb[0].mxu0 %v372
  %v476 = vpop.f32.mrb[0].mxu0
  %v477 = vadd.f32 0.0, %v476
  %v478 = vpop.f32.mrb[0].mxu0
  %v479 = vadd.f32 0.0, %v478
  %480 = vmatprep.mubr.f32.mxu0 0.0
  %481 = vmatmul.mubr.f32.gmra.mrb[0].mxu0 %v375
  %v482 = vpop.f32.mrb[0].mxu0
  %v483 = vadd.f32 0.0, %v482
  %v484 = vpop.f32.mrb[0].mxu0
  %v485 = vadd.f32 0.0, %v484
  %486 = vmatprep.mubr.f32.mxu0 0.0
  %487 = vmatmul.mubr.f32.gmra.mrb[0].mxu0 %v378
  %v488 = vpop.f32.mrb[0].mxu0
  %v489 = vadd.f32 0.0, %v488
  %v490 = vpop.f32.mrb[0].mxu0
  %v491 = vadd.f32 0.0, %v490
  %492 = vdwg.mxu0
  %v494 = vsel %vm79, %v55, 0
  %v497 = vsel %vm79, %v56, 0
  %v500 = vsel %vm79, %v57, 0
  %v503 = vsel %vm79, %v58, 0
  %v506 = vsel %vm79, %v59, 0
  %v509 = vsel %vm79, %v60, 0
  %v512 = vsel %vm79, %v61, 0
  %v515 = vsel %vm79, %v62, 0
  %517 = vmatprep.subr.mxu0 %v173
  %518 = vmatpush1.msra.mxu0 %v171
  %519 = vmatprep.subr.mxu0 %v179
  %520 = vmatpush1.msra.mxu0 %v177
  %521 = vmatprep.subr.mxu0 %v185
  %522 = vmatpush1.msra.mxu0 %v183
  %523 = vmatprep.subr.mxu0 %v191
  %524 = vmatpush1.msra.mxu0 %v189
  %525 = vmatprep.subr.mxu0 %v197
  %526 = vmatpush1.msra.mxu0 %v195
  %527 = vmatprep.subr.mxu0 %v203
  %528 = vmatpush1.msra.mxu0 %v201
  %529 = vmatprep.subr.mxu0 %v209
  %530 = vmatpush1.msra.mxu0 %v207
  %531 = vmatprep.subr.mxu0 %v215
  %532 = vmatpush1.msra.mxu0 %v213
  %533 = vmatprep.subr.mxu0 0.0
  %534 = vmatpush1.msra.mxu0 0.0
  %535 = vmatprep.subr.mxu0 0.0
  %536 = vmatpush1.msra.mxu0 0.0
  %537 = vmatprep.subr.mxu0 0.0
  %538 = vmatpush1.msra.mxu0 0.0
  %539 = vmatprep.subr.mxu0 0.0
  %540 = vmatpush1.msra.mxu0 0.0
  %541 = vmatprep.subr.mxu0 0.0
  %542 = vmatpush1.msra.mxu0 0.0
  %543 = vmatprep.subr.mxu0 0.0
  %544 = vmatpush1.msra.mxu0 0.0
  %545 = vmatprep.subr.mxu0 0.0
  %546 = vmatpush1.msra.mxu0 0.0
  %547 = vmatprep.subr.mxu0 0.0
  %548 = vmatpush1.msra.mxu0 0.0
  %549 = vmatprep.subr.mxu0 0.0
  %550 = vmatpush1.msra.mxu0 0.0
  %551 = vmatprep.subr.mxu0 0.0
  %552 = vmatpush1.msra.mxu0 0.0
  %553 = vmatprep.subr.mxu0 0.0
  %554 = vmatpush1.msra.mxu0 0.0
  %555 = vmatprep.subr.mxu0 0.0
  %556 = vmatpush1.msra.mxu0 0.0
  %557 = vmatprep.subr.mxu0 0.0
  %558 = vmatpush1.msra.mxu0 0.0
  %559 = vmatprep.subr.mxu0 0.0
  %560 = vmatpush1.msra.mxu0 0.0
  %561 = vmatprep.subr.mxu0 0.0
  %562 = vmatpush1.msra.mxu0 0.0
  %563 = vmatprep.subr.mxu0 0.0
  %564 = vmatpush1.msra.mxu0 0.0
  %565 = vmatprep.subr.mxu0 0.0
  %566 = vmatpush1.msra.mxu0 0.0
  %567 = vmatprep.subr.mxu0 0.0
  %568 = vmatpush1.msra.mxu0 0.0
  %569 = vmatprep.subr.mxu0 0.0
  %570 = vmatpush1.msra.mxu0 0.0
  %571 = vmatprep.subr.mxu0 0.0
  %572 = vmatpush1.msra.mxu0 0.0
  %573 = vmatprep.subr.mxu0 0.0
  %574 = vmatpush1.msra.mxu0 0.0
  %575 = vmatprep.subr.mxu0 0.0
  %576 = vmatpush1.msra.mxu0 0.0
  %577 = vmatprep.subr.mxu0 0.0
  %578 = vmatpush1.msra.mxu0 0.0
  %579 = vmatprep.subr.mxu0 0.0
  %580 = vmatpush1.msra.mxu0 0.0
  %581 = vmatprep.mubr.f32.mxu0 0.0
  %582 = vmatmul.mubr.f32.gmra.mrb[0].mxu0 %v494
  %v583 = vpop.f32.mrb[0].mxu0
  %v584 = vadd.f32 %v447, %v583
  %v585 = vpop.f32.mrb[0].mxu0
  %v586 = vadd.f32 %v449, %v585
  %587 = vmatprep.mubr.f32.mxu0 0.0
  %588 = vmatmul.mubr.f32.gmra.mrb[0].mxu0 %v497
  %v589 = vpop.f32.mrb[0].mxu0
  %v590 = vadd.f32 %v453, %v589
  %v591 = vpop.f32.mrb[0].mxu0
  %v592 = vadd.f32 %v455, %v591
  %593 = vmatprep.mubr.f32.mxu0 0.0
  %594 = vmatmul.mubr.f32.gmra.mrb[0].mxu0 %v500
  %v595 = vpop.f32.mrb[0].mxu0
  %v596 = vadd.f32 %v459, %v595
  %v597 = vpop.f32.mrb[0].mxu0
  %v598 = vadd.f32 %v461, %v597
  %599 = vmatprep.mubr.f32.mxu0 0.0
  %600 = vmatmul.mubr.f32.gmra.mrb[0].mxu0 %v503
  %v601 = vpop.f32.mrb[0].mxu0
  %v602 = vadd.f32 %v465, %v601
  %v603 = vpop.f32.mrb[0].mxu0
  %v604 = vadd.f32 %v467, %v603
  %605 = vmatprep.mubr.f32.mxu0 0.0
  %606 = vmatmul.mubr.f32.gmra.mrb[0].mxu0 %v506
  %v607 = vpop.f32.mrb[0].mxu0
  %v608 = vadd.f32 %v471, %v607
  %v609 = vpop.f32.mrb[0].mxu0
  %v610 = vadd.f32 %v473, %v609
  %611 = vmatprep.mubr.f32.mxu0 0.0
  %612 = vmatmul.mubr.f32.gmra.mrb[0].mxu0 %v509
  %v613 = vpop.f32.mrb[0].mxu0
  %v614 = vadd.f32 %v477, %v613
  %v615 = vpop.f32.mrb[0].mxu0
  %v616 = vadd.f32 %v479, %v615
  %617 = vmatprep.mubr.f32.mxu0 0.0
  %618 = vmatmul.mubr.f32.gmra.mrb[0].mxu0 %v512
  %v619 = vpop.f32.mrb[0].mxu0
  %v620 = vadd.f32 %v483, %v619
  %v621 = vpop.f32.mrb[0].mxu0
  %v622 = vadd.f32 %v485, %v621
  %623 = vmatprep.mubr.f32.mxu0 0.0
  %624 = vmatmul.mubr.f32.gmra.mrb[0].mxu0 %v515
  %v625 = vpop.f32.mrb[0].mxu0
  %v626 = vadd.f32 %v489, %v625
  %v627 = vpop.f32.mrb[0].mxu0
  %v628 = vadd.f32 %v491, %v627
  %629 = vdwg.mxu0
  %s630 = scalar_lea.vmem %s1, 128
  %v631 = vld [vmem:[%s630] sm:$0xff]
  %v632 = vld [vmem:[%s630 + $0x8] sm:$0xff]
  %v633 = vld [vmem:[%s630 + $0x10] sm:$0xff]
  %v634 = vld [vmem:[%s630 + $0x18] sm:$0xff]
  %v635 = vld [vmem:[%s630 + $0x20] sm:$0xff]
  %v636 = vld [vmem:[%s630 + $0x28] sm:$0xff]
  %v637 = vld [vmem:[%s630 + $0x30] sm:$0xff]
  %v638 = vld [vmem:[%s630 + $0x38] sm:$0xff]
  %s639 = scalar_lea.vmem %s2, 256
  %v640 = vld [vmem:[%s639] sm:$0xff]
  %v641 = vld [vmem:[%s639 + $0x8] sm:$0xff]
  %v642 = vld [vmem:[%s639 + $0x10] sm:$0xff]
  %v643 = vld [vmem:[%s639 + $0x18] sm:$0xff]
  %v644 = vld [vmem:[%s639 + $0x20] sm:$0xff]
  %v645 = vld [vmem:[%s639 + $0x28] sm:$0xff]
  %v646 = vld [vmem:[%s639 + $0x30] sm:$0xff]
  %v647 = vld [vmem:[%s639 + $0x38] sm:$0xff]
  %v648 = vld [vmem:[%s639 + $0x40] sm:$0xff]
  %v649 = vld [vmem:[%s639 + $0x48] sm:$0xff]
  %v650 = vld [vmem:[%s639 + $0x50] sm:$0xff]
  %v651 = vld [vmem:[%s639 + $0x58] sm:$0xff]
  %v652 = vld [vmem:[%s639 + $0x60] sm:$0xff]
  %v653 = vld [vmem:[%s639 + $0x68] sm:$0xff]
  %v654 = vld [vmem:[%s639 + $0x70] sm:$0xff]
  %v655 = vld [vmem:[%s639 + $0x78] sm:$0xff]
  %656 = vmatprep.subr.mxu0 %v641
  %657 = vmatpush1.msra.mxu0 %v640
  %658 = vmatprep.subr.mxu0 %v643
  %659 = vmatpush1.msra.mxu0 %v642
  %660 = vmatprep.subr.mxu0 %v645
  %661 = vmatpush1.msra.mxu0 %v644
  %662 = vmatprep.subr.mxu0 %v647
  %663 = vmatpush1.msra.mxu0 %v646
  %664 = vmatprep.subr.mxu0 %v649
  %665 = vmatpush1.msra.mxu0 %v648
  %666 = vmatprep.subr.mxu0 %v651
  %667 = vmatpush1.msra.mxu0 %v650
  %668 = vmatprep.subr.mxu0 %v653
  %669 = vmatpush1.msra.mxu0 %v652
  %670 = vmatprep.subr.mxu0 %v655
  %671 = vmatpush1.msra.mxu0 %v654
  %672 = vmatprep.subr.mxu0 0.0
  %673 = vmatpush1.msra.mxu0 0.0
  %674 = vmatprep.subr.mxu0 0.0
  %675 = vmatpush1.msra.mxu0 0.0
  %676 = vmatprep.subr.mxu0 0.0
  %677 = vmatpush1.msra.mxu0 0.0
  %678 = vmatprep.subr.mxu0 0.0
  %679 = vmatpush1.msra.mxu0 0.0
  %680 = vmatprep.subr.mxu0 0.0
  %681 = vmatpush1.msra.mxu0 0.0
  %682 = vmatprep.subr.mxu0 0.0
  %683 = vmatpush1.msra.mxu0 0.0
  %684 = vmatprep.subr.mxu0 0.0
  %685 = vmatpush1.msra.mxu0 0.0
  %686 = vmatprep.subr.mxu0 0.0
  %687 = vmatpush1.msra.mxu0 0.0
  %688 = vmatprep.subr.mxu0 0.0
  %689 = vmatpush1.msra.mxu0 0.0
  %690 = vmatprep.subr.mxu0 0.0
  %691 = vmatpush1.msra.mxu0 0.0
  %692 = vmatprep.subr.mxu0 0.0
  %693 = vmatpush1.msra.mxu0 0.0
  %694 = vmatprep.subr.mxu0 0.0
  %695 = vmatpush1.msra.mxu0 0.0
  %696 = vmatprep.subr.mxu0 0.0
  %697 = vmatpush1.msra.mxu0 0.0
  %698 = vmatprep.subr.mxu0 0.0
  %699 = vmatpush1.msra.mxu0 0.0
  %700 = vmatprep.subr.mxu0 0.0
  %701 = vmatpush1.msra.mxu0 0.0
  %702 = vmatprep.subr.mxu0 0.0
  %703 = vmatpush1.msra.mxu0 0.0
  %704 = vmatprep.subr.mxu0 0.0
  %705 = vmatpush1.msra.mxu0 0.0
  %706 = vmatprep.subr.mxu0 0.0
  %707 = vmatpush1.msra.mxu0 0.0
  %708 = vmatprep.subr.mxu0 0.0
  %709 = vmatpush1.msra.mxu0 0.0
  %710 = vmatprep.subr.mxu0 0.0
  %711 = vmatpush1.msra.mxu0 0.0
  %712 = vmatprep.subr.mxu0 0.0
  %713 = vmatpush1.msra.mxu0 0.0
  %714 = vmatprep.subr.mxu0 0.0
  %715 = vmatpush1.msra.mxu0 0.0
  %716 = vmatprep.subr.mxu0 0.0
  %717 = vmatpush1.msra.mxu0 0.0
  %718 = vmatprep.subr.mxu0 0.0
  %719 = vmatpush1.msra.mxu0 0.0
  %720 = vmatprep.mubr.f32.mxu0 0.0
  %721 = vmatmul.mubr.f32.gmra.mrb[0].mxu0 %v81
  %v722 = vpop.f32.mrb[0].mxu0
  %v723 = vadd.f32 0.0, %v722
  %v724 = vpop.f32.mrb[0].mxu0
  %v725 = vadd.f32 0.0, %v724
  %726 = vmatprep.mubr.f32.mxu0 0.0
  %727 = vmatmul.mubr.f32.gmra.mrb[0].mxu0 %v84
  %v728 = vpop.f32.mrb[0].mxu0
  %v729 = vadd.f32 0.0, %v728
  %v730 = vpop.f32.mrb[0].mxu0
  %v731 = vadd.f32 0.0, %v730
  %732 = vmatprep.mubr.f32.mxu0 0.0
  %733 = vmatmul.mubr.f32.gmra.mrb[0].mxu0 %v87
  %v734 = vpop.f32.mrb[0].mxu0
  %v735 = vadd.f32 0.0, %v734
  %v736 = vpop.f32.mrb[0].mxu0
  %v737 = vadd.f32 0.0, %v736
  %738 = vmatprep.mubr.f32.mxu0 0.0
  %739 = vmatmul.mubr.f32.gmra.mrb[0].mxu0 %v90
  %v740 = vpop.f32.mrb[0].mxu0
  %v741 = vadd.f32 0.0, %v740
  %v742 = vpop.f32.mrb[0].mxu0
  %v743 = vadd.f32 0.0, %v742
  %744 = vmatprep.mubr.f32.mxu0 0.0
  %745 = vmatmul.mubr.f32.gmra.mrb[0].mxu0 %v93
  %v746 = vpop.f32.mrb[0].mxu0
  %v747 = vadd.f32 0.0, %v746
  %v748 = vpop.f32.mrb[0].mxu0
  %v749 = vadd.f32 0.0, %v748
  %750 = vmatprep.mubr.f32.mxu0 0.0
  %751 = vmatmul.mubr.f32.gmra.mrb[0].mxu0 %v96
  %v752 = vpop.f32.mrb[0].mxu0
  %v753 = vadd.f32 0.0, %v752
  %v754 = vpop.f32.mrb[0].mxu0
  %v755 = vadd.f32 0.0, %v754
  %756 = vmatprep.mubr.f32.mxu0 0.0
  %757 = vmatmul.mubr.f32.gmra.mrb[0].mxu0 %v99
  %v758 = vpop.f32.mrb[0].mxu0
  %v759 = vadd.f32 0.0, %v758
  %v760 = vpop.f32.mrb[0].mxu0
  %v761 = vadd.f32 0.0, %v760
  %762 = vmatprep.mubr.f32.mxu0 0.0
  %763 = vmatmul.mubr.f32.gmra.mrb[0].mxu0 %v102
  %v764 = vpop.f32.mrb[0].mxu0
  %v765 = vadd.f32 0.0, %v764
  %v766 = vpop.f32.mrb[0].mxu0
  %v767 = vadd.f32 0.0, %v766
  %768 = vdwg.mxu0
  %v770 = vsel %vm79, %v631, 0
  %v773 = vsel %vm79, %v632, 0
  %v776 = vsel %vm79, %v633, 0
  %v779 = vsel %vm79, %v634, 0
  %v782 = vsel %vm79, %v635, 0
  %v785 = vsel %vm79, %v636, 0
  %v788 = vsel %vm79, %v637, 0
  %v791 = vsel %vm79, %v638, 0
  %793 = vmatprep.subr.mxu0 %v725
  %794 = vmatpush1.msra.mxu0 %v723
  %795 = vmatprep.subr.mxu0 %v731
  %796 = vmatpush1.msra.mxu0 %v729
  %797 = vmatprep.subr.mxu0 %v737
  %798 = vmatpush1.msra.mxu0 %v735
  %799 = vmatprep.subr.mxu0 %v743
  %800 = vmatpush1.msra.mxu0 %v741
  %801 = vmatprep.subr.mxu0 %v749
  %802 = vmatpush1.msra.mxu0 %v747
  %803 = vmatprep.subr.mxu0 %v755
  %804 = vmatpush1.msra.mxu0 %v753
  %805 = vmatprep.subr.mxu0 %v761
  %806 = vmatpush1.msra.mxu0 %v759
  %807 = vmatprep.subr.mxu0 %v767
  %808 = vmatpush1.msra.mxu0 %v765
  %809 = vmatprep.subr.mxu0 0.0
  %810 = vmatpush1.msra.mxu0 0.0
  %811 = vmatprep.subr.mxu0 0.0
  %812 = vmatpush1.msra.mxu0 0.0
  %813 = vmatprep.subr.mxu0 0.0
  %814 = vmatpush1.msra.mxu0 0.0
  %815 = vmatprep.subr.mxu0 0.0
  %816 = vmatpush1.msra.mxu0 0.0
  %817 = vmatprep.subr.mxu0 0.0
  %818 = vmatpush1.msra.mxu0 0.0
  %819 = vmatprep.subr.mxu0 0.0
  %820 = vmatpush1.msra.mxu0 0.0
  %821 = vmatprep.subr.mxu0 0.0
  %822 = vmatpush1.msra.mxu0 0.0
  %823 = vmatprep.subr.mxu0 0.0
  %824 = vmatpush1.msra.mxu0 0.0
  %825 = vmatprep.subr.mxu0 0.0
  %826 = vmatpush1.msra.mxu0 0.0
  %827 = vmatprep.subr.mxu0 0.0
  %828 = vmatpush1.msra.mxu0 0.0
  %829 = vmatprep.subr.mxu0 0.0
  %830 = vmatpush1.msra.mxu0 0.0
  %831 = vmatprep.subr.mxu0 0.0
  %832 = vmatpush1.msra.mxu0 0.0
  %833 = vmatprep.subr.mxu0 0.0
  %834 = vmatpush1.msra.mxu0 0.0
  %835 = vmatprep.subr.mxu0 0.0
  %836 = vmatpush1.msra.mxu0 0.0
  %837 = vmatprep.subr.mxu0 0.0
  %838 = vmatpush1.msra.mxu0 0.0
  %839 = vmatprep.subr.mxu0 0.0
  %840 = vmatpush1.msra.mxu0 0.0
  %841 = vmatprep.subr.mxu0 0.0
  %842 = vmatpush1.msra.mxu0 0.0
  %843 = vmatprep.subr.mxu0 0.0
  %844 = vmatpush1.msra.mxu0 0.0
  %845 = vmatprep.subr.mxu0 0.0
  %846 = vmatpush1.msra.mxu0 0.0
  %847 = vmatprep.subr.mxu0 0.0
  %848 = vmatpush1.msra.mxu0 0.0
  %849 = vmatprep.subr.mxu0 0.0
  %850 = vmatpush1.msra.mxu0 0.0
  %851 = vmatprep.subr.mxu0 0.0
  %852 = vmatpush1.msra.mxu0 0.0
  %853 = vmatprep.subr.mxu0 0.0
  %854 = vmatpush1.msra.mxu0 0.0
  %855 = vmatprep.subr.mxu0 0.0
  %856 = vmatpush1.msra.mxu0 0.0
  %857 = vmatprep.mubr.f32.mxu0 0.0
  %858 = vmatmul.mubr.f32.gmra.mrb[0].mxu0 %v770
  %v859 = vpop.f32.mrb[0].mxu0
  %v860 = vadd.f32 0.0, %v859
  %v861 = vpop.f32.mrb[0].mxu0
  %v862 = vadd.f32 0.0, %v861
  %863 = vmatprep.mubr.f32.mxu0 0.0
  %864 = vmatmul.mubr.f32.gmra.mrb[0].mxu0 %v773
  %v865 = vpop.f32.mrb[0].mxu0
  %v866 = vadd.f32 0.0, %v865
  %v867 = vpop.f32.mrb[0].mxu0
  %v868 = vadd.f32 0.0, %v867
  %869 = vmatprep.mubr.f32.mxu0 0.0
  %870 = vmatmul.mubr.f32.gmra.mrb[0].mxu0 %v776
  %v871 = vpop.f32.mrb[0].mxu0
  %v872 = vadd.f32 0.0, %v871
  %v873 = vpop.f32.mrb[0].mxu0
  %v874 = vadd.f32 0.0, %v873
  %875 = vmatprep.mubr.f32.mxu0 0.0
  %876 = vmatmul.mubr.f32.gmra.mrb[0].mxu0 %v779
  %v877 = vpop.f32.mrb[0].mxu0
  %v878 = vadd.f32 0.0, %v877
  %v879 = vpop.f32.mrb[0].mxu0
  %v880 = vadd.f32 0.0, %v879
  %881 = vmatprep.mubr.f32.mxu0 0.0
  %882 = vmatmul.mubr.f32.gmra.mrb[0].mxu0 %v782
  %v883 = vpop.f32.mrb[0].mxu0
  %v884 = vadd.f32 0.0, %v883
  %v885 = vpop.f32.mrb[0].mxu0
  %v886 = vadd.f32 0.0, %v885
  %887 = vmatprep.mubr.f32.mxu0 0.0
  %888 = vmatmul.mubr.f32.gmra.mrb[0].mxu0 %v785
  %v889 = vpop.f32.mrb[0].mxu0
  %v890 = vadd.f32 0.0, %v889
  %v891 = vpop.f32.mrb[0].mxu0
  %v892 = vadd.f32 0.0, %v891
  %893 = vmatprep.mubr.f32.mxu0 0.0
  %894 = vmatmul.mubr.f32.gmra.mrb[0].mxu0 %v788
  %v895 = vpop.f32.mrb[0].mxu0
  %v896 = vadd.f32 0.0, %v895
  %v897 = vpop.f32.mrb[0].mxu0
  %v898 = vadd.f32 0.0, %v897
  %899 = vmatprep.mubr.f32.mxu0 0.0
  %900 = vmatmul.mubr.f32.gmra.mrb[0].mxu0 %v791
  %v901 = vpop.f32.mrb[0].mxu0
  %v902 = vadd.f32 0.0, %v901
  %v903 = vpop.f32.mrb[0].mxu0
  %v904 = vadd.f32 0.0, %v903
  %905 = vdwg.mxu0
  %v906 = vadd.f32 %v584, %v860
  %v907 = vadd.f32 %v586, %v862
  %v908 = vadd.f32 %v590, %v866
  %v909 = vadd.f32 %v592, %v868
  %v910 = vadd.f32 %v596, %v872
  %v911 = vadd.f32 %v598, %v874
  %v912 = vadd.f32 %v602, %v878
  %v913 = vadd.f32 %v604, %v880
  %v914 = vadd.f32 %v608, %v884
  %v915 = vadd.f32 %v610, %v886
  %v916 = vadd.f32 %v614, %v890
  %v917 = vadd.f32 %v616, %v892
  %v918 = vadd.f32 %v620, %v896
  %v919 = vadd.f32 %v622, %v898
  %v920 = vadd.f32 %v626, %v902
  %v921 = vadd.f32 %v628, %v904
  %v922 = vld [vmem:[%s3] sm:$0x3]
  %v924 = vlaneseq
  %v925 = vshrl.u32 %v924, 7
  %v926 = vsub.s32 0, %v925
  %v927 = vrot.slane %v922, %v926
  %v928 = vlaneseq
  %v929 = vshrl.u32 %v928, 7
  %v930 = vsub.s32 1, %v929
  %v931 = vrot.slane %v922, %v930
  %v934 = vadd.f32 %v906, %v927
  %v935 = vadd.f32 %v907, %v931
  %v936 = vadd.f32 %v908, %v927
  %v937 = vadd.f32 %v909, %v931
  %v938 = vadd.f32 %v910, %v927
  %v939 = vadd.f32 %v911, %v931
  %v940 = vadd.f32 %v912, %v927
  %v941 = vadd.f32 %v913, %v931
  %v942 = vadd.f32 %v914, %v927
  %v943 = vadd.f32 %v915, %v931
  %v944 = vadd.f32 %v916, %v927
  %v945 = vadd.f32 %v917, %v931
  %v946 = vadd.f32 %v918, %v927
  %v947 = vadd.f32 %v919, %v931
  %v948 = vadd.f32 %v920, %v927
  %v949 = vadd.f32 %v921, %v931
  %v950 = vmax.f32 %v934, 0.0
  %v951 = vmax.f32 %v935, 0.0
  %v952 = vmax.f32 %v936, 0.0
  %v953 = vmax.f32 %v937, 0.0
  %v954 = vmax.f32 %v938, 0.0
  %v955 = vmax.f32 %v939, 0.0
  %v956 = vmax.f32 %v940, 0.0
  %v957 = vmax.f32 %v941, 0.0
  %v958 = vmax.f32 %v942, 0.0
  %v959 = vmax.f32 %v943, 0.0
  %v960 = vmax.f32 %v944, 0.0
  %v961 = vmax.f32 %v945, 0.0
  %v962 = vmax.f32 %v946, 0.0
  %v963 = vmax.f32 %v947, 0.0
  %v964 = vmax.f32 %v948, 0.0
  %v965 = vmax.f32 %v949, 0.0
  %v966 = vld [vmem:[%s4] sm:$0xff]
  %v967 = vld [vmem:[%s4 + $0x8] sm:$0xff]
  %v968 = vld [vmem:[%s4 + $0x10] sm:$0xff]
  %v969 = vld [vmem:[%s4 + $0x18] sm:$0xff]
  %v971 = vsel %vm79, %v966, 0
  %v974 = vsel %vm79, %v967, 0
  %v977 = vsel %vm79, %v968, 0
  %v980 = vsel %vm79, %v969, 0
  %982 = vmatprep.subr.mxu0 %v951
  %983 = vmatpush1.msra.mxu0 %v950
  %984 = vmatprep.subr.mxu0 %v953
  %985 = vmatpush1.msra.mxu0 %v952
  %986 = vmatprep.subr.mxu0 %v955
  %987 = vmatpush1.msra.mxu0 %v954
  %988 = vmatprep.subr.mxu0 %v957
  %989 = vmatpush1.msra.mxu0 %v956
  %990 = vmatprep.subr.mxu0 %v959
  %991 = vmatpush1.msra.mxu0 %v958
  %992 = vmatprep.subr.mxu0 %v961
  %993 = vmatpush1.msra.mxu0 %v960
  %994 = vmatprep.subr.mxu0 %v963
  %995 = vmatpush1.msra.mxu0 %v962
  %996 = vmatprep.subr.mxu0 %v965
  %997 = vmatpush1.msra.mxu0 %v964
  %998 = vmatprep.subr.mxu0 0.0
  %999 = vmatpush1.msra.mxu0 0.0
  %1000 = vmatprep.subr.mxu0 0.0
  %1001 = vmatpush1.msra.mxu0 0.0
  %1002 = vmatprep.subr.mxu0 0.0
  %1003 = vmatpush1.msra.mxu0 0.0
  %1004 = vmatprep.subr.mxu0 0.0
  %1005 = vmatpush1.msra.mxu0 0.0
  %1006 = vmatprep.subr.mxu0 0.0
  %1007 = vmatpush1.msra.mxu0 0.0
  %1008 = vmatprep.subr.mxu0 0.0
  %1009 = vmatpush1.msra.mxu0 0.0
  %1010 = vmatprep.subr.mxu0 0.0
  %1011 = vmatpush1.msra.mxu0 0.0
  %1012 = vmatprep.subr.mxu0 0.0
  %1013 = vmatpush1.msra.mxu0 0.0
  %1014 = vmatprep.subr.mxu0 0.0
  %1015 = vmatpush1.msra.mxu0 0.0
  %1016 = vmatprep.subr.mxu0 0.0
  %1017 = vmatpush1.msra.mxu0 0.0
  %1018 = vmatprep.subr.mxu0 0.0
  %1019 = vmatpush1.msra.mxu0 0.0
  %1020 = vmatprep.subr.mxu0 0.0
  %1021 = vmatpush1.msra.mxu0 0.0
  %1022 = vmatprep.subr.mxu0 0.0
  %1023 = vmatpush1.msra.mxu0 0.0
  %1024 = vmatprep.subr.mxu0 0.0
  %1025 = vmatpush1.msra.mxu0 0.0
  %1026 = vmatprep.subr.mxu0 0.0
  %1027 = vmatpush1.msra.mxu0 0.0
  %1028 = vmatprep.subr.mxu0 0.0
  %1029 = vmatpush1.msra.mxu0 0.0
  %1030 = vmatprep.subr.mxu0 0.0
  %1031 = vmatpush1.msra.mxu0 0.0
  %1032 = vmatprep.subr.mxu0 0.0
  %1033 = vmatpush1.msra.mxu0 0.0
  %1034 = vmatprep.subr.mxu0 0.0
  %1035 = vmatpush1.msra.mxu0 0.0
  %1036 = vmatprep.subr.mxu0 0.0
  %1037 = vmatpush1.msra.mxu0 0.0
  %1038 = vmatprep.subr.mxu0 0.0
  %1039 = vmatpush1.msra.mxu0 0.0
  %1040 = vmatprep.subr.mxu0 0.0
  %1041 = vmatpush1.msra.mxu0 0.0
  %1042 = vmatprep.subr.mxu0 0.0
  %1043 = vmatpush1.msra.mxu0 0.0
  %1044 = vmatprep.subr.mxu0 0.0
  %1045 = vmatpush1.msra.mxu0 0.0
  %1046 = vmatprep.mubr.f32.mxu0 0.0
  %1047 = vmatmul.mubr.f32.gmra.mrb[0].mxu0 %v971
  %v1048 = vpop.f32.mrb[0].mxu0
  %v1049 = vadd.f32 0.0, %v1048
  %v1050 = vpop.f32.mrb[0].mxu0
  %v1051 = vadd.f32 0.0, %v1050
  %1052 = vmatprep.mubr.f32.mxu0 0.0
  %1053 = vmatmul.mubr.f32.gmra.mrb[0].mxu0 %v974
  %v1054 = vpop.f32.mrb[0].mxu0
  %v1055 = vadd.f32 0.0, %v1054
  %v1056 = vpop.f32.mrb[0].mxu0
  %v1057 = vadd.f32 0.0, %v1056
  %1058 = vmatprep.mubr.f32.mxu0 0.0
  %1059 = vmatmul.mubr.f32.gmra.mrb[0].mxu0 %v977
  %v1060 = vpop.f32.mrb[0].mxu0
  %v1061 = vadd.f32 0.0, %v1060
  %v1062 = vpop.f32.mrb[0].mxu0
  %v1063 = vadd.f32 0.0, %v1062
  %1064 = vmatprep.mubr.f32.mxu0 0.0
  %1065 = vmatmul.mubr.f32.gmra.mrb[0].mxu0 %v980
  %v1066 = vpop.f32.mrb[0].mxu0
  %v1067 = vadd.f32 0.0, %v1066
  %v1068 = vpop.f32.mrb[0].mxu0
  %v1069 = vadd.f32 0.0, %v1068
  %1070 = vdwg.mxu0
  %s1071 = scalar_lea.vmem %s4, 32
  %v1072 = vld [vmem:[%s1071] sm:$0xff]
  %v1073 = vld [vmem:[%s1071 + $0x8] sm:$0xff]
  %v1074 = vld [vmem:[%s1071 + $0x10] sm:$0xff]
  %v1075 = vld [vmem:[%s1071 + $0x18] sm:$0xff]
  %v1077 = vsel %vm79, %v1072, 0
  %v1080 = vsel %vm79, %v1073, 0
  %v1083 = vsel %vm79, %v1074, 0
  %v1086 = vsel %vm79, %v1075, 0
  %1088 = vmatprep.subr.mxu0 %v951
  %1089 = vmatpush1.msra.mxu0 %v950
  %1090 = vmatprep.subr.mxu0 %v953
  %1091 = vmatpush1.msra.mxu0 %v952
  %1092 = vmatprep.subr.mxu0 %v955
  %1093 = vmatpush1.msra.mxu0 %v954
  %1094 = vmatprep.subr.mxu0 %v957
  %1095 = vmatpush1.msra.mxu0 %v956
  %1096 = vmatprep.subr.mxu0 %v959
  %1097 = vmatpush1.msra.mxu0 %v958
  %1098 = vmatprep.subr.mxu0 %v961
  %1099 = vmatpush1.msra.mxu0 %v960
  %1100 = vmatprep.subr.mxu0 %v963
  %1101 = vmatpush1.msra.mxu0 %v962
  %1102 = vmatprep.subr.mxu0 %v965
  %1103 = vmatpush1.msra.mxu0 %v964
  %1104 = vmatprep.subr.mxu0 0.0
  %1105 = vmatpush1.msra.mxu0 0.0
  %1106 = vmatprep.subr.mxu0 0.0
  %1107 = vmatpush1.msra.mxu0 0.0
  %1108 = vmatprep.subr.mxu0 0.0
  %1109 = vmatpush1.msra.mxu0 0.0
  %1110 = vmatprep.subr.mxu0 0.0
  %1111 = vmatpush1.msra.mxu0 0.0
  %1112 = vmatprep.subr.mxu0 0.0
  %1113 = vmatpush1.msra.mxu0 0.0
  %1114 = vmatprep.subr.mxu0 0.0
  %1115 = vmatpush1.msra.mxu0 0.0
  %1116 = vmatprep.subr.mxu0 0.0
  %1117 = vmatpush1.msra.mxu0 0.0
  %1118 = vmatprep.subr.mxu0 0.0
  %1119 = vmatpush1.msra.mxu0 0.0
  %1120 = vmatprep.subr.mxu0 0.0
  %1121 = vmatpush1.msra.mxu0 0.0
  %1122 = vmatprep.subr.mxu0 0.0
  %1123 = vmatpush1.msra.mxu0 0.0
  %1124 = vmatprep.subr.mxu0 0.0
  %1125 = vmatpush1.msra.mxu0 0.0
  %1126 = vmatprep.subr.mxu0 0.0
  %1127 = vmatpush1.msra.mxu0 0.0
  %1128 = vmatprep.subr.mxu0 0.0
  %1129 = vmatpush1.msra.mxu0 0.0
  %1130 = vmatprep.subr.mxu0 0.0
  %1131 = vmatpush1.msra.mxu0 0.0
  %1132 = vmatprep.subr.mxu0 0.0
  %1133 = vmatpush1.msra.mxu0 0.0
  %1134 = vmatprep.subr.mxu0 0.0
  %1135 = vmatpush1.msra.mxu0 0.0
  %1136 = vmatprep.subr.mxu0 0.0
  %1137 = vmatpush1.msra.mxu0 0.0
  %1138 = vmatprep.subr.mxu0 0.0
  %1139 = vmatpush1.msra.mxu0 0.0
  %1140 = vmatprep.subr.mxu0 0.0
  %1141 = vmatpush1.msra.mxu0 0.0
  %1142 = vmatprep.subr.mxu0 0.0
  %1143 = vmatpush1.msra.mxu0 0.0
  %1144 = vmatprep.subr.mxu0 0.0
  %1145 = vmatpush1.msra.mxu0 0.0
  %1146 = vmatprep.subr.mxu0 0.0
  %1147 = vmatpush1.msra.mxu0 0.0
  %1148 = vmatprep.subr.mxu0 0.0
  %1149 = vmatpush1.msra.mxu0 0.0
  %1150 = vmatprep.subr.mxu0 0.0
  %1151 = vmatpush1.msra.mxu0 0.0
  %1152 = vmatprep.mubr.f32.mxu0 0.0
  %1153 = vmatmul.mubr.f32.gmra.mrb[0].mxu0 %v1077
  %v1154 = vpop.f32.mrb[0].mxu0
  %v1155 = vadd.f32 0.0, %v1154
  %v1156 = vpop.f32.mrb[0].mxu0
  %v1157 = vadd.f32 0.0, %v1156
  %1158 = vmatprep.mubr.f32.mxu0 0.0
  %1159 = vmatmul.mubr.f32.gmra.mrb[0].mxu0 %v1080
  %v1160 = vpop.f32.mrb[0].mxu0
  %v1161 = vadd.f32 0.0, %v1160
  %v1162 = vpop.f32.mrb[0].mxu0
  %v1163 = vadd.f32 0.0, %v1162
  %1164 = vmatprep.mubr.f32.mxu0 0.0
  %1165 = vmatmul.mubr.f32.gmra.mrb[0].mxu0 %v1083
  %v1166 = vpop.f32.mrb[0].mxu0
  %v1167 = vadd.f32 0.0, %v1166
  %v1168 = vpop.f32.mrb[0].mxu0
  %v1169 = vadd.f32 0.0, %v1168
  %1170 = vmatprep.mubr.f32.mxu0 0.0
  %1171 = vmatmul.mubr.f32.gmra.mrb[0].mxu0 %v1086
  %v1172 = vpop.f32.mrb[0].mxu0
  %v1173 = vadd.f32 0.0, %v1172
  %v1174 = vpop.f32.mrb[0].mxu0
  %v1175 = vadd.f32 0.0, %v1174
  %1176 = vdwg.mxu0
  %v1177 = vmax.f32 %v1049, %v1155
  %v1178 = vmax.f32 %v1051, %v1157
  %v1179 = vmax.f32 %v1055, %v1161
  %v1180 = vmax.f32 %v1057, %v1163
  %v1181 = vmax.f32 %v1061, %v1167
  %v1182 = vmax.f32 %v1063, %v1169
  %v1183 = vmax.f32 %v1067, %v1173
  %v1184 = vmax.f32 %v1069, %v1175
  %v1185 = vld [vmem:[%s5] sm:$0xff]
  %v1186 = vld [vmem:[%s5 + $0x8] sm:$0xff]
  %v1187 = vld [vmem:[%s5 + $0x10] sm:$0xff]
  %v1188 = vld [vmem:[%s5 + $0x18] sm:$0xff]
  %v1189 = vld [vmem:[%s5 + $0x20] sm:$0xff]
  %v1190 = vld [vmem:[%s5 + $0x28] sm:$0xff]
  %v1191 = vld [vmem:[%s5 + $0x30] sm:$0xff]
  %v1192 = vld [vmem:[%s5 + $0x38] sm:$0xff]
  %v1193 = vld [vmem:[%s5 + $0x40] sm:$0xff]
  %v1194 = vld [vmem:[%s5 + $0x48] sm:$0xff]
  %v1195 = vld [vmem:[%s5 + $0x50] sm:$0xff]
  %v1196 = vld [vmem:[%s5 + $0x58] sm:$0xff]
  %v1197 = vld [vmem:[%s5 + $0x60] sm:$0xff]
  %v1198 = vld [vmem:[%s5 + $0x68] sm:$0xff]
  %v1199 = vld [vmem:[%s5 + $0x70] sm:$0xff]
  %v1200 = vld [vmem:[%s5 + $0x78] sm:$0xff]
  %v1201 = vld [vmem:[%s5 + $0x80] sm:$0xff]
  %v1202 = vld [vmem:[%s5 + $0x88] sm:$0xff]
  %v1203 = vld [vmem:[%s5 + $0x90] sm:$0xff]
  %v1204 = vld [vmem:[%s5 + $0x98] sm:$0xff]
  %v1205 = vld [vmem:[%s5 + $0xa0] sm:$0xff]
  %v1206 = vld [vmem:[%s5 + $0xa8] sm:$0xff]
  %v1207 = vld [vmem:[%s5 + $0xb0] sm:$0xff]
  %v1208 = vld [vmem:[%s5 + $0xb8] sm:$0xff]
  %v1209 = vld [vmem:[%s5 + $0xc0] sm:$0xff]
  %v1210 = vld [vmem:[%s5 + $0xc8] sm:$0xff]
  %v1211 = vld [vmem:[%s5 + $0xd0] sm:$0xff]
  %v1212 = vld [vmem:[%s5 + $0xd8] sm:$0xff]
  %v1213 = vld [vmem:[%s5 + $0xe0] sm:$0xff]
  %v1214 = vld [vmem:[%s5 + $0xe8] sm:$0xff]
  %v1215 = vld [vmem:[%s5 + $0xf0] sm:$0xff]
  %v1216 = vld [vmem:[%s5 + $0xf8] sm:$0xff]
  %1217 = vmatprep.subr.mxu0 0.0
  %1218 = vmatpush1.msra.mxu0 %v1185
  %1219 = vmatprep.subr.mxu0 0.0
  %1220 = vmatpush1.msra.mxu0 %v1186
  %1221 = vmatprep.subr.mxu0 0.0
  %1222 = vmatpush1.msra.mxu0 %v1187
  %1223 = vmatprep.subr.mxu0 0.0
  %1224 = vmatpush1.msra.mxu0 %v1188
  %1225 = vmatprep.subr.mxu0 0.0
  %1226 = vmatpush1.msra.mxu0 %v1189
  %1227 = vmatprep.subr.mxu0 0.0
  %1228 = vmatpush1.msra.mxu0 %v1190
  %1229 = vmatprep.subr.mxu0 0.0
  %1230 = vmatpush1.msra.mxu0 %v1191
  %1231 = vmatprep.subr.mxu0 0.0
  %1232 = vmatpush1.msra.mxu0 %v1192
  %1233 = vmatprep.subr.mxu0 0.0
  %1234 = vmatpush1.msra.mxu0 %v1193
  %1235 = vmatprep.subr.mxu0 0.0
  %1236 = vmatpush1.msra.mxu0 %v1194
  %1237 = vmatprep.subr.mxu0 0.0
  %1238 = vmatpush1.msra.mxu0 %v1195
  %1239 = vmatprep.subr.mxu0 0.0
  %1240 = vmatpush1.msra.mxu0 %v1196
  %1241 = vmatprep.subr.mxu0 0.0
  %1242 = vmatpush1.msra.mxu0 %v1197
  %1243 = vmatprep.subr.mxu0 0.0
  %1244 = vmatpush1.msra.mxu0 %v1198
  %1245 = vmatprep.subr.mxu0 0.0
  %1246 = vmatpush1.msra.mxu0 %v1199
  %1247 = vmatprep.subr.mxu0 0.0
  %1248 = vmatpush1.msra.mxu0 %v1200
  %1249 = vmatprep.subr.mxu0 0.0
  %1250 = vmatpush1.msra.mxu0 %v1201
  %1251 = vmatprep.subr.mxu0 0.0
  %1252 = vmatpush1.msra.mxu0 %v1202
  %1253 = vmatprep.subr.mxu0 0.0
  %1254 = vmatpush1.msra.mxu0 %v1203
  %1255 = vmatprep.subr.mxu0 0.0
  %1256 = vmatpush1.msra.mxu0 %v1204
  %1257 = vmatprep.subr.mxu0 0.0
  %1258 = vmatpush1.msra.mxu0 %v1205
  %1259 = vmatprep.subr.mxu0 0.0
  %1260 = vmatpush1.msra.mxu0 %v1206
  %1261 = vmatprep.subr.mxu0 0.0
  %1262 = vmatpush1.msra.mxu0 %v1207
  %1263 = vmatprep.subr.mxu0 0.0
  %1264 = vmatpush1.msra.mxu0 %v1208
  %1265 = vmatprep.subr.mxu0 0.0
  %1266 = vmatpush1.msra.mxu0 %v1209
  %1267 = vmatprep.subr.mxu0 0.0
  %1268 = vmatpush1.msra.mxu0 %v1210
  %1269 = vmatprep.subr.mxu0 0.0
  %1270 = vmatpush1.msra.mxu0 %v1211
  %1271 = vmatprep.subr.mxu0 0.0
  %1272 = vmatpush1.msra.mxu0 %v1212
  %1273 = vmatprep.subr.mxu0 0.0
  %1274 = vmatpush1.msra.mxu0 %v1213
  %1275 = vmatprep.subr.mxu0 0.0
  %1276 = vmatpush1.msra.mxu0 %v1214
  %1277 = vmatprep.subr.mxu0 0.0
  %1278 = vmatpush1.msra.mxu0 %v1215
  %1279 = vmatprep.subr.mxu0 0.0
  %1280 = vmatpush1.msra.mxu0 %v1216
  %1281 = vmatprep.mubr.f32.mxu0 %v1178
  %1282 = vmatmul.mubr.f32.gmra.mrb[0].mxu0 %v1177
  %v1283 = vpop.f32.mrb[0].mxu0
  %v1284 = vadd.f32 0.0, %v1283
  %v1285 = vpop.f32.mrb[0].mxu0
  %1286 = vmatprep.mubr.f32.mxu0 %v1180
  %1287 = vmatmul.mubr.f32.gmra.mrb[0].mxu0 %v1179
  %v1288 = vpop.f32.mrb[0].mxu0
  %v1289 = vadd.f32 0.0, %v1288
  %v1290 = vpop.f32.mrb[0].mxu0
  %1291 = vmatprep.mubr.f32.mxu0 %v1182
  %1292 = vmatmul.mubr.f32.gmra.mrb[0].mxu0 %v1181
  %v1293 = vpop.f32.mrb[0].mxu0
  %v1294 = vadd.f32 0.0, %v1293
  %v1295 = vpop.f32.mrb[0].mxu0
  %1296 = vmatprep.mubr.f32.mxu0 %v1184
  %1297 = vmatmul.mubr.f32.gmra.mrb[0].mxu0 %v1183
  %v1298 = vpop.f32.mrb[0].mxu0
  %v1299 = vadd.f32 0.0, %v1298
  %v1300 = vpop.f32.mrb[0].mxu0
  %1301 = vdwg.mxu0
  %s1302 = scalar_lea.vmem %s5, 256
  %v1303 = vld [vmem:[%s1302] sm:$0xff]
  %v1304 = vld [vmem:[%s1302 + $0x8] sm:$0xff]
  %v1305 = vld [vmem:[%s1302 + $0x10] sm:$0xff]
  %v1306 = vld [vmem:[%s1302 + $0x18] sm:$0xff]
  %v1307 = vld [vmem:[%s1302 + $0x20] sm:$0xff]
  %v1308 = vld [vmem:[%s1302 + $0x28] sm:$0xff]
  %v1309 = vld [vmem:[%s1302 + $0x30] sm:$0xff]
  %v1310 = vld [vmem:[%s1302 + $0x38] sm:$0xff]
  %v1311 = vld [vmem:[%s1302 + $0x40] sm:$0xff]
  %v1312 = vld [vmem:[%s1302 + $0x48] sm:$0xff]
  %v1313 = vld [vmem:[%s1302 + $0x50] sm:$0xff]
  %v1314 = vld [vmem:[%s1302 + $0x58] sm:$0xff]
  %v1315 = vld [vmem:[%s1302 + $0x60] sm:$0xff]
  %v1316 = vld [vmem:[%s1302 + $0x68] sm:$0xff]
  %v1317 = vld [vmem:[%s1302 + $0x70] sm:$0xff]
  %v1318 = vld [vmem:[%s1302 + $0x78] sm:$0xff]
  %v1319 = vld [vmem:[%s1302 + $0x80] sm:$0xff]
  %v1320 = vld [vmem:[%s1302 + $0x88] sm:$0xff]
  %v1321 = vld [vmem:[%s1302 + $0x90] sm:$0xff]
  %v1322 = vld [vmem:[%s1302 + $0x98] sm:$0xff]
  %v1323 = vld [vmem:[%s1302 + $0xa0] sm:$0xff]
  %v1324 = vld [vmem:[%s1302 + $0xa8] sm:$0xff]
  %v1325 = vld [vmem:[%s1302 + $0xb0] sm:$0xff]
  %v1326 = vld [vmem:[%s1302 + $0xb8] sm:$0xff]
  %v1327 = vld [vmem:[%s1302 + $0xc0] sm:$0xff]
  %v1328 = vld [vmem:[%s1302 + $0xc8] sm:$0xff]
  %v1329 = vld [vmem:[%s1302 + $0xd0] sm:$0xff]
  %v1330 = vld [vmem:[%s1302 + $0xd8] sm:$0xff]
  %v1331 = vld [vmem:[%s1302 + $0xe0] sm:$0xff]
  %v1332 = vld [vmem:[%s1302 + $0xe8] sm:$0xff]
  %v1333 = vld [vmem:[%s1302 + $0xf0] sm:$0xff]
  %v1334 = vld [vmem:[%s1302 + $0xf8] sm:$0xff]
  %1335 = vmatprep.subr.mxu0 0.0
  %1336 = vmatpush1.msra.mxu0 %v1303
  %1337 = vmatprep.subr.mxu0 0.0
  %1338 = vmatpush1.msra.mxu0 %v1304
  %1339 = vmatprep.subr.mxu0 0.0
  %1340 = vmatpush1.msra.mxu0 %v1305
  %1341 = vmatprep.subr.mxu0 0.0
  %1342 = vmatpush1.msra.mxu0 %v1306
  %1343 = vmatprep.subr.mxu0 0.0
  %1344 = vmatpush1.msra.mxu0 %v1307
  %1345 = vmatprep.subr.mxu0 0.0
  %1346 = vmatpush1.msra.mxu0 %v1308
  %1347 = vmatprep.subr.mxu0 0.0
  %1348 = vmatpush1.msra.mxu0 %v1309
  %1349 = vmatprep.subr.mxu0 0.0
  %1350 = vmatpush1.msra.mxu0 %v1310
  %1351 = vmatprep.subr.mxu0 0.0
  %1352 = vmatpush1.msra.mxu0 %v1311
  %1353 = vmatprep.subr.mxu0 0.0
  %1354 = vmatpush1.msra.mxu0 %v1312
  %1355 = vmatprep.subr.mxu0 0.0
  %1356 = vmatpush1.msra.mxu0 %v1313
  %1357 = vmatprep.subr.mxu0 0.0
  %1358 = vmatpush1.msra.mxu0 %v1314
  %1359 = vmatprep.subr.mxu0 0.0
  %1360 = vmatpush1.msra.mxu0 %v1315
  %1361 = vmatprep.subr.mxu0 0.0
  %1362 = vmatpush1.msra.mxu0 %v1316
  %1363 = vmatprep.subr.mxu0 0.0
  %1364 = vmatpush1.msra.mxu0 %v1317
  %1365 = vmatprep.subr.mxu0 0.0
  %1366 = vmatpush1.msra.mxu0 %v1318
  %1367 = vmatprep.subr.mxu0 0.0
  %1368 = vmatpush1.msra.mxu0 %v1319
  %1369 = vmatprep.subr.mxu0 0.0
  %1370 = vmatpush1.msra.mxu0 %v1320
  %1371 = vmatprep.subr.mxu0 0.0
  %1372 = vmatpush1.msra.mxu0 %v1321
  %1373 = vmatprep.subr.mxu0 0.0
  %1374 = vmatpush1.msra.mxu0 %v1322
  %1375 = vmatprep.subr.mxu0 0.0
  %1376 = vmatpush1.msra.mxu0 %v1323
  %1377 = vmatprep.subr.mxu0 0.0
  %1378 = vmatpush1.msra.mxu0 %v1324
  %1379 = vmatprep.subr.mxu0 0.0
  %1380 = vmatpush1.msra.mxu0 %v1325
  %1381 = vmatprep.subr.mxu0 0.0
  %1382 = vmatpush1.msra.mxu0 %v1326
  %1383 = vmatprep.subr.mxu0 0.0
  %1384 = vmatpush1.msra.mxu0 %v1327
  %1385 = vmatprep.subr.mxu0 0.0
  %1386 = vmatpush1.msra.mxu0 %v1328
  %1387 = vmatprep.subr.mxu0 0.0
  %1388 = vmatpush1.msra.mxu0 %v1329
  %1389 = vmatprep.subr.mxu0 0.0
  %1390 = vmatpush1.msra.mxu0 %v1330
  %1391 = vmatprep.subr.mxu0 0.0
  %1392 = vmatpush1.msra.mxu0 %v1331
  %1393 = vmatprep.subr.mxu0 0.0
  %1394 = vmatpush1.msra.mxu0 %v1332
  %1395 = vmatprep.subr.mxu0 0.0
  %1396 = vmatpush1.msra.mxu0 %v1333
  %1397 = vmatprep.subr.mxu0 0.0
  %1398 = vmatpush1.msra.mxu0 %v1334
  %1399 = vmatprep.mubr.f32.mxu0 %v1178
  %1400 = vmatmul.mubr.f32.gmra.mrb[0].mxu0 %v1177
  %v1401 = vpop.f32.mrb[0].mxu0
  %v1402 = vadd.f32 0.0, %v1401
  %v1403 = vpop.f32.mrb[0].mxu0
  %1404 = vmatprep.mubr.f32.mxu0 %v1180
  %1405 = vmatmul.mubr.f32.gmra.mrb[0].mxu0 %v1179
  %v1406 = vpop.f32.mrb[0].mxu0
  %v1407 = vadd.f32 0.0, %v1406
  %v1408 = vpop.f32.mrb[0].mxu0
  %1409 = vmatprep.mubr.f32.mxu0 %v1182
  %1410 = vmatmul.mubr.f32.gmra.mrb[0].mxu0 %v1181
  %v1411 = vpop.f32.mrb[0].mxu0
  %v1412 = vadd.f32 0.0, %v1411
  %v1413 = vpop.f32.mrb[0].mxu0
  %1414 = vmatprep.mubr.f32.mxu0 %v1184
  %1415 = vmatmul.mubr.f32.gmra.mrb[0].mxu0 %v1183
  %v1416 = vpop.f32.mrb[0].mxu0
  %v1417 = vadd.f32 0.0, %v1416
  %v1418 = vpop.f32.mrb[0].mxu0
  %1419 = vdwg.mxu0
  %v1420 = vmax.f32 %v1284, %v1402
  %v1421 = vmax.f32 %v1289, %v1407
  %v1422 = vmax.f32 %v1294, %v1412
  %v1423 = vmax.f32 %v1299, %v1417
  %v1424 = vld [vmem:[%s6] sm:$0xff]
  %v1425 = vld [vmem:[%s6 + $0x8] sm:$0xff]
  %v1426 = vld [vmem:[%s6 + $0x10] sm:$0xff]
  %v1427 = vld [vmem:[%s6 + $0x18] sm:$0xff]
  %v1428 = vld [vmem:[%s7] sm:$0xff]
  %v1429 = vld [vmem:[%s7 + $0x8] sm:$0xff]
  %v1430 = vld [vmem:[%s7 + $0x10] sm:$0xff]
  %v1431 = vld [vmem:[%s7 + $0x18] sm:$0xff]
  %v1432 = vld [vmem:[%s7 + $0x20] sm:$0xff]
  %v1433 = vld [vmem:[%s7 + $0x28] sm:$0xff]
  %v1434 = vld [vmem:[%s7 + $0x30] sm:$0xff]
  %v1435 = vld [vmem:[%s7 + $0x38] sm:$0xff]
  %v1436 = vld [vmem:[%s7 + $0x40] sm:$0xff]
  %v1437 = vld [vmem:[%s7 + $0x48] sm:$0xff]
  %v1438 = vld [vmem:[%s7 + $0x50] sm:$0xff]
  %v1439 = vld [vmem:[%s7 + $0x58] sm:$0xff]
  %v1440 = vld [vmem:[%s7 + $0x60] sm:$0xff]
  %v1441 = vld [vmem:[%s7 + $0x68] sm:$0xff]
  %v1442 = vld [vmem:[%s7 + $0x70] sm:$0xff]
  %v1443 = vld [vmem:[%s7 + $0x78] sm:$0xff]
  %v1444 = vld [vmem:[%s7 + $0x80] sm:$0xff]
  %v1445 = vld [vmem:[%s7 + $0x88] sm:$0xff]
  %v1446 = vld [vmem:[%s7 + $0x90] sm:$0xff]
  %v1447 = vld [vmem:[%s7 + $0x98] sm:$0xff]
  %v1448 = vld [vmem:[%s7 + $0xa0] sm:$0xff]
  %v1449 = vld [vmem:[%s7 + $0xa8] sm:$0xff]
  %v1450 = vld [vmem:[%s7 + $0xb0] sm:$0xff]
  %v1451 = vld [vmem:[%s7 + $0xb8] sm:$0xff]
  %v1452 = vld [vmem:[%s7 + $0xc0] sm:$0xff]
  %v1453 = vld [vmem:[%s7 + $0xc8] sm:$0xff]
  %v1454 = vld [vmem:[%s7 + $0xd0] sm:$0xff]
  %v1455 = vld [vmem:[%s7 + $0xd8] sm:$0xff]
  %v1456 = vld [vmem:[%s7 + $0xe0] sm:$0xff]
  %v1457 = vld [vmem:[%s7 + $0xe8] sm:$0xff]
  %v1458 = vld [vmem:[%s7 + $0xf0] sm:$0xff]
  %v1459 = vld [vmem:[%s7 + $0xf8] sm:$0xff]
  %1460 = vmatprep.subr.mxu0 %v1429
  %1461 = vmatpush1.msra.mxu0 %v1428
  %1462 = vmatprep.subr.mxu0 %v1431
  %1463 = vmatpush1.msra.mxu0 %v1430
  %1464 = vmatprep.subr.mxu0 %v1433
  %1465 = vmatpush1.msra.mxu0 %v1432
  %1466 = vmatprep.subr.mxu0 %v1435
  %1467 = vmatpush1.msra.mxu0 %v1434
  %1468 = vmatprep.subr.mxu0 %v1437
  %1469 = vmatpush1.msra.mxu0 %v1436
  %1470 = vmatprep.subr.mxu0 %v1439
  %1471 = vmatpush1.msra.mxu0 %v1438
  %1472 = vmatprep.subr.mxu0 %v1441
  %1473 = vmatpush1.msra.mxu0 %v1440
  %1474 = vmatprep.subr.mxu0 %v1443
  %1475 = vmatpush1.msra.mxu0 %v1442
  %1476 = vmatprep.subr.mxu0 %v1445
  %1477 = vmatpush1.msra.mxu0 %v1444
  %1478 = vmatprep.subr.mxu0 %v1447
  %1479 = vmatpush1.msra.mxu0 %v1446
  %1480 = vmatprep.subr.mxu0 %v1449
  %1481 = vmatpush1.msra.mxu0 %v1448
  %1482 = vmatprep.subr.mxu0 %v1451
  %1483 = vmatpush1.msra.mxu0 %v1450
  %1484 = vmatprep.subr.mxu0 %v1453
  %1485 = vmatpush1.msra.mxu0 %v1452
  %1486 = vmatprep.subr.mxu0 %v1455
  %1487 = vmatpush1.msra.mxu0 %v1454
  %1488 = vmatprep.subr.mxu0 %v1457
  %1489 = vmatpush1.msra.mxu0 %v1456
  %1490 = vmatprep.subr.mxu0 %v1459
  %1491 = vmatpush1.msra.mxu0 %v1458
  %1492 = vmatprep.subr.mxu0 0.0
  %1493 = vmatpush1.msra.mxu0 0.0
  %1494 = vmatprep.subr.mxu0 0.0
  %1495 = vmatpush1.msra.mxu0 0.0
  %1496 = vmatprep.subr.mxu0 0.0
  %1497 = vmatpush1.msra.mxu0 0.0
  %1498 = vmatprep.subr.mxu0 0.0
  %1499 = vmatpush1.msra.mxu0 0.0
  %1500 = vmatprep.subr.mxu0 0.0
  %1501 = vmatpush1.msra.mxu0 0.0
  %1502 = vmatprep.subr.mxu0 0.0
  %1503 = vmatpush1.msra.mxu0 0.0
  %1504 = vmatprep.subr.mxu0 0.0
  %1505 = vmatpush1.msra.mxu0 0.0
  %1506 = vmatprep.subr.mxu0 0.0
  %1507 = vmatpush1.msra.mxu0 0.0
  %1508 = vmatprep.subr.mxu0 0.0
  %1509 = vmatpush1.msra.mxu0 0.0
  %1510 = vmatprep.subr.mxu0 0.0
  %1511 = vmatpush1.msra.mxu0 0.0
  %1512 = vmatprep.subr.mxu0 0.0
  %1513 = vmatpush1.msra.mxu0 0.0
  %1514 = vmatprep.subr.mxu0 0.0
  %1515 = vmatpush1.msra.mxu0 0.0
  %1516 = vmatprep.subr.mxu0 0.0
  %1517 = vmatpush1.msra.mxu0 0.0
  %1518 = vmatprep.subr.mxu0 0.0
  %1519 = vmatpush1.msra.mxu0 0.0
  %1520 = vmatprep.subr.mxu0 0.0
  %1521 = vmatpush1.msra.mxu0 0.0
  %1522 = vmatprep.subr.mxu0 0.0
  %1523 = vmatpush1.msra.mxu0 0.0
  %1524 = vmatprep.mubr.f32.mxu0 0.0
  %1525 = vmatmul.mubr.f32.gmra.mrb[0].mxu0 %v1420
  %v1526 = vpop.f32.mrb[0].mxu0
  %v1527 = vadd.f32 0.0, %v1526
  %v1528 = vpop.f32.mrb[0].mxu0
  %v1529 = vadd.f32 0.0, %v1528
  %1530 = vmatprep.mubr.f32.mxu0 0.0
  %1531 = vmatmul.mubr.f32.gmra.mrb[0].mxu0 %v1421
  %v1532 = vpop.f32.mrb[0].mxu0
  %v1533 = vadd.f32 0.0, %v1532
  %v1534 = vpop.f32.mrb[0].mxu0
  %v1535 = vadd.f32 0.0, %v1534
  %1536 = vmatprep.mubr.f32.mxu0 0.0
  %1537 = vmatmul.mubr.f32.gmra.mrb[0].mxu0 %v1422
  %v1538 = vpop.f32.mrb[0].mxu0
  %v1539 = vadd.f32 0.0, %v1538
  %v1540 = vpop.f32.mrb[0].mxu0
  %v1541 = vadd.f32 0.0, %v1540
  %1542 = vmatprep.mubr.f32.mxu0 0.0
  %1543 = vmatmul.mubr.f32.gmra.mrb[0].mxu0 %v1423
  %v1544 = vpop.f32.mrb[0].mxu0
  %v1545 = vadd.f32 0.0, %v1544
  %v1546 = vpop.f32.mrb[0].mxu0
  %v1547 = vadd.f32 0.0, %v1546
  %1548 = vdwg.mxu0
  %s1549 = scalar_lea.vmem %s6, 32
  %v1550 = vld [vmem:[%s1549] sm:$0xff]
  %v1551 = vld [vmem:[%s1549 + $0x8] sm:$0xff]
  %v1552 = vld [vmem:[%s1549 + $0x10] sm:$0xff]
  %v1553 = vld [vmem:[%s1549 + $0x18] sm:$0xff]
  %s1554 = scalar_lea.vmem %s7, 256
  %v1555 = vld [vmem:[%s1554] sm:$0xff]
  %v1556 = vld [vmem:[%s1554 + $0x8] sm:$0xff]
  %v1557 = vld [vmem:[%s1554 + $0x10] sm:$0xff]
  %v1558 = vld [vmem:[%s1554 + $0x18] sm:$0xff]
  %v1559 = vld [vmem:[%s1554 + $0x20] sm:$0xff]
  %v1560 = vld [vmem:[%s1554 + $0x28] sm:$0xff]
  %v1561 = vld [vmem:[%s1554 + $0x30] sm:$0xff]
  %v1562 = vld [vmem:[%s1554 + $0x38] sm:$0xff]
  %v1563 = vld [vmem:[%s1554 + $0x40] sm:$0xff]
  %v1564 = vld [vmem:[%s1554 + $0x48] sm:$0xff]
  %v1565 = vld [vmem:[%s1554 + $0x50] sm:$0xff]
  %v1566 = vld [vmem:[%s1554 + $0x58] sm:$0xff]
  %v1567 = vld [vmem:[%s1554 + $0x60] sm:$0xff]
  %v1568 = vld [vmem:[%s1554 + $0x68] sm:$0xff]
  %v1569 = vld [vmem:[%s1554 + $0x70] sm:$0xff]
  %v1570 = vld [vmem:[%s1554 + $0x78] sm:$0xff]
  %v1571 = vld [vmem:[%s1554 + $0x80] sm:$0xff]
  %v1572 = vld [vmem:[%s1554 + $0x88] sm:$0xff]
  %v1573 = vld [vmem:[%s1554 + $0x90] sm:$0xff]
  %v1574 = vld [vmem:[%s1554 + $0x98] sm:$0xff]
  %v1575 = vld [vmem:[%s1554 + $0xa0] sm:$0xff]
  %v1576 = vld [vmem:[%s1554 + $0xa8] sm:$0xff]
  %v1577 = vld [vmem:[%s1554 + $0xb0] sm:$0xff]
  %v1578 = vld [vmem:[%s1554 + $0xb8] sm:$0xff]
  %v1579 = vld [vmem:[%s1554 + $0xc0] sm:$0xff]
  %v1580 = vld [vmem:[%s1554 + $0xc8] sm:$0xff]
  %v1581 = vld [vmem:[%s1554 + $0xd0] sm:$0xff]
  %v1582 = vld [vmem:[%s1554 + $0xd8] sm:$0xff]
  %v1583 = vld [vmem:[%s1554 + $0xe0] sm:$0xff]
  %v1584 = vld [vmem:[%s1554 + $0xe8] sm:$0xff]
  %v1585 = vld [vmem:[%s1554 + $0xf0] sm:$0xff]
  %v1586 = vld [vmem:[%s1554 + $0xf8] sm:$0xff]
  %1587 = vmatprep.subr.mxu0 %v1556
  %1588 = vmatpush1.msra.mxu0 %v1555
  %1589 = vmatprep.subr.mxu0 %v1558
  %1590 = vmatpush1.msra.mxu0 %v1557
  %1591 = vmatprep.subr.mxu0 %v1560
  %1592 = vmatpush1.msra.mxu0 %v1559
  %1593 = vmatprep.subr.mxu0 %v1562
  %1594 = vmatpush1.msra.mxu0 %v1561
  %1595 = vmatprep.subr.mxu0 %v1564
  %1596 = vmatpush1.msra.mxu0 %v1563
  %1597 = vmatprep.subr.mxu0 %v1566
  %1598 = vmatpush1.msra.mxu0 %v1565
  %1599 = vmatprep.subr.mxu0 %v1568
  %1600 = vmatpush1.msra.mxu0 %v1567
  %1601 = vmatprep.subr.mxu0 %v1570
  %1602 = vmatpush1.msra.mxu0 %v1569
  %1603 = vmatprep.subr.mxu0 %v1572
  %1604 = vmatpush1.msra.mxu0 %v1571
  %1605 = vmatprep.subr.mxu0 %v1574
  %1606 = vmatpush1.msra.mxu0 %v1573
  %1607 = vmatprep.subr.mxu0 %v1576
  %1608 = vmatpush1.msra.mxu0 %v1575
  %1609 = vmatprep.subr.mxu0 %v1578
  %1610 = vmatpush1.msra.mxu0 %v1577
  %1611 = vmatprep.subr.mxu0 %v1580
  %1612 = vmatpush1.msra.mxu0 %v1579
  %1613 = vmatprep.subr.mxu0 %v1582
  %1614 = vmatpush1.msra.mxu0 %v1581
  %1615 = vmatprep.subr.mxu0 %v1584
  %1616 = vmatpush1.msra.mxu0 %v1583
  %1617 = vmatprep.subr.mxu0 %v1586
  %1618 = vmatpush1.msra.mxu0 %v1585
  %1619 = vmatprep.subr.mxu0 0.0
  %1620 = vmatpush1.msra.mxu0 0.0
  %1621 = vmatprep.subr.mxu0 0.0
  %1622 = vmatpush1.msra.mxu0 0.0
  %1623 = vmatprep.subr.mxu0 0.0
  %1624 = vmatpush1.msra.mxu0 0.0
  %1625 = vmatprep.subr.mxu0 0.0
  %1626 = vmatpush1.msra.mxu0 0.0
  %1627 = vmatprep.subr.mxu0 0.0
  %1628 = vmatpush1.msra.mxu0 0.0
  %1629 = vmatprep.subr.mxu0 0.0
  %1630 = vmatpush1.msra.mxu0 0.0
  %1631 = vmatprep.subr.mxu0 0.0
  %1632 = vmatpush1.msra.mxu0 0.0
  %1633 = vmatprep.subr.mxu0 0.0
  %1634 = vmatpush1.msra.mxu0 0.0
  %1635 = vmatprep.subr.mxu0 0.0
  %1636 = vmatpush1.msra.mxu0 0.0
  %1637 = vmatprep.subr.mxu0 0.0
  %1638 = vmatpush1.msra.mxu0 0.0
  %1639 = vmatprep.subr.mxu0 0.0
  %1640 = vmatpush1.msra.mxu0 0.0
  %1641 = vmatprep.subr.mxu0 0.0
  %1642 = vmatpush1.msra.mxu0 0.0
  %1643 = vmatprep.subr.mxu0 0.0
  %1644 = vmatpush1.msra.mxu0 0.0
  %1645 = vmatprep.subr.mxu0 0.0
  %1646 = vmatpush1.msra.mxu0 0.0
  %1647 = vmatprep.subr.mxu0 0.0
  %1648 = vmatpush1.msra.mxu0 0.0
  %1649 = vmatprep.subr.mxu0 0.0
  %1650 = vmatpush1.msra.mxu0 0.0
  %1651 = vmatprep.mubr.f32.mxu0 0.0
  %1652 = vmatmul.mubr.f32.gmra.mrb[0].mxu0 %v1420
  %v1653 = vpop.f32.mrb[0].mxu0
  %v1654 = vadd.f32 0.0, %v1653
  %v1655 = vpop.f32.mrb[0].mxu0
  %v1656 = vadd.f32 0.0, %v1655
  %1657 = vmatprep.mubr.f32.mxu0 0.0
  %1658 = vmatmul.mubr.f32.gmra.mrb[0].mxu0 %v1421
  %v1659 = vpop.f32.mrb[0].mxu0
  %v1660 = vadd.f32 0.0, %v1659
  %v1661 = vpop.f32.mrb[0].mxu0
  %v1662 = vadd.f32 0.0, %v1661
  %1663 = vmatprep.mubr.f32.mxu0 0.0
  %1664 = vmatmul.mubr.f32.gmra.mrb[0].mxu0 %v1422
  %v1665 = vpop.f32.mrb[0].mxu0
  %v1666 = vadd.f32 0.0, %v1665
  %v1667 = vpop.f32.mrb[0].mxu0
  %v1668 = vadd.f32 0.0, %v1667
  %1669 = vmatprep.mubr.f32.mxu0 0.0
  %1670 = vmatmul.mubr.f32.gmra.mrb[0].mxu0 %v1423
  %v1671 = vpop.f32.mrb[0].mxu0
  %v1672 = vadd.f32 0.0, %v1671
  %v1673 = vpop.f32.mrb[0].mxu0
  %v1674 = vadd.f32 0.0, %v1673
  %1675 = vdwg.mxu0
  %vm1676 = vcmask 261120
  %v1678 = vsel %vm1676, %v1550, 0
  %v1681 = vsel %vm1676, %v1551, 0
  %v1684 = vsel %vm1676, %v1552, 0
  %v1687 = vsel %vm1676, %v1553, 0
  %1689 = vmatprep.subr.mxu0 %v1656
  %1690 = vmatpush1.msra.mxu0 %v1654
  %1691 = vmatprep.subr.mxu0 %v1662
  %1692 = vmatpush1.msra.mxu0 %v1660
  %1693 = vmatprep.subr.mxu0 %v1668
  %1694 = vmatpush1.msra.mxu0 %v1666
  %1695 = vmatprep.subr.mxu0 %v1674
  %1696 = vmatpush1.msra.mxu0 %v1672
  %1697 = vmatprep.subr.mxu0 0.0
  %1698 = vmatpush1.msra.mxu0 0.0
  %1699 = vmatprep.subr.mxu0 0.0
  %1700 = vmatpush1.msra.mxu0 0.0
  %1701 = vmatprep.subr.mxu0 0.0
  %1702 = vmatpush1.msra.mxu0 0.0
  %1703 = vmatprep.subr.mxu0 0.0
  %1704 = vmatpush1.msra.mxu0 0.0
  %1705 = vmatprep.subr.mxu0 0.0
  %1706 = vmatpush1.msra.mxu0 0.0
  %1707 = vmatprep.subr.mxu0 0.0
  %1708 = vmatpush1.msra.mxu0 0.0
  %1709 = vmatprep.subr.mxu0 0.0
  %1710 = vmatpush1.msra.mxu0 0.0
  %1711 = vmatprep.subr.mxu0 0.0
  %1712 = vmatpush1.msra.mxu0 0.0
  %1713 = vmatprep.subr.mxu0 0.0
  %1714 = vmatpush1.msra.mxu0 0.0
  %1715 = vmatprep.subr.mxu0 0.0
  %1716 = vmatpush1.msra.mxu0 0.0
  %1717 = vmatprep.subr.mxu0 0.0
  %1718 = vmatpush1.msra.mxu0 0.0
  %1719 = vmatprep.subr.mxu0 0.0
  %1720 = vmatpush1.msra.mxu0 0.0
  %1721 = vmatprep.subr.mxu0 0.0
  %1722 = vmatpush1.msra.mxu0 0.0
  %1723 = vmatprep.subr.mxu0 0.0
  %1724 = vmatpush1.msra.mxu0 0.0
  %1725 = vmatprep.subr.mxu0 0.0
  %1726 = vmatpush1.msra.mxu0 0.0
  %1727 = vmatprep.subr.mxu0 0.0
  %1728 = vmatpush1.msra.mxu0 0.0
  %1729 = vmatprep.subr.mxu0 0.0
  %1730 = vmatpush1.msra.mxu0 0.0
  %1731 = vmatprep.subr.mxu0 0.0
  %1732 = vmatpush1.msra.mxu0 0.0
  %1733 = vmatprep.subr.mxu0 0.0
  %1734 = vmatpush1.msra.mxu0 0.0
  %1735 = vmatprep.subr.mxu0 0.0
  %1736 = vmatpush1.msra.mxu0 0.0
  %1737 = vmatprep.subr.mxu0 0.0
  %1738 = vmatpush1.msra.mxu0 0.0
  %1739 = vmatprep.subr.mxu0 0.0
  %1740 = vmatpush1.msra.mxu0 0.0
  %1741 = vmatprep.subr.mxu0 0.0
  %1742 = vmatpush1.msra.mxu0 0.0
  %1743 = vmatprep.subr.mxu0 0.0
  %1744 = vmatpush1.msra.mxu0 0.0
  %1745 = vmatprep.subr.mxu0 0.0
  %1746 = vmatpush1.msra.mxu0 0.0
  %1747 = vmatprep.subr.mxu0 0.0
  %1748 = vmatpush1.msra.mxu0 0.0
  %1749 = vmatprep.subr.mxu0 0.0
  %1750 = vmatpush1.msra.mxu0 0.0
  %1751 = vmatprep.subr.mxu0 0.0
  %1752 = vmatpush1.msra.mxu0 0.0
  %1753 = vmatprep.mubr.f32.mxu0 0.0
  %1754 = vmatmul.mubr.f32.gmra.mrb[0].mxu0 %v1678
  %v1755 = vpop.f32.mrb[0].mxu0
  %v1756 = vadd.f32 0.0, %v1755
  %v1757 = vpop.f32.mrb[0].mxu0
  %v1758 = vadd.f32 0.0, %v1757
  %1759 = vmatprep.mubr.f32.mxu0 0.0
  %1760 = vmatmul.mubr.f32.gmra.mrb[0].mxu0 %v1681
  %v1761 = vpop.f32.mrb[0].mxu0
  %v1762 = vadd.f32 0.0, %v1761
  %v1763 = vpop.f32.mrb[0].mxu0
  %v1764 = vadd.f32 0.0, %v1763
  %1765 = vmatprep.mubr.f32.mxu0 0.0
  %1766 = vmatmul.mubr.f32.gmra.mrb[0].mxu0 %v1684
  %v1767 = vpop.f32.mrb[0].mxu0
  %v1768 = vadd.f32 0.0, %v1767
  %v1769 = vpop.f32.mrb[0].mxu0
  %v1770 = vadd.f32 0.0, %v1769
  %1771 = vmatprep.mubr.f32.mxu0 0.0
  %1772 = vmatmul.mubr.f32.gmra.mrb[0].mxu0 %v1687
  %v1773 = vpop.f32.mrb[0].mxu0
  %v1774 = vadd.f32 0.0, %v1773
  %v1775 = vpop.f32.mrb[0].mxu0
  %v1776 = vadd.f32 0.0, %v1775
  %1777 = vdwg.mxu0
  %v1779 = vsel %vm1676, %v1424, 0
  %v1782 = vsel %vm1676, %v1425, 0
  %v1785 = vsel %vm1676, %v1426, 0
  %v1788 = vsel %vm1676, %v1427, 0
  %1790 = vmatprep.subr.mxu0 %v1529
  %1791 = vmatpush1.msra.mxu0 %v1527
  %1792 = vmatprep.subr.mxu0 %v1535
  %1793 = vmatpush1.msra.mxu0 %v1533
  %1794 = vmatprep.subr.mxu0 %v1541
  %1795 = vmatpush1.msra.mxu0 %v1539
  %1796 = vmatprep.subr.mxu0 %v1547
  %1797 = vmatpush1.msra.mxu0 %v1545
  %1798 = vmatprep.subr.mxu0 0.0
  %1799 = vmatpush1.msra.mxu0 0.0
  %1800 = vmatprep.subr.mxu0 0.0
  %1801 = vmatpush1.msra.mxu0 0.0
  %1802 = vmatprep.subr.mxu0 0.0
  %1803 = vmatpush1.msra.mxu0 0.0
  %1804 = vmatprep.subr.mxu0 0.0
  %1805 = vmatpush1.msra.mxu0 0.0
  %1806 = vmatprep.subr.mxu0 0.0
  %1807 = vmatpush1.msra.mxu0 0.0
  %1808 = vmatprep.subr.mxu0 0.0
  %1809 = vmatpush1.msra.mxu0 0.0
  %1810 = vmatprep.subr.mxu0 0.0
  %1811 = vmatpush1.msra.mxu0 0.0
  %1812 = vmatprep.subr.mxu0 0.0
  %1813 = vmatpush1.msra.mxu0 0.0
  %1814 = vmatprep.subr.mxu0 0.0
  %1815 = vmatpush1.msra.mxu0 0.0
  %1816 = vmatprep.subr.mxu0 0.0
  %1817 = vmatpush1.msra.mxu0 0.0
  %1818 = vmatprep.subr.mxu0 0.0
  %1819 = vmatpush1.msra.mxu0 0.0
  %1820 = vmatprep.subr.mxu0 0.0
  %1821 = vmatpush1.msra.mxu0 0.0
  %1822 = vmatprep.subr.mxu0 0.0
  %1823 = vmatpush1.msra.mxu0 0.0
  %1824 = vmatprep.subr.mxu0 0.0
  %1825 = vmatpush1.msra.mxu0 0.0
  %1826 = vmatprep.subr.mxu0 0.0
  %1827 = vmatpush1.msra.mxu0 0.0
  %1828 = vmatprep.subr.mxu0 0.0
  %1829 = vmatpush1.msra.mxu0 0.0
  %1830 = vmatprep.subr.mxu0 0.0
  %1831 = vmatpush1.msra.mxu0 0.0
  %1832 = vmatprep.subr.mxu0 0.0
  %1833 = vmatpush1.msra.mxu0 0.0
  %1834 = vmatprep.subr.mxu0 0.0
  %1835 = vmatpush1.msra.mxu0 0.0
  %1836 = vmatprep.subr.mxu0 0.0
  %1837 = vmatpush1.msra.mxu0 0.0
  %1838 = vmatprep.subr.mxu0 0.0
  %1839 = vmatpush1.msra.mxu0 0.0
  %1840 = vmatprep.subr.mxu0 0.0
  %1841 = vmatpush1.msra.mxu0 0.0
  %1842 = vmatprep.subr.mxu0 0.0
  %1843 = vmatpush1.msra.mxu0 0.0
  %1844 = vmatprep.subr.mxu0 0.0
  %1845 = vmatpush1.msra.mxu0 0.0
  %1846 = vmatprep.subr.mxu0 0.0
  %1847 = vmatpush1.msra.mxu0 0.0
  %1848 = vmatprep.subr.mxu0 0.0
  %1849 = vmatpush1.msra.mxu0 0.0
  %1850 = vmatprep.subr.mxu0 0.0
  %1851 = vmatpush1.msra.mxu0 0.0
  %1852 = vmatprep.subr.mxu0 0.0
  %1853 = vmatpush1.msra.mxu0 0.0
  %1854 = vmatprep.mubr.f32.mxu0 0.0
  %1855 = vmatmul.mubr.f32.gmra.mrb[0].mxu0 %v1779
  %v1856 = vpop.f32.mrb[0].mxu0
  %v1857 = vadd.f32 %v1756, %v1856
  %v1858 = vpop.f32.mrb[0].mxu0
  %v1859 = vadd.f32 %v1758, %v1858
  %1860 = vmatprep.mubr.f32.mxu0 0.0
  %1861 = vmatmul.mubr.f32.gmra.mrb[0].mxu0 %v1782
  %v1862 = vpop.f32.mrb[0].mxu0
  %v1863 = vadd.f32 %v1762, %v1862
  %v1864 = vpop.f32.mrb[0].mxu0
  %v1865 = vadd.f32 %v1764, %v1864
  %1866 = vmatprep.mubr.f32.mxu0 0.0
  %1867 = vmatmul.mubr.f32.gmra.mrb[0].mxu0 %v1785
  %v1868 = vpop.f32.mrb[0].mxu0
  %v1869 = vadd.f32 %v1768, %v1868
  %v1870 = vpop.f32.mrb[0].mxu0
  %v1871 = vadd.f32 %v1770, %v1870
  %1872 = vmatprep.mubr.f32.mxu0 0.0
  %1873 = vmatmul.mubr.f32.gmra.mrb[0].mxu0 %v1788
  %v1874 = vpop.f32.mrb[0].mxu0
  %v1875 = vadd.f32 %v1774, %v1874
  %v1876 = vpop.f32.mrb[0].mxu0
  %v1877 = vadd.f32 %v1776, %v1876
  %1878 = vdwg.mxu0
  %s1879 = scalar_lea.vmem %s6, 64
  %v1880 = vld [vmem:[%s1879] sm:$0xff]
  %v1881 = vld [vmem:[%s1879 + $0x8] sm:$0xff]
  %v1882 = vld [vmem:[%s1879 + $0x10] sm:$0xff]
  %v1883 = vld [vmem:[%s1879 + $0x18] sm:$0xff]
  %s1884 = scalar_lea.vmem %s7, 512
  %v1885 = vld [vmem:[%s1884] sm:$0xff]
  %v1886 = vld [vmem:[%s1884 + $0x8] sm:$0xff]
  %v1887 = vld [vmem:[%s1884 + $0x10] sm:$0xff]
  %v1888 = vld [vmem:[%s1884 + $0x18] sm:$0xff]
  %v1889 = vld [vmem:[%s1884 + $0x20] sm:$0xff]
  %v1890 = vld [vmem:[%s1884 + $0x28] sm:$0xff]
  %v1891 = vld [vmem:[%s1884 + $0x30] sm:$0xff]
  %v1892 = vld [vmem:[%s1884 + $0x38] sm:$0xff]
  %v1893 = vld [vmem:[%s1884 + $0x40] sm:$0xff]
  %v1894 = vld [vmem:[%s1884 + $0x48] sm:$0xff]
  %v1895 = vld [vmem:[%s1884 + $0x50] sm:$0xff]
  %v1896 = vld [vmem:[%s1884 + $0x58] sm:$0xff]
  %v1897 = vld [vmem:[%s1884 + $0x60] sm:$0xff]
  %v1898 = vld [vmem:[%s1884 + $0x68] sm:$0xff]
  %v1899 = vld [vmem:[%s1884 + $0x70] sm:$0xff]
  %v1900 = vld [vmem:[%s1884 + $0x78] sm:$0xff]
  %v1901 = vld [vmem:[%s1884 + $0x80] sm:$0xff]
  %v1902 = vld [vmem:[%s1884 + $0x88] sm:$0xff]
  %v1903 = vld [vmem:[%s1884 + $0x90] sm:$0xff]
  %v1904 = vld [vmem:[%s1884 + $0x98] sm:$0xff]
  %v1905 = vld [vmem:[%s1884 + $0xa0] sm:$0xff]
  %v1906 = vld [vmem:[%s1884 + $0xa8] sm:$0xff]
  %v1907 = vld [vmem:[%s1884 + $0xb0] sm:$0xff]
  %v1908 = vld [vmem:[%s1884 + $0xb8] sm:$0xff]
  %v1909 = vld [vmem:[%s1884 + $0xc0] sm:$0xff]
  %v1910 = vld [vmem:[%s1884 + $0xc8] sm:$0xff]
  %v1911 = vld [vmem:[%s1884 + $0xd0] sm:$0xff]
  %v1912 = vld [vmem:[%s1884 + $0xd8] sm:$0xff]
  %v1913 = vld [vmem:[%s1884 + $0xe0] sm:$0xff]
  %v1914 = vld [vmem:[%s1884 + $0xe8] sm:$0xff]
  %v1915 = vld [vmem:[%s1884 + $0xf0] sm:$0xff]
  %v1916 = vld [vmem:[%s1884 + $0xf8] sm:$0xff]
  %1917 = vmatprep.subr.mxu0 %v1886
  %1918 = vmatpush1.msra.mxu0 %v1885
  %1919 = vmatprep.subr.mxu0 %v1888
  %1920 = vmatpush1.msra.mxu0 %v1887
  %1921 = vmatprep.subr.mxu0 %v1890
  %1922 = vmatpush1.msra.mxu0 %v1889
  %1923 = vmatprep.subr.mxu0 %v1892
  %1924 = vmatpush1.msra.mxu0 %v1891
  %1925 = vmatprep.subr.mxu0 %v1894
  %1926 = vmatpush1.msra.mxu0 %v1893
  %1927 = vmatprep.subr.mxu0 %v1896
  %1928 = vmatpush1.msra.mxu0 %v1895
  %1929 = vmatprep.subr.mxu0 %v1898
  %1930 = vmatpush1.msra.mxu0 %v1897
  %1931 = vmatprep.subr.mxu0 %v1900
  %1932 = vmatpush1.msra.mxu0 %v1899
  %1933 = vmatprep.subr.mxu0 %v1902
  %1934 = vmatpush1.msra.mxu0 %v1901
  %1935 = vmatprep.subr.mxu0 %v1904
  %1936 = vmatpush1.msra.mxu0 %v1903
  %1937 = vmatprep.subr.mxu0 %v1906
  %1938 = vmatpush1.msra.mxu0 %v1905
  %1939 = vmatprep.subr.mxu0 %v1908
  %1940 = vmatpush1.msra.mxu0 %v1907
  %1941 = vmatprep.subr.mxu0 %v1910
  %1942 = vmatpush1.msra.mxu0 %v1909
  %1943 = vmatprep.subr.mxu0 %v1912
  %1944 = vmatpush1.msra.mxu0 %v1911
  %1945 = vmatprep.subr.mxu0 %v1914
  %1946 = vmatpush1.msra.mxu0 %v1913
  %1947 = vmatprep.subr.mxu0 %v1916
  %1948 = vmatpush1.msra.mxu0 %v1915
  %1949 = vmatprep.subr.mxu0 0.0
  %1950 = vmatpush1.msra.mxu0 0.0
  %1951 = vmatprep.subr.mxu0 0.0
  %1952 = vmatpush1.msra.mxu0 0.0
  %1953 = vmatprep.subr.mxu0 0.0
  %1954 = vmatpush1.msra.mxu0 0.0
  %1955 = vmatprep.subr.mxu0 0.0
  %1956 = vmatpush1.msra.mxu0 0.0
  %1957 = vmatprep.subr.mxu0 0.0
  %1958 = vmatpush1.msra.mxu0 0.0
  %1959 = vmatprep.subr.mxu0 0.0
  %1960 = vmatpush1.msra.mxu0 0.0
  %1961 = vmatprep.subr.mxu0 0.0
  %1962 = vmatpush1.msra.mxu0 0.0
  %1963 = vmatprep.subr.mxu0 0.0
  %1964 = vmatpush1.msra.mxu0 0.0
  %1965 = vmatprep.subr.mxu0 0.0
  %1966 = vmatpush1.msra.mxu0 0.0
  %1967 = vmatprep.subr.mxu0 0.0
  %1968 = vmatpush1.msra.mxu0 0.0
  %1969 = vmatprep.subr.mxu0 0.0
  %1970 = vmatpush1.msra.mxu0 0.0
  %1971 = vmatprep.subr.mxu0 0.0
  %1972 = vmatpush1.msra.mxu0 0.0
  %1973 = vmatprep.subr.mxu0 0.0
  %1974 = vmatpush1.msra.mxu0 0.0
  %1975 = vmatprep.subr.mxu0 0.0
  %1976 = vmatpush1.msra.mxu0 0.0
  %1977 = vmatprep.subr.mxu0 0.0
  %1978 = vmatpush1.msra.mxu0 0.0
  %1979 = vmatprep.subr.mxu0 0.0
  %1980 = vmatpush1.msra.mxu0 0.0
  %1981 = vmatprep.mubr.f32.mxu0 0.0
  %1982 = vmatmul.mubr.f32.gmra.mrb[0].mxu0 %v1420
  %v1983 = vpop.f32.mrb[0].mxu0
  %v1984 = vadd.f32 0.0, %v1983
  %v1985 = vpop.f32.mrb[0].mxu0
  %v1986 = vadd.f32 0.0, %v1985
  %1987 = vmatprep.mubr.f32.mxu0 0.0
  %1988 = vmatmul.mubr.f32.gmra.mrb[0].mxu0 %v1421
  %v1989 = vpop.f32.mrb[0].mxu0
  %v1990 = vadd.f32 0.0, %v1989
  %v1991 = vpop.f32.mrb[0].mxu0
  %v1992 = vadd.f32 0.0, %v1991
  %1993 = vmatprep.mubr.f32.mxu0 0.0
  %1994 = vmatmul.mubr.f32.gmra.mrb[0].mxu0 %v1422
  %v1995 = vpop.f32.mrb[0].mxu0
  %v1996 = vadd.f32 0.0, %v1995
  %v1997 = vpop.f32.mrb[0].mxu0
  %v1998 = vadd.f32 0.0, %v1997
  %1999 = vmatprep.mubr.f32.mxu0 0.0
  %2000 = vmatmul.mubr.f32.gmra.mrb[0].mxu0 %v1423
  %v2001 = vpop.f32.mrb[0].mxu0
  %v2002 = vadd.f32 0.0, %v2001
  %v2003 = vpop.f32.mrb[0].mxu0
  %v2004 = vadd.f32 0.0, %v2003
  %2005 = vdwg.mxu0
  %v2007 = vsel %vm1676, %v1880, 0
  %v2010 = vsel %vm1676, %v1881, 0
  %v2013 = vsel %vm1676, %v1882, 0
  %v2016 = vsel %vm1676, %v1883, 0
  %2018 = vmatprep.subr.mxu0 %v1986
  %2019 = vmatpush1.msra.mxu0 %v1984
  %2020 = vmatprep.subr.mxu0 %v1992
  %2021 = vmatpush1.msra.mxu0 %v1990
  %2022 = vmatprep.subr.mxu0 %v1998
  %2023 = vmatpush1.msra.mxu0 %v1996
  %2024 = vmatprep.subr.mxu0 %v2004
  %2025 = vmatpush1.msra.mxu0 %v2002
  %2026 = vmatprep.subr.mxu0 0.0
  %2027 = vmatpush1.msra.mxu0 0.0
  %2028 = vmatprep.subr.mxu0 0.0
  %2029 = vmatpush1.msra.mxu0 0.0
  %2030 = vmatprep.subr.mxu0 0.0
  %2031 = vmatpush1.msra.mxu0 0.0
  %2032 = vmatprep.subr.mxu0 0.0
  %2033 = vmatpush1.msra.mxu0 0.0
  %2034 = vmatprep.subr.mxu0 0.0
  %2035 = vmatpush1.msra.mxu0 0.0
  %2036 = vmatprep.subr.mxu0 0.0
  %2037 = vmatpush1.msra.mxu0 0.0
  %2038 = vmatprep.subr.mxu0 0.0
  %2039 = vmatpush1.msra.mxu0 0.0
  %2040 = vmatprep.subr.mxu0 0.0
  %2041 = vmatpush1.msra.mxu0 0.0
  %2042 = vmatprep.subr.mxu0 0.0
  %2043 = vmatpush1.msra.mxu0 0.0
  %2044 = vmatprep.subr.mxu0 0.0
  %2045 = vmatpush1.msra.mxu0 0.0
  %2046 = vmatprep.subr.mxu0 0.0
  %2047 = vmatpush1.msra.mxu0 0.0
  %2048 = vmatprep.subr.mxu0 0.0
  %2049 = vmatpush1.msra.mxu0 0.0
  %2050 = vmatprep.subr.mxu0 0.0
  %2051 = vmatpush1.msra.mxu0 0.0
  %2052 = vmatprep.subr.mxu0 0.0
  %2053 = vmatpush1.msra.mxu0 0.0
  %2054 = vmatprep.subr.mxu0 0.0
  %2055 = vmatpush1.msra.mxu0 0.0
  %2056 = vmatprep.subr.mxu0 0.0
  %2057 = vmatpush1.msra.mxu0 0.0
  %2058 = vmatprep.subr.mxu0 0.0
  %2059 = vmatpush1.msra.mxu0 0.0
  %2060 = vmatprep.subr.mxu0 0.0
  %2061 = vmatpush1.msra.mxu0 0.0
  %2062 = vmatprep.subr.mxu0 0.0
  %2063 = vmatpush1.msra.mxu0 0.0
  %2064 = vmatprep.subr.mxu0 0.0
  %2065 = vmatpush1.msra.mxu0 0.0
  %2066 = vmatprep.subr.mxu0 0.0
  %2067 = vmatpush1.msra.mxu0 0.0
  %2068 = vmatprep.subr.mxu0 0.0
  %2069 = vmatpush1.msra.mxu0 0.0
  %2070 = vmatprep.subr.mxu0 0.0
  %2071 = vmatpush1.msra.mxu0 0.0
  %2072 = vmatprep.subr.mxu0 0.0
  %2073 = vmatpush1.msra.mxu0 0.0
  %2074 = vmatprep.subr.mxu0 0.0
  %2075 = vmatpush1.msra.mxu0 0.0
  %2076 = vmatprep.subr.mxu0 0.0
  %2077 = vmatpush1.msra.mxu0 0.0
  %2078 = vmatprep.subr.mxu0 0.0
  %2079 = vmatpush1.msra.mxu0 0.0
  %2080 = vmatprep.subr.mxu0 0.0
  %2081 = vmatpush1.msra.mxu0 0.0
  %2082 = vmatprep.mubr.f32.mxu0 0.0
  %2083 = vmatmul.mubr.f32.gmra.mrb[0].mxu0 %v2007
  %v2084 = vpop.f32.mrb[0].mxu0
  %v2085 = vadd.f32 0.0, %v2084
  %v2086 = vpop.f32.mrb[0].mxu0
  %v2087 = vadd.f32 0.0, %v2086
  %2088 = vmatprep.mubr.f32.mxu0 0.0
  %2089 = vmatmul.mubr.f32.gmra.mrb[0].mxu0 %v2010
  %v2090 = vpop.f32.mrb[0].mxu0
  %v2091 = vadd.f32 0.0, %v2090
  %v2092 = vpop.f32.mrb[0].mxu0
  %v2093 = vadd.f32 0.0, %v2092
  %2094 = vmatprep.mubr.f32.mxu0 0.0
  %2095 = vmatmul.mubr.f32.gmra.mrb[0].mxu0 %v2013
  %v2096 = vpop.f32.mrb[0].mxu0
  %v2097 = vadd.f32 0.0, %v2096
  %v2098 = vpop.f32.mrb[0].mxu0
  %v2099 = vadd.f32 0.0, %v2098
  %2100 = vmatprep.mubr.f32.mxu0 0.0
  %2101 = vmatmul.mubr.f32.gmra.mrb[0].mxu0 %v2016
  %v2102 = vpop.f32.mrb[0].mxu0
  %v2103 = vadd.f32 0.0, %v2102
  %v2104 = vpop.f32.mrb[0].mxu0
  %v2105 = vadd.f32 0.0, %v2104
  %2106 = vdwg.mxu0
  %v2107 = vadd.f32 %v1857, %v2085
  %v2108 = vadd.f32 %v1859, %v2087
  %v2109 = vadd.f32 %v1863, %v2091
  %v2110 = vadd.f32 %v1865, %v2093
  %v2111 = vadd.f32 %v1869, %v2097
  %v2112 = vadd.f32 %v1871, %v2099
  %v2113 = vadd.f32 %v1875, %v2103
  %v2114 = vadd.f32 %v1877, %v2105
  %v2115 = vld [vmem:[%s8] sm:$0x3]
  %v2117 = vlaneseq
  %v2118 = vshrl.u32 %v2117, 7
  %v2119 = vsub.s32 0, %v2118
  %v2120 = vrot.slane %v2115, %v2119
  %v2121 = vlaneseq
  %v2122 = vshrl.u32 %v2121, 7
  %v2123 = vsub.s32 1, %v2122
  %v2124 = vrot.slane %v2115, %v2123
  %v2127 = vadd.f32 %v2107, %v2120
  %v2128 = vadd.f32 %v2108, %v2124
  %v2129 = vadd.f32 %v2109, %v2120
  %v2130 = vadd.f32 %v2110, %v2124
  %v2131 = vadd.f32 %v2111, %v2120
  %v2132 = vadd.f32 %v2112, %v2124
  %v2133 = vadd.f32 %v2113, %v2120
  %v2134 = vadd.f32 %v2114, %v2124
  %v2135 = vmax.f32 %v2127, 0.0
  %v2136 = vmax.f32 %v2128, 0.0
  %v2137 = vmax.f32 %v2129, 0.0
  %v2138 = vmax.f32 %v2130, 0.0
  %v2139 = vmax.f32 %v2131, 0.0
  %v2140 = vmax.f32 %v2132, 0.0
  %v2141 = vmax.f32 %v2133, 0.0
  %v2142 = vmax.f32 %v2134, 0.0
  %v2143 = vld [vmem:[%s9] sm:$0xff]
  %v2144 = vld [vmem:[%s9 + $0x8] sm:$0xff]
  %v2146 = vsel %vm1676, %v2143, 0
  %v2149 = vsel %vm1676, %v2144, 0
  %2151 = vmatprep.subr.mxu0 %v2136
  %2152 = vmatpush1.msra.mxu0 %v2135
  %2153 = vmatprep.subr.mxu0 %v2138
  %2154 = vmatpush1.msra.mxu0 %v2137
  %2155 = vmatprep.subr.mxu0 %v2140
  %2156 = vmatpush1.msra.mxu0 %v2139
  %2157 = vmatprep.subr.mxu0 %v2142
  %2158 = vmatpush1.msra.mxu0 %v2141
  %2159 = vmatprep.subr.mxu0 0.0
  %2160 = vmatpush1.msra.mxu0 0.0
  %2161 = vmatprep.subr.mxu0 0.0
  %2162 = vmatpush1.msra.mxu0 0.0
  %2163 = vmatprep.subr.mxu0 0.0
  %2164 = vmatpush1.msra.mxu0 0.0
  %2165 = vmatprep.subr.mxu0 0.0
  %2166 = vmatpush1.msra.mxu0 0.0
  %2167 = vmatprep.subr.mxu0 0.0
  %2168 = vmatpush1.msra.mxu0 0.0
  %2169 = vmatprep.subr.mxu0 0.0
  %2170 = vmatpush1.msra.mxu0 0.0
  %2171 = vmatprep.subr.mxu0 0.0
  %2172 = vmatpush1.msra.mxu0 0.0
  %2173 = vmatprep.subr.mxu0 0.0
  %2174 = vmatpush1.msra.mxu0 0.0
  %2175 = vmatprep.subr.mxu0 0.0
  %2176 = vmatpush1.msra.mxu0 0.0
  %2177 = vmatprep.subr.mxu0 0.0
  %2178 = vmatpush1.msra.mxu0 0.0
  %2179 = vmatprep.subr.mxu0 0.0
  %2180 = vmatpush1.msra.mxu0 0.0
  %2181 = vmatprep.subr.mxu0 0.0
  %2182 = vmatpush1.msra.mxu0 0.0
  %2183 = vmatprep.subr.mxu0 0.0
  %2184 = vmatpush1.msra.mxu0 0.0
  %2185 = vmatprep.subr.mxu0 0.0
  %2186 = vmatpush1.msra.mxu0 0.0
  %2187 = vmatprep.subr.mxu0 0.0
  %2188 = vmatpush1.msra.mxu0 0.0
  %2189 = vmatprep.subr.mxu0 0.0
  %2190 = vmatpush1.msra.mxu0 0.0
  %2191 = vmatprep.subr.mxu0 0.0
  %2192 = vmatpush1.msra.mxu0 0.0
  %2193 = vmatprep.subr.mxu0 0.0
  %2194 = vmatpush1.msra.mxu0 0.0
  %2195 = vmatprep.subr.mxu0 0.0
  %2196 = vmatpush1.msra.mxu0 0.0
  %2197 = vmatprep.subr.mxu0 0.0
  %2198 = vmatpush1.msra.mxu0 0.0
  %2199 = vmatprep.subr.mxu0 0.0
  %2200 = vmatpush1.msra.mxu0 0.0
  %2201 = vmatprep.subr.mxu0 0.0
  %2202 = vmatpush1.msra.mxu0 0.0
  %2203 = vmatprep.subr.mxu0 0.0
  %2204 = vmatpush1.msra.mxu0 0.0
  %2205 = vmatprep.subr.mxu0 0.0
  %2206 = vmatpush1.msra.mxu0 0.0
  %2207 = vmatprep.subr.mxu0 0.0
  %2208 = vmatpush1.msra.mxu0 0.0
  %2209 = vmatprep.subr.mxu0 0.0
  %2210 = vmatpush1.msra.mxu0 0.0
  %2211 = vmatprep.subr.mxu0 0.0
  %2212 = vmatpush1.msra.mxu0 0.0
  %2213 = vmatprep.subr.mxu0 0.0
  %2214 = vmatpush1.msra.mxu0 0.0
  %2215 = vmatprep.mubr.f32.mxu0 0.0
  %2216 = vmatmul.mubr.f32.gmra.mrb[0].mxu0 %v2146
  %v2217 = vpop.f32.mrb[0].mxu0
  %v2218 = vadd.f32 0.0, %v2217
  %v2219 = vpop.f32.mrb[0].mxu0
  %v2220 = vadd.f32 0.0, %v2219
  %2221 = vmatprep.mubr.f32.mxu0 0.0
  %2222 = vmatmul.mubr.f32.gmra.mrb[0].mxu0 %v2149
  %v2223 = vpop.f32.mrb[0].mxu0
  %v2224 = vadd.f32 0.0, %v2223
  %v2225 = vpop.f32.mrb[0].mxu0
  %v2226 = vadd.f32 0.0, %v2225
  %2227 = vdwg.mxu0
  %s2228 = scalar_lea.vmem %s9, 16
  %v2229 = vld [vmem:[%s2228] sm:$0xff]
  %v2230 = vld [vmem:[%s2228 + $0x8] sm:$0xff]
  %v2232 = vsel %vm1676, %v2229, 0
  %v2235 = vsel %vm1676, %v2230, 0
  %2237 = vmatprep.subr.mxu0 %v2136
  %2238 = vmatpush1.msra.mxu0 %v2135
  %2239 = vmatprep.subr.mxu0 %v2138
  %2240 = vmatpush1.msra.mxu0 %v2137
  %2241 = vmatprep.subr.mxu0 %v2140
  %2242 = vmatpush1.msra.mxu0 %v2139
  %2243 = vmatprep.subr.mxu0 %v2142
  %2244 = vmatpush1.msra.mxu0 %v2141
  %2245 = vmatprep.subr.mxu0 0.0
  %2246 = vmatpush1.msra.mxu0 0.0
  %2247 = vmatprep.subr.mxu0 0.0
  %2248 = vmatpush1.msra.mxu0 0.0
  %2249 = vmatprep.subr.mxu0 0.0
  %2250 = vmatpush1.msra.mxu0 0.0
  %2251 = vmatprep.subr.mxu0 0.0
  %2252 = vmatpush1.msra.mxu0 0.0
  %2253 = vmatprep.subr.mxu0 0.0
  %2254 = vmatpush1.msra.mxu0 0.0
  %2255 = vmatprep.subr.mxu0 0.0
  %2256 = vmatpush1.msra.mxu0 0.0
  %2257 = vmatprep.subr.mxu0 0.0
  %2258 = vmatpush1.msra.mxu0 0.0
  %2259 = vmatprep.subr.mxu0 0.0
  %2260 = vmatpush1.msra.mxu0 0.0
  %2261 = vmatprep.subr.mxu0 0.0
  %2262 = vmatpush1.msra.mxu0 0.0
  %2263 = vmatprep.subr.mxu0 0.0
  %2264 = vmatpush1.msra.mxu0 0.0
  %2265 = vmatprep.subr.mxu0 0.0
  %2266 = vmatpush1.msra.mxu0 0.0
  %2267 = vmatprep.subr.mxu0 0.0
  %2268 = vmatpush1.msra.mxu0 0.0
  %2269 = vmatprep.subr.mxu0 0.0
  %2270 = vmatpush1.msra.mxu0 0.0
  %2271 = vmatprep.subr.mxu0 0.0
  %2272 = vmatpush1.msra.mxu0 0.0
  %2273 = vmatprep.subr.mxu0 0.0
  %2274 = vmatpush1.msra.mxu0 0.0
  %2275 = vmatprep.subr.mxu0 0.0
  %2276 = vmatpush1.msra.mxu0 0.0
  %2277 = vmatprep.subr.mxu0 0.0
  %2278 = vmatpush1.msra.mxu0 0.0
  %2279 = vmatprep.subr.mxu0 0.0
  %2280 = vmatpush1.msra.mxu0 0.0
  %2281 = vmatprep.subr.mxu0 0.0
  %2282 = vmatpush1.msra.mxu0 0.0
  %2283 = vmatprep.subr.mxu0 0.0
  %2284 = vmatpush1.msra.mxu0 0.0
  %2285 = vmatprep.subr.mxu0 0.0
  %2286 = vmatpush1.msra.mxu0 0.0
  %2287 = vmatprep.subr.mxu0 0.0
  %2288 = vmatpush1.msra.mxu0 0.0
  %2289 = vmatprep.subr.mxu0 0.0
  %2290 = vmatpush1.msra.mxu0 0.0
  %2291 = vmatprep.subr.mxu0 0.0
  %2292 = vmatpush1.msra.mxu0 0.0
  %2293 = vmatprep.subr.mxu0 0.0
  %2294 = vmatpush1.msra.mxu0 0.0
  %2295 = vmatprep.subr.mxu0 0.0
  %2296 = vmatpush1.msra.mxu0 0.0
  %2297 = vmatprep.subr.mxu0 0.0
  %2298 = vmatpush1.msra.mxu0 0.0
  %2299 = vmatprep.subr.mxu0 0.0
  %2300 = vmatpush1.msra.mxu0 0.0
  %2301 = vmatprep.mubr.f32.mxu0 0.0
  %2302 = vmatmul.mubr.f32.gmra.mrb[0].mxu0 %v2232
  %v2303 = vpop.f32.mrb[0].mxu0
  %v2304 = vadd.f32 0.0, %v2303
  %v2305 = vpop.f32.mrb[0].mxu0
  %v2306 = vadd.f32 0.0, %v2305
  %2307 = vmatprep.mubr.f32.mxu0 0.0
  %2308 = vmatmul.mubr.f32.gmra.mrb[0].mxu0 %v2235
  %v2309 = vpop.f32.mrb[0].mxu0
  %v2310 = vadd.f32 0.0, %v2309
  %v2311 = vpop.f32.mrb[0].mxu0
  %v2312 = vadd.f32 0.0, %v2311
  %2313 = vdwg.mxu0
  %v2314 = vmax.f32 %v2218, %v2304
  %v2315 = vmax.f32 %v2220, %v2306
  %v2316 = vmax.f32 %v2224, %v2310
  %v2317 = vmax.f32 %v2226, %v2312
  %v2318 = vld [vmem:[%s10] sm:$0xff]
  %v2319 = vld [vmem:[%s10 + $0x8] sm:$0xff]
  %v2320 = vld [vmem:[%s10 + $0x10] sm:$0xff]
  %v2321 = vld [vmem:[%s10 + $0x18] sm:$0xff]
  %v2322 = vld [vmem:[%s10 + $0x20] sm:$0xff]
  %v2323 = vld [vmem:[%s10 + $0x28] sm:$0xff]
  %v2324 = vld [vmem:[%s10 + $0x30] sm:$0xff]
  %v2325 = vld [vmem:[%s10 + $0x38] sm:$0xff]
  %v2326 = vld [vmem:[%s10 + $0x40] sm:$0xff]
  %v2327 = vld [vmem:[%s10 + $0x48] sm:$0xff]
  %v2328 = vld [vmem:[%s10 + $0x50] sm:$0xff]
  %v2329 = vld [vmem:[%s10 + $0x58] sm:$0xff]
  %v2330 = vld [vmem:[%s10 + $0x60] sm:$0xff]
  %v2331 = vld [vmem:[%s10 + $0x68] sm:$0xff]
  %v2332 = vld [vmem:[%s10 + $0x70] sm:$0xff]
  %v2333 = vld [vmem:[%s10 + $0x78] sm:$0xff]
  %v2334 = vld [vmem:[%s10 + $0x80] sm:$0xff]
  %v2335 = vld [vmem:[%s10 + $0x88] sm:$0xff]
  %v2336 = vld [vmem:[%s10 + $0x90] sm:$0xff]
  %v2337 = vld [vmem:[%s10 + $0x98] sm:$0xff]
  %v2338 = vld [vmem:[%s10 + $0xa0] sm:$0xff]
  %v2339 = vld [vmem:[%s10 + $0xa8] sm:$0xff]
  %v2340 = vld [vmem:[%s10 + $0xb0] sm:$0xff]
  %v2341 = vld [vmem:[%s10 + $0xb8] sm:$0xff]
  %v2342 = vld [vmem:[%s10 + $0xc0] sm:$0xff]
  %v2343 = vld [vmem:[%s10 + $0xc8] sm:$0xff]
  %v2344 = vld [vmem:[%s10 + $0xd0] sm:$0xff]
  %v2345 = vld [vmem:[%s10 + $0xd8] sm:$0xff]
  %v2346 = vld [vmem:[%s10 + $0xe0] sm:$0xff]
  %v2347 = vld [vmem:[%s10 + $0xe8] sm:$0xff]
  %v2348 = vld [vmem:[%s10 + $0xf0] sm:$0xff]
  %v2349 = vld [vmem:[%s10 + $0xf8] sm:$0xff]
  %2350 = vmatprep.subr.mxu0 0.0
  %2351 = vmatpush1.msra.mxu0 %v2318
  %2352 = vmatprep.subr.mxu0 0.0
  %2353 = vmatpush1.msra.mxu0 %v2319
  %2354 = vmatprep.subr.mxu0 0.0
  %2355 = vmatpush1.msra.mxu0 %v2320
  %2356 = vmatprep.subr.mxu0 0.0
  %2357 = vmatpush1.msra.mxu0 %v2321
  %2358 = vmatprep.subr.mxu0 0.0
  %2359 = vmatpush1.msra.mxu0 %v2322
  %2360 = vmatprep.subr.mxu0 0.0
  %2361 = vmatpush1.msra.mxu0 %v2323
  %2362 = vmatprep.subr.mxu0 0.0
  %2363 = vmatpush1.msra.mxu0 %v2324
  %2364 = vmatprep.subr.mxu0 0.0
  %2365 = vmatpush1.msra.mxu0 %v2325
  %2366 = vmatprep.subr.mxu0 0.0
  %2367 = vmatpush1.msra.mxu0 %v2326
  %2368 = vmatprep.subr.mxu0 0.0
  %2369 = vmatpush1.msra.mxu0 %v2327
  %2370 = vmatprep.subr.mxu0 0.0
  %2371 = vmatpush1.msra.mxu0 %v2328
  %2372 = vmatprep.subr.mxu0 0.0
  %2373 = vmatpush1.msra.mxu0 %v2329
  %2374 = vmatprep.subr.mxu0 0.0
  %2375 = vmatpush1.msra.mxu0 %v2330
  %2376 = vmatprep.subr.mxu0 0.0
  %2377 = vmatpush1.msra.mxu0 %v2331
  %2378 = vmatprep.subr.mxu0 0.0
  %2379 = vmatpush1.msra.mxu0 %v2332
  %2380 = vmatprep.subr.mxu0 0.0
  %2381 = vmatpush1.msra.mxu0 %v2333
  %2382 = vmatprep.subr.mxu0 0.0
  %2383 = vmatpush1.msra.mxu0 %v2334
  %2384 = vmatprep.subr.mxu0 0.0
  %2385 = vmatpush1.msra.mxu0 %v2335
  %2386 = vmatprep.subr.mxu0 0.0
  %2387 = vmatpush1.msra.mxu0 %v2336
  %2388 = vmatprep.subr.mxu0 0.0
  %2389 = vmatpush1.msra.mxu0 %v2337
  %2390 = vmatprep.subr.mxu0 0.0
  %2391 = vmatpush1.msra.mxu0 %v2338
  %2392 = vmatprep.subr.mxu0 0.0
  %2393 = vmatpush1.msra.mxu0 %v2339
  %2394 = vmatprep.subr.mxu0 0.0
  %2395 = vmatpush1.msra.mxu0 %v2340
  %2396 = vmatprep.subr.mxu0 0.0
  %2397 = vmatpush1.msra.mxu0 %v2341
  %2398 = vmatprep.subr.mxu0 0.0
  %2399 = vmatpush1.msra.mxu0 %v2342
  %2400 = vmatprep.subr.mxu0 0.0
  %2401 = vmatpush1.msra.mxu0 %v2343
  %2402 = vmatprep.subr.mxu0 0.0
  %2403 = vmatpush1.msra.mxu0 %v2344
  %2404 = vmatprep.subr.mxu0 0.0
  %2405 = vmatpush1.msra.mxu0 %v2345
  %2406 = vmatprep.subr.mxu0 0.0
  %2407 = vmatpush1.msra.mxu0 %v2346
  %2408 = vmatprep.subr.mxu0 0.0
  %2409 = vmatpush1.msra.mxu0 %v2347
  %2410 = vmatprep.subr.mxu0 0.0
  %2411 = vmatpush1.msra.mxu0 %v2348
  %2412 = vmatprep.subr.mxu0 0.0
  %2413 = vmatpush1.msra.mxu0 %v2349
  %2414 = vmatprep.mubr.f32.mxu0 %v2315
  %2415 = vmatmul.mubr.f32.gmra.mrb[0].mxu0 %v2314
  %v2416 = vpop.f32.mrb[0].mxu0
  %v2417 = vadd.f32 0.0, %v2416
  %v2418 = vpop.f32.mrb[0].mxu0
  %2419 = vmatprep.mubr.f32.mxu0 %v2317
  %2420 = vmatmul.mubr.f32.gmra.mrb[0].mxu0 %v2316
  %v2421 = vpop.f32.mrb[0].mxu0
  %v2422 = vadd.f32 0.0, %v2421
  %v2423 = vpop.f32.mrb[0].mxu0
  %2424 = vdwg.mxu0
  %s2425 = scalar_lea.vmem %s10, 256
  %v2426 = vld [vmem:[%s2425] sm:$0xff]
  %v2427 = vld [vmem:[%s2425 + $0x8] sm:$0xff]
  %v2428 = vld [vmem:[%s2425 + $0x10] sm:$0xff]
  %v2429 = vld [vmem:[%s2425 + $0x18] sm:$0xff]
  %v2430 = vld [vmem:[%s2425 + $0x20] sm:$0xff]
  %v2431 = vld [vmem:[%s2425 + $0x28] sm:$0xff]
  %v2432 = vld [vmem:[%s2425 + $0x30] sm:$0xff]
  %v2433 = vld [vmem:[%s2425 + $0x38] sm:$0xff]
  %v2434 = vld [vmem:[%s2425 + $0x40] sm:$0xff]
  %v2435 = vld [vmem:[%s2425 + $0x48] sm:$0xff]
  %v2436 = vld [vmem:[%s2425 + $0x50] sm:$0xff]
  %v2437 = vld [vmem:[%s2425 + $0x58] sm:$0xff]
  %v2438 = vld [vmem:[%s2425 + $0x60] sm:$0xff]
  %v2439 = vld [vmem:[%s2425 + $0x68] sm:$0xff]
  %v2440 = vld [vmem:[%s2425 + $0x70] sm:$0xff]
  %v2441 = vld [vmem:[%s2425 + $0x78] sm:$0xff]
  %v2442 = vld [vmem:[%s2425 + $0x80] sm:$0xff]
  %v2443 = vld [vmem:[%s2425 + $0x88] sm:$0xff]
  %v2444 = vld [vmem:[%s2425 + $0x90] sm:$0xff]
  %v2445 = vld [vmem:[%s2425 + $0x98] sm:$0xff]
  %v2446 = vld [vmem:[%s2425 + $0xa0] sm:$0xff]
  %v2447 = vld [vmem:[%s2425 + $0xa8] sm:$0xff]
  %v2448 = vld [vmem:[%s2425 + $0xb0] sm:$0xff]
  %v2449 = vld [vmem:[%s2425 + $0xb8] sm:$0xff]
  %v2450 = vld [vmem:[%s2425 + $0xc0] sm:$0xff]
  %v2451 = vld [vmem:[%s2425 + $0xc8] sm:$0xff]
  %v2452 = vld [vmem:[%s2425 + $0xd0] sm:$0xff]
  %v2453 = vld [vmem:[%s2425 + $0xd8] sm:$0xff]
  %v2454 = vld [vmem:[%s2425 + $0xe0] sm:$0xff]
  %v2455 = vld [vmem:[%s2425 + $0xe8] sm:$0xff]
  %v2456 = vld [vmem:[%s2425 + $0xf0] sm:$0xff]
  %v2457 = vld [vmem:[%s2425 + $0xf8] sm:$0xff]
  %2458 = vmatprep.subr.mxu0 0.0
  %2459 = vmatpush1.msra.mxu0 %v2426
  %2460 = vmatprep.subr.mxu0 0.0
  %2461 = vmatpush1.msra.mxu0 %v2427
  %2462 = vmatprep.subr.mxu0 0.0
  %2463 = vmatpush1.msra.mxu0 %v2428
  %2464 = vmatprep.subr.mxu0 0.0
  %2465 = vmatpush1.msra.mxu0 %v2429
  %2466 = vmatprep.subr.mxu0 0.0
  %2467 = vmatpush1.msra.mxu0 %v2430
  %2468 = vmatprep.subr.mxu0 0.0
  %2469 = vmatpush1.msra.mxu0 %v2431
  %2470 = vmatprep.subr.mxu0 0.0
  %2471 = vmatpush1.msra.mxu0 %v2432
  %2472 = vmatprep.subr.mxu0 0.0
  %2473 = vmatpush1.msra.mxu0 %v2433
  %2474 = vmatprep.subr.mxu0 0.0
  %2475 = vmatpush1.msra.mxu0 %v2434
  %2476 = vmatprep.subr.mxu0 0.0
  %2477 = vmatpush1.msra.mxu0 %v2435
  %2478 = vmatprep.subr.mxu0 0.0
  %2479 = vmatpush1.msra.mxu0 %v2436
  %2480 = vmatprep.subr.mxu0 0.0
  %2481 = vmatpush1.msra.mxu0 %v2437
  %2482 = vmatprep.subr.mxu0 0.0
  %2483 = vmatpush1.msra.mxu0 %v2438
  %2484 = vmatprep.subr.mxu0 0.0
  %2485 = vmatpush1.msra.mxu0 %v2439
  %2486 = vmatprep.subr.mxu0 0.0
  %2487 = vmatpush1.msra.mxu0 %v2440
  %2488 = vmatprep.subr.mxu0 0.0
  %2489 = vmatpush1.msra.mxu0 %v2441
  %2490 = vmatprep.subr.mxu0 0.0
  %2491 = vmatpush1.msra.mxu0 %v2442
  %2492 = vmatprep.subr.mxu0 0.0
  %2493 = vmatpush1.msra.mxu0 %v2443
  %2494 = vmatprep.subr.mxu0 0.0
  %2495 = vmatpush1.msra.mxu0 %v2444
  %2496 = vmatprep.subr.mxu0 0.0
  %2497 = vmatpush1.msra.mxu0 %v2445
  %2498 = vmatprep.subr.mxu0 0.0
  %2499 = vmatpush1.msra.mxu0 %v2446
  %2500 = vmatprep.subr.mxu0 0.0
  %2501 = vmatpush1.msra.mxu0 %v2447
  %2502 = vmatprep.subr.mxu0 0.0
  %2503 = vmatpush1.msra.mxu0 %v2448
  %2504 = vmatprep.subr.mxu0 0.0
  %2505 = vmatpush1.msra.mxu0 %v2449
  %2506 = vmatprep.subr.mxu0 0.0
  %2507 = vmatpush1.msra.mxu0 %v2450
  %2508 = vmatprep.subr.mxu0 0.0
  %2509 = vmatpush1.msra.mxu0 %v2451
  %2510 = vmatprep.subr.mxu0 0.0
  %2511 = vmatpush1.msra.mxu0 %v2452
  %2512 = vmatprep.subr.mxu0 0.0
  %2513 = vmatpush1.msra.mxu0 %v2453
  %2514 = vmatprep.subr.mxu0 0.0
  %2515 = vmatpush1.msra.mxu0 %v2454
  %2516 = vmatprep.subr.mxu0 0.0
  %2517 = vmatpush1.msra.mxu0 %v2455
  %2518 = vmatprep.subr.mxu0 0.0
  %2519 = vmatpush1.msra.mxu0 %v2456
  %2520 = vmatprep.subr.mxu0 0.0
  %2521 = vmatpush1.msra.mxu0 %v2457
  %2522 = vmatprep.mubr.f32.mxu0 %v2315
  %2523 = vmatmul.mubr.f32.gmra.mrb[0].mxu0 %v2314
  %v2524 = vpop.f32.mrb[0].mxu0
  %v2525 = vadd.f32 0.0, %v2524
  %v2526 = vpop.f32.mrb[0].mxu0
  %2527 = vmatprep.mubr.f32.mxu0 %v2317
  %2528 = vmatmul.mubr.f32.gmra.mrb[0].mxu0 %v2316
  %v2529 = vpop.f32.mrb[0].mxu0
  %v2530 = vadd.f32 0.0, %v2529
  %v2531 = vpop.f32.mrb[0].mxu0
  %2532 = vdwg.mxu0
  %v2533 = vmax.f32 %v2417, %v2525
  %v2534 = vmax.f32 %v2422, %v2530
  %v2535 = vld [vmem:[%s13] sm:$0x1]
  %v2536 = vld [vmem:[%s11] sm:$0xf]
  %vm2537 = vcmask 130048
  %v2539 = vsel %vm2537, %v2536, 0
  %2541 = vmatprep.subr.mxu0 0.0
  %2542 = vmatpush1.msra.mxu0 %v2533
  %2543 = vmatprep.subr.mxu0 0.0
  %2544 = vmatpush1.msra.mxu0 %v2534
  %2545 = vmatprep.subr.mxu0 0.0
  %2546 = vmatpush1.msra.mxu0 0.0
  %2547 = vmatprep.subr.mxu0 0.0
  %2548 = vmatpush1.msra.mxu0 0.0
  %2549 = vmatprep.subr.mxu0 0.0
  %2550 = vmatpush1.msra.mxu0 0.0
  %2551 = vmatprep.subr.mxu0 0.0
  %2552 = vmatpush1.msra.mxu0 0.0
  %2553 = vmatprep.subr.mxu0 0.0
  %2554 = vmatpush1.msra.mxu0 0.0
  %2555 = vmatprep.subr.mxu0 0.0
  %2556 = vmatpush1.msra.mxu0 0.0
  %2557 = vmatprep.subr.mxu0 0.0
  %2558 = vmatpush1.msra.mxu0 0.0
  %2559 = vmatprep.subr.mxu0 0.0
  %2560 = vmatpush1.msra.mxu0 0.0
  %2561 = vmatprep.subr.mxu0 0.0
  %2562 = vmatpush1.msra.mxu0 0.0
  %2563 = vmatprep.subr.mxu0 0.0
  %2564 = vmatpush1.msra.mxu0 0.0
  %2565 = vmatprep.subr.mxu0 0.0
  %2566 = vmatpush1.msra.mxu0 0.0
  %2567 = vmatprep.subr.mxu0 0.0
  %2568 = vmatpush1.msra.mxu0 0.0
  %2569 = vmatprep.subr.mxu0 0.0
  %2570 = vmatpush1.msra.mxu0 0.0
  %2571 = vmatprep.subr.mxu0 0.0
  %2572 = vmatpush1.msra.mxu0 0.0
  %2573 = vmatprep.subr.mxu0 0.0
  %2574 = vmatpush1.msra.mxu0 0.0
  %2575 = vmatprep.subr.mxu0 0.0
  %2576 = vmatpush1.msra.mxu0 0.0
  %2577 = vmatprep.subr.mxu0 0.0
  %2578 = vmatpush1.msra.mxu0 0.0
  %2579 = vmatprep.subr.mxu0 0.0
  %2580 = vmatpush1.msra.mxu0 0.0
  %2581 = vmatprep.subr.mxu0 0.0
  %2582 = vmatpush1.msra.mxu0 0.0
  %2583 = vmatprep.subr.mxu0 0.0
  %2584 = vmatpush1.msra.mxu0 0.0
  %2585 = vmatprep.subr.mxu0 0.0
  %2586 = vmatpush1.msra.mxu0 0.0
  %2587 = vmatprep.subr.mxu0 0.0
  %2588 = vmatpush1.msra.mxu0 0.0
  %2589 = vmatprep.subr.mxu0 0.0
  %2590 = vmatpush1.msra.mxu0 0.0
  %2591 = vmatprep.subr.mxu0 0.0
  %2592 = vmatpush1.msra.mxu0 0.0
  %2593 = vmatprep.subr.mxu0 0.0
  %2594 = vmatpush1.msra.mxu0 0.0
  %2595 = vmatprep.subr.mxu0 0.0
  %2596 = vmatpush1.msra.mxu0 0.0
  %2597 = vmatprep.subr.mxu0 0.0
  %2598 = vmatpush1.msra.mxu0 0.0
  %2599 = vmatprep.subr.mxu0 0.0
  %2600 = vmatpush1.msra.mxu0 0.0
  %2601 = vmatprep.subr.mxu0 0.0
  %2602 = vmatpush1.msra.mxu0 0.0
  %2603 = vmatprep.subr.mxu0 0.0
  %2604 = vmatpush1.msra.mxu0 0.0
  %2605 = vmatprep.mubr.f32.mxu0 0.0
  %2606 = vmatmul.mubr.f32.gmra.mrb[0].mxu0 %v2539
  %v2607 = vpop.f32.mrb[0].mxu0
  %v2608 = vadd.f32 0.0, %v2607
  %v2609 = vpop.f32.mrb[0].mxu0
  %2610 = vdwg.mxu0
  %v2611 = vld [vmem:[%s12] sm:$0xff]
  %v2612 = vld [vmem:[%s12 + $0x8] sm:$0xff]
  %v2613 = vld [vmem:[%s12 + $0x10] sm:$0xff]
  %v2614 = vld [vmem:[%s12 + $0x18] sm:$0xff]
  %v2615 = vld [vmem:[%s12 + $0x20] sm:$0xff]
  %v2616 = vld [vmem:[%s12 + $0x28] sm:$0xff]
  %v2617 = vld [vmem:[%s12 + $0x30] sm:$0xff]
  %v2618 = vld [vmem:[%s12 + $0x38] sm:$0xff]
  %v2619 = vld [vmem:[%s12 + $0x40] sm:$0xff]
  %v2620 = vld [vmem:[%s12 + $0x48] sm:$0xff]
  %v2621 = vld [vmem:[%s12 + $0x50] sm:$0xff]
  %v2622 = vld [vmem:[%s12 + $0x58] sm:$0xff]
  %v2623 = vld [vmem:[%s12 + $0x60] sm:$0xff]
  %v2624 = vld [vmem:[%s12 + $0x68] sm:$0xff]
  %v2625 = vld [vmem:[%s12 + $0x70] sm:$0xff]
  %v2626 = vld [vmem:[%s12 + $0x78] sm:$0xff]
  %2627 = vmatprep.subr.mxu0 0.0
  %2628 = vmatpush1.msra.mxu0 %v2611
  %2629 = vmatprep.subr.mxu0 0.0
  %2630 = vmatpush1.msra.mxu0 %v2612
  %2631 = vmatprep.subr.mxu0 0.0
  %2632 = vmatpush1.msra.mxu0 %v2613
  %2633 = vmatprep.subr.mxu0 0.0
  %2634 = vmatpush1.msra.mxu0 %v2614
  %2635 = vmatprep.subr.mxu0 0.0
  %2636 = vmatpush1.msra.mxu0 %v2615
  %2637 = vmatprep.subr.mxu0 0.0
  %2638 = vmatpush1.msra.mxu0 %v2616
  %2639 = vmatprep.subr.mxu0 0.0
  %2640 = vmatpush1.msra.mxu0 %v2617
  %2641 = vmatprep.subr.mxu0 0.0
  %2642 = vmatpush1.msra.mxu0 %v2618
  %2643 = vmatprep.subr.mxu0 0.0
  %2644 = vmatpush1.msra.mxu0 %v2619
  %2645 = vmatprep.subr.mxu0 0.0
  %2646 = vmatpush1.msra.mxu0 %v2620
  %2647 = vmatprep.subr.mxu0 0.0
  %2648 = vmatpush1.msra.mxu0 %v2621
  %2649 = vmatprep.subr.mxu0 0.0
  %2650 = vmatpush1.msra.mxu0 %v2622
  %2651 = vmatprep.subr.mxu0 0.0
  %2652 = vmatpush1.msra.mxu0 %v2623
  %2653 = vmatprep.subr.mxu0 0.0
  %2654 = vmatpush1.msra.mxu0 %v2624
  %2655 = vmatprep.subr.mxu0 0.0
  %2656 = vmatpush1.msra.mxu0 %v2625
  %2657 = vmatprep.subr.mxu0 0.0
  %2658 = vmatpush1.msra.mxu0 %v2626
  %2659 = vmatprep.subr.mxu0 0.0
  %2660 = vmatpush1.msra.mxu0 0.0
  %2661 = vmatprep.subr.mxu0 0.0
  %2662 = vmatpush1.msra.mxu0 0.0
  %2663 = vmatprep.subr.mxu0 0.0
  %2664 = vmatpush1.msra.mxu0 0.0
  %2665 = vmatprep.subr.mxu0 0.0
  %2666 = vmatpush1.msra.mxu0 0.0
  %2667 = vmatprep.subr.mxu0 0.0
  %2668 = vmatpush1.msra.mxu0 0.0
  %2669 = vmatprep.subr.mxu0 0.0
  %2670 = vmatpush1.msra.mxu0 0.0
  %2671 = vmatprep.subr.mxu0 0.0
  %2672 = vmatpush1.msra.mxu0 0.0
  %2673 = vmatprep.subr.mxu0 0.0
  %2674 = vmatpush1.msra.mxu0 0.0
  %2675 = vmatprep.subr.mxu0 0.0
  %2676 = vmatpush1.msra.mxu0 0.0
  %2677 = vmatprep.subr.mxu0 0.0
  %2678 = vmatpush1.msra.mxu0 0.0
  %2679 = vmatprep.subr.mxu0 0.0
  %2680 = vmatpush1.msra.mxu0 0.0
  %2681 = vmatprep.subr.mxu0 0.0
  %2682 = vmatpush1.msra.mxu0 0.0
  %2683 = vmatprep.subr.mxu0 0.0
  %2684 = vmatpush1.msra.mxu0 0.0
  %2685 = vmatprep.subr.mxu0 0.0
  %2686 = vmatpush1.msra.mxu0 0.0
  %2687 = vmatprep.subr.mxu0 0.0
  %2688 = vmatpush1.msra.mxu0 0.0
  %2689 = vmatprep.subr.mxu0 0.0
  %2690 = vmatpush1.msra.mxu0 0.0
  %2691 = vmatprep.mubr.f32.mxu0 0.0
  %2692 = vmatmul.mubr.f32.gmra.mrb[0].mxu0 %v2608
  %v2693 = vpop.f32.mrb[0].mxu0
  %v2694 = vadd.f32 0.0, %v2693
  %v2695 = vpop.f32.mrb[0].mxu0
  %2696 = vdwg.mxu0
  %v2698 = vlaneseq
  %v2699 = vshrl.u32 %v2698, 7
  %v2700 = vsub.s32 0, %v2699
  %v2701 = vrot.slane %v2535, %v2700
  %v2703 = vadd.f32 %v2701, %v2694
  %s2704 = scalar_lea.vmem %s11, 4
  %v2705 = vld [vmem:[%s2704] sm:$0xf]
  %v2707 = vsel %vm2537, %v2705, 0
  %2709 = vmatprep.subr.mxu0 0.0
  %2710 = vmatpush1.msra.mxu0 %v2533
  %2711 = vmatprep.subr.mxu0 0.0
  %2712 = vmatpush1.msra.mxu0 %v2534
  %2713 = vmatprep.subr.mxu0 0.0
  %2714 = vmatpush1.msra.mxu0 0.0
  %2715 = vmatprep.subr.mxu0 0.0
  %2716 = vmatpush1.msra.mxu0 0.0
  %2717 = vmatprep.subr.mxu0 0.0
  %2718 = vmatpush1.msra.mxu0 0.0
  %2719 = vmatprep.subr.mxu0 0.0
  %2720 = vmatpush1.msra.mxu0 0.0
  %2721 = vmatprep.subr.mxu0 0.0
  %2722 = vmatpush1.msra.mxu0 0.0
  %2723 = vmatprep.subr.mxu0 0.0
  %2724 = vmatpush1.msra.mxu0 0.0
  %2725 = vmatprep.subr.mxu0 0.0
  %2726 = vmatpush1.msra.mxu0 0.0
  %2727 = vmatprep.subr.mxu0 0.0
  %2728 = vmatpush1.msra.mxu0 0.0
  %2729 = vmatprep.subr.mxu0 0.0
  %2730 = vmatpush1.msra.mxu0 0.0
  %2731 = vmatprep.subr.mxu0 0.0
  %2732 = vmatpush1.msra.mxu0 0.0
  %2733 = vmatprep.subr.mxu0 0.0
  %2734 = vmatpush1.msra.mxu0 0.0
  %2735 = vmatprep.subr.mxu0 0.0
  %2736 = vmatpush1.msra.mxu0 0.0
  %2737 = vmatprep.subr.mxu0 0.0
  %2738 = vmatpush1.msra.mxu0 0.0
  %2739 = vmatprep.subr.mxu0 0.0
  %2740 = vmatpush1.msra.mxu0 0.0
  %2741 = vmatprep.subr.mxu0 0.0
  %2742 = vmatpush1.msra.mxu0 0.0
  %2743 = vmatprep.subr.mxu0 0.0
  %2744 = vmatpush1.msra.mxu0 0.0
  %2745 = vmatprep.subr.mxu0 0.0
  %2746 = vmatpush1.msra.mxu0 0.0
  %2747 = vmatprep.subr.mxu0 0.0
  %2748 = vmatpush1.msra.mxu0 0.0
  %2749 = vmatprep.subr.mxu0 0.0
  %2750 = vmatpush1.msra.mxu0 0.0
  %2751 = vmatprep.subr.mxu0 0.0
  %2752 = vmatpush1.msra.mxu0 0.0
  %2753 = vmatprep.subr.mxu0 0.0
  %2754 = vmatpush1.msra.mxu0 0.0
  %2755 = vmatprep.subr.mxu0 0.0
  %2756 = vmatpush1.msra.mxu0 0.0
  %2757 = vmatprep.subr.mxu0 0.0
  %2758 = vmatpush1.msra.mxu0 0.0
  %2759 = vmatprep.subr.mxu0 0.0
  %2760 = vmatpush1.msra.mxu0 0.0
  %2761 = vmatprep.subr.mxu0 0.0
  %2762 = vmatpush1.msra.mxu0 0.0
  %2763 = vmatprep.subr.mxu0 0.0
  %2764 = vmatpush1.msra.mxu0 0.0
  %2765 = vmatprep.subr.mxu0 0.0
  %2766 = vmatpush1.msra.mxu0 0.0
  %2767 = vmatprep.subr.mxu0 0.0
  %2768 = vmatpush1.msra.mxu0 0.0
  %2769 = vmatprep.subr.mxu0 0.0
  %2770 = vmatpush1.msra.mxu0 0.0
  %2771 = vmatprep.subr.mxu0 0.0
  %2772 = vmatpush1.msra.mxu0 0.0
  %2773 = vmatprep.mubr.f32.mxu0 0.0
  %2774 = vmatmul.mubr.f32.gmra.mrb[0].mxu0 %v2707
  %v2775 = vpop.f32.mrb[0].mxu0
  %v2776 = vadd.f32 0.0, %v2775
  %v2777 = vpop.f32.mrb[0].mxu0
  %2778 = vdwg.mxu0
  %s2779 = scalar_lea.vmem %s12, 128
  %v2780 = vld [vmem:[%s2779] sm:$0xff]
  %v2781 = vld [vmem:[%s2779 + $0x8] sm:$0xff]
  %v2782 = vld [vmem:[%s2779 + $0x10] sm:$0xff]
  %v2783 = vld [vmem:[%s2779 + $0x18] sm:$0xff]
  %v2784 = vld [vmem:[%s2779 + $0x20] sm:$0xff]
  %v2785 = vld [vmem:[%s2779 + $0x28] sm:$0xff]
  %v2786 = vld [vmem:[%s2779 + $0x30] sm:$0xff]
  %v2787 = vld [vmem:[%s2779 + $0x38] sm:$0xff]
  %v2788 = vld [vmem:[%s2779 + $0x40] sm:$0xff]
  %v2789 = vld [vmem:[%s2779 + $0x48] sm:$0xff]
  %v2790 = vld [vmem:[%s2779 + $0x50] sm:$0xff]
  %v2791 = vld [vmem:[%s2779 + $0x58] sm:$0xff]
  %v2792 = vld [vmem:[%s2779 + $0x60] sm:$0xff]
  %v2793 = vld [vmem:[%s2779 + $0x68] sm:$0xff]
  %v2794 = vld [vmem:[%s2779 + $0x70] sm:$0xff]
  %v2795 = vld [vmem:[%s2779 + $0x78] sm:$0xff]
  %2796 = vmatprep.subr.mxu0 0.0
  %2797 = vmatpush1.msra.mxu0 %v2780
  %2798 = vmatprep.subr.mxu0 0.0
  %2799 = vmatpush1.msra.mxu0 %v2781
  %2800 = vmatprep.subr.mxu0 0.0
  %2801 = vmatpush1.msra.mxu0 %v2782
  %2802 = vmatprep.subr.mxu0 0.0
  %2803 = vmatpush1.msra.mxu0 %v2783
  %2804 = vmatprep.subr.mxu0 0.0
  %2805 = vmatpush1.msra.mxu0 %v2784
  %2806 = vmatprep.subr.mxu0 0.0
  %2807 = vmatpush1.msra.mxu0 %v2785
  %2808 = vmatprep.subr.mxu0 0.0
  %2809 = vmatpush1.msra.mxu0 %v2786
  %2810 = vmatprep.subr.mxu0 0.0
  %2811 = vmatpush1.msra.mxu0 %v2787
  %2812 = vmatprep.subr.mxu0 0.0
  %2813 = vmatpush1.msra.mxu0 %v2788
  %2814 = vmatprep.subr.mxu0 0.0
  %2815 = vmatpush1.msra.mxu0 %v2789
  %2816 = vmatprep.subr.mxu0 0.0
  %2817 = vmatpush1.msra.mxu0 %v2790
  %2818 = vmatprep.subr.mxu0 0.0
  %2819 = vmatpush1.msra.mxu0 %v2791
  %2820 = vmatprep.subr.mxu0 0.0
  %2821 = vmatpush1.msra.mxu0 %v2792
  %2822 = vmatprep.subr.mxu0 0.0
  %2823 = vmatpush1.msra.mxu0 %v2793
  %2824 = vmatprep.subr.mxu0 0.0
  %2825 = vmatpush1.msra.mxu0 %v2794
  %2826 = vmatprep.subr.mxu0 0.0
  %2827 = vmatpush1.msra.mxu0 %v2795
  %2828 = vmatprep.subr.mxu0 0.0
  %2829 = vmatpush1.msra.mxu0 0.0
  %2830 = vmatprep.subr.mxu0 0.0
  %2831 = vmatpush1.msra.mxu0 0.0
  %2832 = vmatprep.subr.mxu0 0.0
  %2833 = vmatpush1.msra.mxu0 0.0
  %2834 = vmatprep.subr.mxu0 0.0
  %2835 = vmatpush1.msra.mxu0 0.0
  %2836 = vmatprep.subr.mxu0 0.0
  %2837 = vmatpush1.msra.mxu0 0.0
  %2838 = vmatprep.subr.mxu0 0.0
  %2839 = vmatpush1.msra.mxu0 0.0
  %2840 = vmatprep.subr.mxu0 0.0
  %2841 = vmatpush1.msra.mxu0 0.0
  %2842 = vmatprep.subr.mxu0 0.0
  %2843 = vmatpush1.msra.mxu0 0.0
  %2844 = vmatprep.subr.mxu0 0.0
  %2845 = vmatpush1.msra.mxu0 0.0
  %2846 = vmatprep.subr.mxu0 0.0
  %2847 = vmatpush1.msra.mxu0 0.0
  %2848 = vmatprep.subr.mxu0 0.0
  %2849 = vmatpush1.msra.mxu0 0.0
  %2850 = vmatprep.subr.mxu0 0.0
  %2851 = vmatpush1.msra.mxu0 0.0
  %2852 = vmatprep.subr.mxu0 0.0
  %2853 = vmatpush1.msra.mxu0 0.0
  %2854 = vmatprep.subr.mxu0 0.0
  %2855 = vmatpush1.msra.mxu0 0.0
  %2856 = vmatprep.subr.mxu0 0.0
  %2857 = vmatpush1.msra.mxu0 0.0
  %2858 = vmatprep.subr.mxu0 0.0
  %2859 = vmatpush1.msra.mxu0 0.0
  %2860 = vmatprep.mubr.f32.mxu0 0.0
  %2861 = vmatmul.mubr.f32.gmra.mrb[0].mxu0 %v2776
  %v2862 = vpop.f32.mrb[0].mxu0
  %v2863 = vadd.f32 0.0, %v2862
  %v2864 = vpop.f32.mrb[0].mxu0
  %2865 = vdwg.mxu0
  %v2866 = vadd.f32 %v2703, %v2863
  %s2867 = scalar_lea.vmem %s11, 8
  %v2868 = vld [vmem:[%s2867] sm:$0xf]
  %v2870 = vsel %vm2537, %v2868, 0
  %2872 = vmatprep.subr.mxu0 0.0
  %2873 = vmatpush1.msra.mxu0 %v2533
  %2874 = vmatprep.subr.mxu0 0.0
  %2875 = vmatpush1.msra.mxu0 %v2534
  %2876 = vmatprep.subr.mxu0 0.0
  %2877 = vmatpush1.msra.mxu0 0.0
  %2878 = vmatprep.subr.mxu0 0.0
  %2879 = vmatpush1.msra.mxu0 0.0
  %2880 = vmatprep.subr.mxu0 0.0
  %2881 = vmatpush1.msra.mxu0 0.0
  %2882 = vmatprep.subr.mxu0 0.0
  %2883 = vmatpush1.msra.mxu0 0.0
  %2884 = vmatprep.subr.mxu0 0.0
  %2885 = vmatpush1.msra.mxu0 0.0
  %2886 = vmatprep.subr.mxu0 0.0
  %2887 = vmatpush1.msra.mxu0 0.0
  %2888 = vmatprep.subr.mxu0 0.0
  %2889 = vmatpush1.msra.mxu0 0.0
  %2890 = vmatprep.subr.mxu0 0.0
  %2891 = vmatpush1.msra.mxu0 0.0
  %2892 = vmatprep.subr.mxu0 0.0
  %2893 = vmatpush1.msra.mxu0 0.0
  %2894 = vmatprep.subr.mxu0 0.0
  %2895 = vmatpush1.msra.mxu0 0.0
  %2896 = vmatprep.subr.mxu0 0.0
  %2897 = vmatpush1.msra.mxu0 0.0
  %2898 = vmatprep.subr.mxu0 0.0
  %2899 = vmatpush1.msra.mxu0 0.0
  %2900 = vmatprep.subr.mxu0 0.0
  %2901 = vmatpush1.msra.mxu0 0.0
  %2902 = vmatprep.subr.mxu0 0.0
  %2903 = vmatpush1.msra.mxu0 0.0
  %2904 = vmatprep.subr.mxu0 0.0
  %2905 = vmatpush1.msra.mxu0 0.0
  %2906 = vmatprep.subr.mxu0 0.0
  %2907 = vmatpush1.msra.mxu0 0.0
  %2908 = vmatprep.subr.mxu0 0.0
  %2909 = vmatpush1.msra.mxu0 0.0
  %2910 = vmatprep.subr.mxu0 0.0
  %2911 = vmatpush1.msra.mxu0 0.0
  %2912 = vmatprep.subr.mxu0 0.0
  %2913 = vmatpush1.msra.mxu0 0.0
  %2914 = vmatprep.subr.mxu0 0.0
  %2915 = vmatpush1.msra.mxu0 0.0
  %2916 = vmatprep.subr.mxu0 0.0
  %2917 = vmatpush1.msra.mxu0 0.0
  %2918 = vmatprep.subr.mxu0 0.0
  %2919 = vmatpush1.msra.mxu0 0.0
  %2920 = vmatprep.subr.mxu0 0.0
  %2921 = vmatpush1.msra.mxu0 0.0
  %2922 = vmatprep.subr.mxu0 0.0
  %2923 = vmatpush1.msra.mxu0 0.0
  %2924 = vmatprep.subr.mxu0 0.0
  %2925 = vmatpush1.msra.mxu0 0.0
  %2926 = vmatprep.subr.mxu0 0.0
  %2927 = vmatpush1.msra.mxu0 0.0
  %2928 = vmatprep.subr.mxu0 0.0
  %2929 = vmatpush1.msra.mxu0 0.0
  %2930 = vmatprep.subr.mxu0 0.0
  %2931 = vmatpush1.msra.mxu0 0.0
  %2932 = vmatprep.subr.mxu0 0.0
  %2933 = vmatpush1.msra.mxu0 0.0
  %2934 = vmatprep.subr.mxu0 0.0
  %2935 = vmatpush1.msra.mxu0 0.0
  %2936 = vmatprep.mubr.f32.mxu0 0.0
  %2937 = vmatmul.mubr.f32.gmra.mrb[0].mxu0 %v2870
  %v2938 = vpop.f32.mrb[0].mxu0
  %v2939 = vadd.f32 0.0, %v2938
  %v2940 = vpop.f32.mrb[0].mxu0
  %2941 = vdwg.mxu0
  %s2942 = scalar_lea.vmem %s12, 256
  %v2943 = vld [vmem:[%s2942] sm:$0xff]
  %v2944 = vld [vmem:[%s2942 + $0x8] sm:$0xff]
  %v2945 = vld [vmem:[%s2942 + $0x10] sm:$0xff]
  %v2946 = vld [vmem:[%s2942 + $0x18] sm:$0xff]
  %v2947 = vld [vmem:[%s2942 + $0x20] sm:$0xff]
  %v2948 = vld [vmem:[%s2942 + $0x28] sm:$0xff]
  %v2949 = vld [vmem:[%s2942 + $0x30] sm:$0xff]
  %v2950 = vld [vmem:[%s2942 + $0x38] sm:$0xff]
  %v2951 = vld [vmem:[%s2942 + $0x40] sm:$0xff]
  %v2952 = vld [vmem:[%s2942 + $0x48] sm:$0xff]
  %v2953 = vld [vmem:[%s2942 + $0x50] sm:$0xff]
  %v2954 = vld [vmem:[%s2942 + $0x58] sm:$0xff]
  %v2955 = vld [vmem:[%s2942 + $0x60] sm:$0xff]
  %v2956 = vld [vmem:[%s2942 + $0x68] sm:$0xff]
  %v2957 = vld [vmem:[%s2942 + $0x70] sm:$0xff]
  %v2958 = vld [vmem:[%s2942 + $0x78] sm:$0xff]
  %2959 = vmatprep.subr.mxu0 0.0
  %2960 = vmatpush1.msra.mxu0 %v2943
  %2961 = vmatprep.subr.mxu0 0.0
  %2962 = vmatpush1.msra.mxu0 %v2944
  %2963 = vmatprep.subr.mxu0 0.0
  %2964 = vmatpush1.msra.mxu0 %v2945
  %2965 = vmatprep.subr.mxu0 0.0
  %2966 = vmatpush1.msra.mxu0 %v2946
  %2967 = vmatprep.subr.mxu0 0.0
  %2968 = vmatpush1.msra.mxu0 %v2947
  %2969 = vmatprep.subr.mxu0 0.0
  %2970 = vmatpush1.msra.mxu0 %v2948
  %2971 = vmatprep.subr.mxu0 0.0
  %2972 = vmatpush1.msra.mxu0 %v2949
  %2973 = vmatprep.subr.mxu0 0.0
  %2974 = vmatpush1.msra.mxu0 %v2950
  %2975 = vmatprep.subr.mxu0 0.0
  %2976 = vmatpush1.msra.mxu0 %v2951
  %2977 = vmatprep.subr.mxu0 0.0
  %2978 = vmatpush1.msra.mxu0 %v2952
  %2979 = vmatprep.subr.mxu0 0.0
  %2980 = vmatpush1.msra.mxu0 %v2953
  %2981 = vmatprep.subr.mxu0 0.0
  %2982 = vmatpush1.msra.mxu0 %v2954
  %2983 = vmatprep.subr.mxu0 0.0
  %2984 = vmatpush1.msra.mxu0 %v2955
  %2985 = vmatprep.subr.mxu0 0.0
  %2986 = vmatpush1.msra.mxu0 %v2956
  %2987 = vmatprep.subr.mxu0 0.0
  %2988 = vmatpush1.msra.mxu0 %v2957
  %2989 = vmatprep.subr.mxu0 0.0
  %2990 = vmatpush1.msra.mxu0 %v2958
  %2991 = vmatprep.subr.mxu0 0.0
  %2992 = vmatpush1.msra.mxu0 0.0
  %2993 = vmatprep.subr.mxu0 0.0
  %2994 = vmatpush1.msra.mxu0 0.0
  %2995 = vmatprep.subr.mxu0 0.0
  %2996 = vmatpush1.msra.mxu0 0.0
  %2997 = vmatprep.subr.mxu0 0.0
  %2998 = vmatpush1.msra.mxu0 0.0
  %2999 = vmatprep.subr.mxu0 0.0
  %3000 = vmatpush1.msra.mxu0 0.0
  %3001 = vmatprep.subr.mxu0 0.0
  %3002 = vmatpush1.msra.mxu0 0.0
  %3003 = vmatprep.subr.mxu0 0.0
  %3004 = vmatpush1.msra.mxu0 0.0
  %3005 = vmatprep.subr.mxu0 0.0
  %3006 = vmatpush1.msra.mxu0 0.0
  %3007 = vmatprep.subr.mxu0 0.0
  %3008 = vmatpush1.msra.mxu0 0.0
  %3009 = vmatprep.subr.mxu0 0.0
  %3010 = vmatpush1.msra.mxu0 0.0
  %3011 = vmatprep.subr.mxu0 0.0
  %3012 = vmatpush1.msra.mxu0 0.0
  %3013 = vmatprep.subr.mxu0 0.0
  %3014 = vmatpush1.msra.mxu0 0.0
  %3015 = vmatprep.subr.mxu0 0.0
  %3016 = vmatpush1.msra.mxu0 0.0
  %3017 = vmatprep.subr.mxu0 0.0
  %3018 = vmatpush1.msra.mxu0 0.0
  %3019 = vmatprep.subr.mxu0 0.0
  %3020 = vmatpush1.msra.mxu0 0.0
  %3021 = vmatprep.subr.mxu0 0.0
  %3022 = vmatpush1.msra.mxu0 0.0
  %3023 = vmatprep.mubr.f32.mxu0 0.0
  %3024 = vmatmul.mubr.f32.gmra.mrb[0].mxu0 %v2939
  %v3025 = vpop.f32.mrb[0].mxu0
  %v3026 = vadd.f32 0.0, %v3025
  %v3027 = vpop.f32.mrb[0].mxu0
  %3028 = vdwg.mxu0
  %v3029 = vadd.f32 %v2866, %v3026
  %s3030 = scalar_lea.vmem %s11, 12
  %v3031 = vld [vmem:[%s3030] sm:$0xf]
  %v3033 = vsel %vm2537, %v3031, 0
  %3035 = vmatprep.subr.mxu0 0.0
  %3036 = vmatpush1.msra.mxu0 %v2533
  %3037 = vmatprep.subr.mxu0 0.0
  %3038 = vmatpush1.msra.mxu0 %v2534
  %3039 = vmatprep.subr.mxu0 0.0
  %3040 = vmatpush1.msra.mxu0 0.0
  %3041 = vmatprep.subr.mxu0 0.0
  %3042 = vmatpush1.msra.mxu0 0.0
  %3043 = vmatprep.subr.mxu0 0.0
  %3044 = vmatpush1.msra.mxu0 0.0
  %3045 = vmatprep.subr.mxu0 0.0
  %3046 = vmatpush1.msra.mxu0 0.0
  %3047 = vmatprep.subr.mxu0 0.0
  %3048 = vmatpush1.msra.mxu0 0.0
  %3049 = vmatprep.subr.mxu0 0.0
  %3050 = vmatpush1.msra.mxu0 0.0
  %3051 = vmatprep.subr.mxu0 0.0
  %3052 = vmatpush1.msra.mxu0 0.0
  %3053 = vmatprep.subr.mxu0 0.0
  %3054 = vmatpush1.msra.mxu0 0.0
  %3055 = vmatprep.subr.mxu0 0.0
  %3056 = vmatpush1.msra.mxu0 0.0
  %3057 = vmatprep.subr.mxu0 0.0
  %3058 = vmatpush1.msra.mxu0 0.0
  %3059 = vmatprep.subr.mxu0 0.0
  %3060 = vmatpush1.msra.mxu0 0.0
  %3061 = vmatprep.subr.mxu0 0.0
  %3062 = vmatpush1.msra.mxu0 0.0
  %3063 = vmatprep.subr.mxu0 0.0
  %3064 = vmatpush1.msra.mxu0 0.0
  %3065 = vmatprep.subr.mxu0 0.0
  %3066 = vmatpush1.msra.mxu0 0.0
  %3067 = vmatprep.subr.mxu0 0.0
  %3068 = vmatpush1.msra.mxu0 0.0
  %3069 = vmatprep.subr.mxu0 0.0
  %3070 = vmatpush1.msra.mxu0 0.0
  %3071 = vmatprep.subr.mxu0 0.0
  %3072 = vmatpush1.msra.mxu0 0.0
  %3073 = vmatprep.subr.mxu0 0.0
  %3074 = vmatpush1.msra.mxu0 0.0
  %3075 = vmatprep.subr.mxu0 0.0
  %3076 = vmatpush1.msra.mxu0 0.0
  %3077 = vmatprep.subr.mxu0 0.0
  %3078 = vmatpush1.msra.mxu0 0.0
  %3079 = vmatprep.subr.mxu0 0.0
  %3080 = vmatpush1.msra.mxu0 0.0
  %3081 = vmatprep.subr.mxu0 0.0
  %3082 = vmatpush1.msra.mxu0 0.0
  %3083 = vmatprep.subr.mxu0 0.0
  %3084 = vmatpush1.msra.mxu0 0.0
  %3085 = vmatprep.subr.mxu0 0.0
  %3086 = vmatpush1.msra.mxu0 0.0
  %3087 = vmatprep.subr.mxu0 0.0
  %3088 = vmatpush1.msra.mxu0 0.0
  %3089 = vmatprep.subr.mxu0 0.0
  %3090 = vmatpush1.msra.mxu0 0.0
  %3091 = vmatprep.subr.mxu0 0.0
  %3092 = vmatpush1.msra.mxu0 0.0
  %3093 = vmatprep.subr.mxu0 0.0
  %3094 = vmatpush1.msra.mxu0 0.0
  %3095 = vmatprep.subr.mxu0 0.0
  %3096 = vmatpush1.msra.mxu0 0.0
  %3097 = vmatprep.subr.mxu0 0.0
  %3098 = vmatpush1.msra.mxu0 0.0
  %3099 = vmatprep.mubr.f32.mxu0 0.0
  %3100 = vmatmul.mubr.f32.gmra.mrb[0].mxu0 %v3033
  %v3101 = vpop.f32.mrb[0].mxu0
  %v3102 = vadd.f32 0.0, %v3101
  %v3103 = vpop.f32.mrb[0].mxu0
  %3104 = vdwg.mxu0
  %s3105 = scalar_lea.vmem %s12, 384
  %v3106 = vld [vmem:[%s3105] sm:$0xff]
  %v3107 = vld [vmem:[%s3105 + $0x8] sm:$0xff]
  %v3108 = vld [vmem:[%s3105 + $0x10] sm:$0xff]
  %v3109 = vld [vmem:[%s3105 + $0x18] sm:$0xff]
  %v3110 = vld [vmem:[%s3105 + $0x20] sm:$0xff]
  %v3111 = vld [vmem:[%s3105 + $0x28] sm:$0xff]
  %v3112 = vld [vmem:[%s3105 + $0x30] sm:$0xff]
  %v3113 = vld [vmem:[%s3105 + $0x38] sm:$0xff]
  %v3114 = vld [vmem:[%s3105 + $0x40] sm:$0xff]
  %v3115 = vld [vmem:[%s3105 + $0x48] sm:$0xff]
  %v3116 = vld [vmem:[%s3105 + $0x50] sm:$0xff]
  %v3117 = vld [vmem:[%s3105 + $0x58] sm:$0xff]
  %v3118 = vld [vmem:[%s3105 + $0x60] sm:$0xff]
  %v3119 = vld [vmem:[%s3105 + $0x68] sm:$0xff]
  %v3120 = vld [vmem:[%s3105 + $0x70] sm:$0xff]
  %v3121 = vld [vmem:[%s3105 + $0x78] sm:$0xff]
  %3122 = vmatprep.subr.mxu0 0.0
  %3123 = vmatpush1.msra.mxu0 %v3106
  %3124 = vmatprep.subr.mxu0 0.0
  %3125 = vmatpush1.msra.mxu0 %v3107
  %3126 = vmatprep.subr.mxu0 0.0
  %3127 = vmatpush1.msra.mxu0 %v3108
  %3128 = vmatprep.subr.mxu0 0.0
  %3129 = vmatpush1.msra.mxu0 %v3109
  %3130 = vmatprep.subr.mxu0 0.0
  %3131 = vmatpush1.msra.mxu0 %v3110
  %3132 = vmatprep.subr.mxu0 0.0
  %3133 = vmatpush1.msra.mxu0 %v3111
  %3134 = vmatprep.subr.mxu0 0.0
  %3135 = vmatpush1.msra.mxu0 %v3112
  %3136 = vmatprep.subr.mxu0 0.0
  %3137 = vmatpush1.msra.mxu0 %v3113
  %3138 = vmatprep.subr.mxu0 0.0
  %3139 = vmatpush1.msra.mxu0 %v3114
  %3140 = vmatprep.subr.mxu0 0.0
  %3141 = vmatpush1.msra.mxu0 %v3115
  %3142 = vmatprep.subr.mxu0 0.0
  %3143 = vmatpush1.msra.mxu0 %v3116
  %3144 = vmatprep.subr.mxu0 0.0
  %3145 = vmatpush1.msra.mxu0 %v3117
  %3146 = vmatprep.subr.mxu0 0.0
  %3147 = vmatpush1.msra.mxu0 %v3118
  %3148 = vmatprep.subr.mxu0 0.0
  %3149 = vmatpush1.msra.mxu0 %v3119
  %3150 = vmatprep.subr.mxu0 0.0
  %3151 = vmatpush1.msra.mxu0 %v3120
  %3152 = vmatprep.subr.mxu0 0.0
  %3153 = vmatpush1.msra.mxu0 %v3121
  %3154 = vmatprep.subr.mxu0 0.0
  %3155 = vmatpush1.msra.mxu0 0.0
  %3156 = vmatprep.subr.mxu0 0.0
  %3157 = vmatpush1.msra.mxu0 0.0
  %3158 = vmatprep.subr.mxu0 0.0
  %3159 = vmatpush1.msra.mxu0 0.0
  %3160 = vmatprep.subr.mxu0 0.0
  %3161 = vmatpush1.msra.mxu0 0.0
  %3162 = vmatprep.subr.mxu0 0.0
  %3163 = vmatpush1.msra.mxu0 0.0
  %3164 = vmatprep.subr.mxu0 0.0
  %3165 = vmatpush1.msra.mxu0 0.0
  %3166 = vmatprep.subr.mxu0 0.0
  %3167 = vmatpush1.msra.mxu0 0.0
  %3168 = vmatprep.subr.mxu0 0.0
  %3169 = vmatpush1.msra.mxu0 0.0
  %3170 = vmatprep.subr.mxu0 0.0
  %3171 = vmatpush1.msra.mxu0 0.0
  %3172 = vmatprep.subr.mxu0 0.0
  %3173 = vmatpush1.msra.mxu0 0.0
  %3174 = vmatprep.subr.mxu0 0.0
  %3175 = vmatpush1.msra.mxu0 0.0
  %3176 = vmatprep.subr.mxu0 0.0
  %3177 = vmatpush1.msra.mxu0 0.0
  %3178 = vmatprep.subr.mxu0 0.0
  %3179 = vmatpush1.msra.mxu0 0.0
  %3180 = vmatprep.subr.mxu0 0.0
  %3181 = vmatpush1.msra.mxu0 0.0
  %3182 = vmatprep.subr.mxu0 0.0
  %3183 = vmatpush1.msra.mxu0 0.0
  %3184 = vmatprep.subr.mxu0 0.0
  %3185 = vmatpush1.msra.mxu0 0.0
  %3186 = vmatprep.mubr.f32.mxu0 0.0
  %3187 = vmatmul.mubr.f32.gmra.mrb[0].mxu0 %v3102
  %v3188 = vpop.f32.mrb[0].mxu0
  %v3189 = vadd.f32 0.0, %v3188
  %v3190 = vpop.f32.mrb[0].mxu0
  %3191 = vdwg.mxu0
  %v3192 = vadd.f32 %v3029, %v3189
  %v3193 = vmax.f32 %v3192, 0.0
  %3194 = vst [vmem:[%s14] sm:$0xf] %v3193
  // Predicated region
  $region58: #{siamese_forward.1} parent=0 // pred_check
    _
  $region59: #{siamese_forward.1} parent=0 // pred_check_branch
    %3196 = sbr.rel (0) target = $region61
  $region60: #{siamese_forward.1} parent=0 // pred_region
    _
  $region61: #{siamese_forward.1} parent=0 // pred_fallthru
    _
  // Predicated region
  $region62: #{siamese_forward.1} parent=0 // pred_check
    _
  $region63: #{siamese_forward.1} parent=0 // pred_check_branch
    %3198 = sbr.rel (0) target = $region65
  $region64: #{siamese_forward.1} parent=0 // pred_region
    _
  $region65: #{siamese_forward.1} parent=0 // pred_fallthru
    _

</llo_original>
